<compile_context>
chip_gen: v5e
topology: v5e:2x2
jax: 0.10.0
libtpu: 0.0.40
codegen_flags: <defaults>
</compile_context>

<pallas_src>
import functools

import jax
import jax.numpy as jnp
from jax.experimental import pallas as pl
from jax.experimental.pallas import tpu as pltpu


# ----------------------------------------------------------------------------
# Fused kernel: one grid step = one batch element, everything resident in VMEM.
#
# Flat "padded" layout: feature maps are stored as (C, Hp*Wp) with Hp=H+4, Wp=W+4
# and the valid HxW data at rows/cols [2, 2+H) x [2, 2+W).  The 2-wide zero ring
# makes every conv tap a pure static lane-offset slice of the flat buffer.
# ----------------------------------------------------------------------------
def _upblok_kernel(up_ref, sc_ref, w1u_ref, w1s_ref, b1_ref,
                   w3_ref, b2_ref, wd_ref, b3_ref, mask_ref,
                   out_ref, y1_ref, y2_ref, *, H, W):
    Wp = W + 4
    L = (H + 4) * Wp          # padded flat length
    S = H * Wp                # "slab": rows [2, 2+H), all Wp columns
    base = 2 * Wp             # flat offset of the slab

    # ---------------- stage 1: 1x1 conv + ReLU (concat folded into 2 matmuls) ------
    y1 = jnp.dot(w1u_ref[...], up_ref[0], preferred_element_type=jnp.float32)
    y1 = y1 + jnp.dot(w1s_ref[...], sc_ref[0], preferred_element_type=jnp.float32)
    y1 = jnp.maximum(y1 + b1_ref[...], 0.0) * mask_ref[...]   # re-zero the pad ring
    y1_ref[...] = y1

    # ---------------- stage 2: 3x3 conv (pad=1) + ReLU ------------------------------
    c2 = b2_ref.shape[0]
    acc = jnp.zeros((c2, S), jnp.float32)
    for kh in range(3):
        for kw in range(3):
            start = base + (kh - 1) * Wp + (kw - 1)           # always in [Wp-1, L-S]
            acc = acc + jnp.dot(w3_ref[kh * 3 + kw],
                                y1_ref[:, start:start + S],
                                preferred_element_type=jnp.float32)
    y2 = jnp.maximum(acc + b2_ref[...], 0.0) * mask_ref[:, base:base + S]
    y2_ref[...] = jnp.zeros(y2_ref.shape, jnp.float32)        # keep pad ring exactly 0
    y2_ref[:, base:base + S] = y2

    # ---- stage 3: ConvTranspose2d(4, stride 2, pad 1) via 2x2 sub-pixel phases -----
    # out[:, 2io+ph, 2jo+pw] = b3 + sum_{th,tw} Wd[ph,pw,th,tw] @ y2[io+ph+th-1, jo+pw+tw-1]
    c3 = b3_ref.shape[0]
    for ph in range(2):
        for pw in range(2):
            pacc = jnp.zeros((c3, S), jnp.float32)
            for th in range(2):
                for tw in range(2):
                    start = (ph + th + 1) * Wp + (pw + tw - 1)
                    t = ((ph * 2 + pw) * 2 + th) * 2 + tw
                    pacc = pacc + jnp.dot(wd_ref[t],
                                          y2_ref[:, start:start + S],
                                          preferred_element_type=jnp.float32)
            out_ref[0, ph * 2 + pw, :, :] = pacc + b3_ref[...]


# ----------------------------------------------------------------------------
# Wrapper: NCHW in, NCHW out (PyTorch convention).  All heavy work is in the
# single fused pallas_call; the wrapper only does a tiny pad/reshape of the
# inputs, weight re-layout, and the final sub-pixel phase interleave.
# ----------------------------------------------------------------------------
def up_blok_forward(params, upsampled, shortcut):
    N, c_up, H, W = upsampled.shape
    c_sc = shortcut.shape[1]
    c_mid = c_up + c_sc                        # conv1x1 in == out channels
    c_out = params["conv3x3_w"].shape[0]       # conv3x3 out channels
    c_dec = params["deconv_w"].shape[1]        # deconv out channels
    Hp, Wp = H + 4, W + 4
    L, S = Hp * Wp, H * Wp
    f32 = jnp.float32

    # inputs: NCHW -> channels-first padded-flat (pad + free reshape, no transpose)
    def prep(x):
        xp = jnp.pad(x.astype(f32), ((0, 0), (0, 0), (2, 2), (2, 2)))
        return xp.reshape(x.shape[0], x.shape[1], L)

    up_p, sc_p = prep(upsampled), prep(shortcut)

    # weight prep (tiny, XLA-side)
    w1 = params["conv1x1_w"].reshape(c_mid, c_mid).astype(f32)
    w1u, w1s = w1[:, :c_up], w1[:, c_up:]                     # concat fused away
    b1 = params["conv1x1_b"].reshape(c_mid, 1).astype(f32)

    w3 = jnp.transpose(params["conv3x3_w"].astype(f32), (2, 3, 0, 1))
    w3 = w3.reshape(9, c_out, c_mid)                          # (tap, O, I)
    b2 = params["conv3x3_b"].reshape(c_out, 1).astype(f32)

    wd_oi = jnp.transpose(params["deconv_w"].astype(f32), (1, 0, 2, 3))   # (O, I, kh, kw)
    taps = []
    for ph in range(2):
        for pw in range(2):
            for th in range(2):
                for tw in range(2):
                    taps.append(wd_oi[:, :, 3 - ph - 2 * th, 3 - pw - 2 * tw])
    wd = jnp.stack(taps)                                      # (16, O, I)
    b3 = params["deconv_b"].reshape(c_dec, 1).astype(f32)

    mask = jnp.zeros((Hp, Wp), f32).at[2:2 + H, 2:2 + W].set(1.0).reshape(1, L)

    kernel = functools.partial(_upblok_kernel, H=H, W=W)

    phases = pl.pallas_call(
        kernel,
        out_shape=jax.ShapeDtypeStruct((N, 4, c_dec, S), f32),
        grid_spec=pltpu.PrefetchScalarGridSpec(
            num_scalar_prefetch=0,
            grid=(N,),
            in_specs=[
                pl.BlockSpec((1, c_up, L), lambda n: (n, 0, 0)),
                pl.BlockSpec((1, c_sc, L), lambda n: (n, 0, 0)),
                pl.BlockSpec((c_mid, c_up), lambda n: (0, 0)),
                pl.BlockSpec((c_mid, c_sc), lambda n: (0, 0)),
                pl.BlockSpec((c_mid, 1), lambda n: (0, 0)),
                pl.BlockSpec((9, c_out, c_mid), lambda n: (0, 0, 0)),
                pl.BlockSpec((c_out, 1), lambda n: (0, 0)),
                pl.BlockSpec((16, c_dec, c_out), lambda n: (0, 0, 0)),
                pl.BlockSpec((c_dec, 1), lambda n: (0, 0)),
                pl.BlockSpec((1, L), lambda n: (0, 0)),
            ],
            out_specs=pl.BlockSpec((1, 4, c_dec, S), lambda n: (n, 0, 0, 0)),
            scratch_shapes=[
                pltpu.VMEM((c_mid, L), f32),   # y1: conv1x1 output, padded-flat
                pltpu.VMEM((c_out, L), f32),   # y2: conv3x3 output, padded-flat
            ],
        ),
        compiler_params=pltpu.CompilerParams(dimension_semantics=("parallel",)),
    )(up_p, sc_p, w1u, w1s, b1, w3, b2, wd, b3, mask)

    # interleave the 4 sub-pixel phases into (N, C, 2H, 2W); drop the Wp guard columns
    phases = phases.reshape(N, 2, 2, c_dec, H, Wp)[:, :, :, :, :, 2:2 + W]
    y = jnp.transpose(phases, (0, 3, 4, 1, 5, 2)).reshape(N, c_dec, 2 * H, 2 * W)
    return y


# ----------------------------------------------------------------------------
# Parameter init (PyTorch-style uniform(-1/sqrt(fan_in), 1/sqrt(fan_in)))
# ----------------------------------------------------------------------------
def init_params(key, in_channels, out_channels):
    ks = jax.random.split(key, 6)

    def u(k, shape, fan_in):
        bound = 1.0 / jnp.sqrt(float(fan_in))
        return jax.random.uniform(k, shape, jnp.float32, -bound, bound)

    return {
        "conv1x1_w": u(ks[0], (in_channels, in_channels, 1, 1), in_channels),
        "conv1x1_b": u(ks[1], (in_channels,), in_channels),
        "conv3x3_w": u(ks[2], (out_channels, in_channels, 3, 3), in_channels * 9),
        "conv3x3_b": u(ks[3], (out_channels,), in_channels * 9),
        "deconv_w": u(ks[4], (out_channels, out_channels, 4, 4), out_channels * 16),
        "deconv_b": u(ks[5], (out_channels,), out_channels * 16),
    }


# ----------------------------------------------------------------------------
# Pure-JAX reference (correctness check)
# ----------------------------------------------------------------------------
def _ref_forward(params, up_nchw, sc_nchw):
    x = jnp.concatenate([up_nchw, sc_nchw], axis=1)

    def conv(x, w, b, pad):
        y = jax.lax.conv_general_dilated(
            x, w, window_strides=(1, 1), padding=[(pad, pad), (pad, pad)],
            dimension_numbers=("NCHW", "OIHW", "NCHW"))
        return y + b[None, :, None, None]

    x = jax.nn.relu(conv(x, params["conv1x1_w"], params["conv1x1_b"], 0))
    x = jax.nn.relu(conv(x, params["conv3x3_w"], params["conv3x3_b"], 1))
    wt = jnp.transpose(jnp.flip(params["deconv_w"], axis=(2, 3)), (1, 0, 2, 3))
    y = jax.lax.conv_general_dilated(
        x, wt, window_strides=(1, 1), padding=[(2, 2), (2, 2)],
        lhs_dilation=(2, 2), dimension_numbers=("NCHW", "OIHW", "NCHW"))
    return y + params["deconv_b"][None, :, None, None]


if __name__ == "__main__":
    key = jax.random.PRNGKey(0)
    k_up, k_sc, k_p = jax.random.split(key, 3)

    # UpBlok(in_channels=8, out_channels=4); cat of two 4-channel feature maps.
    up = jax.random.normal(k_up, (2, 4, 16, 16), jnp.float32)   # NCHW
    sc = jax.random.normal(k_sc, (2, 4, 16, 16), jnp.float32)   # NCHW
    params = init_params(k_p, in_channels=8, out_channels=4)

    fwd = jax.jit(up_blok_forward)
    out = jax.block_until_ready(fwd(params, up, sc))
    assert out.shape == (2, 4, 32, 32), out.shape

    ref = _ref_forward(params, up, sc)
    assert jnp.allclose(out, ref, atol=1e-4, rtol=1e-4), "mismatch vs. reference"

    print("KERNEL_OK")
</pallas_src>

<mosaic_0001>
module attributes {stable_mosaic.version = 11 : i64} {
  func.func @_upblok_kernel(%arg0: i32, %arg1: memref<1x4x400xf32, #tpu.memory_space<vmem>>, %arg2: memref<1x4x400xf32, #tpu.memory_space<vmem>>, %arg3: memref<8x4xf32, #tpu.memory_space<vmem>>, %arg4: memref<8x4xf32, #tpu.memory_space<vmem>>, %arg5: memref<8x1xf32, #tpu.memory_space<vmem>>, %arg6: memref<9x4x8xf32, #tpu.memory_space<vmem>>, %arg7: memref<4x1xf32, #tpu.memory_space<vmem>>, %arg8: memref<16x4x4xf32, #tpu.memory_space<vmem>>, %arg9: memref<4x1xf32, #tpu.memory_space<vmem>>, %arg10: memref<1x400xf32, #tpu.memory_space<vmem>>, %arg11: memref<1x4x4x320xf32, #tpu.memory_space<vmem>>, %arg12: memref<8x400xf32, #tpu.memory_space<vmem>>, %arg13: memref<4x400xf32, #tpu.memory_space<vmem>>) attributes {dimension_semantics = [#tpu.dimension_semantics<parallel>], iteration_bounds = array<i64: 2>, scalar_prefetch = 0 : i64, scratch_operands = 2 : i64, tpu.core_type = #tpu.core_type<tc>, window_params = [{transform_indices = @transform_0, window_bounds = array<i64: 1, 4, 400>}, {transform_indices = @transform_1, window_bounds = array<i64: 1, 4, 400>}, {pipeline_mode = #tpu.pipeline_mode<synchronous>, transform_indices = @transform_2, window_bounds = array<i64: 8, 4>}, {pipeline_mode = #tpu.pipeline_mode<synchronous>, transform_indices = @transform_3, window_bounds = array<i64: 8, 4>}, {pipeline_mode = #tpu.pipeline_mode<synchronous>, transform_indices = @transform_4, window_bounds = array<i64: 8, 1>}, {pipeline_mode = #tpu.pipeline_mode<synchronous>, transform_indices = @transform_5, window_bounds = array<i64: 9, 4, 8>}, {pipeline_mode = #tpu.pipeline_mode<synchronous>, transform_indices = @transform_6, window_bounds = array<i64: 4, 1>}, {pipeline_mode = #tpu.pipeline_mode<synchronous>, transform_indices = @transform_7, window_bounds = array<i64: 16, 4, 4>}, {pipeline_mode = #tpu.pipeline_mode<synchronous>, transform_indices = @transform_8, window_bounds = array<i64: 4, 1>}, {pipeline_mode = #tpu.pipeline_mode<synchronous>, transform_indices = @transform_9, window_bounds = array<i64: 1, 400>}, {transform_indices = @transform_10, window_bounds = array<i64: 1, 4, 4, 320>}]} {
    %c0 = arith.constant 0 : index
    %c0_0 = arith.constant 0 : index
    %0 = vector.load %arg3[%c0, %c0_0] : memref<8x4xf32, #tpu.memory_space<vmem>>, vector<8x4xf32>
    %c0_1 = arith.constant 0 : index
    %c0_2 = arith.constant 0 : index
    %c0_3 = arith.constant 0 : index
    %1 = vector.load %arg1[%c0_1, %c0_2, %c0_3] : memref<1x4x400xf32, #tpu.memory_space<vmem>>, vector<1x4x400xf32>
    %2 = vector.shape_cast %1 : vector<1x4x400xf32> to vector<4x400xf32>
    %cst = arith.constant dense<0.000000e+00> : vector<8x400xf32>
    %3 = tpu.matmul %0, %2, %cst {dimension_numbers = #tpu.dot_dimension_numbers<[1], [0], [0], [1], [0, 0, 1, 1], [], []>} : vector<8x4xf32>, vector<4x400xf32>, vector<8x400xf32> -> vector<8x400xf32>
    %c0_4 = arith.constant 0 : index
    %c0_5 = arith.constant 0 : index
    %4 = vector.load %arg4[%c0_4, %c0_5] : memref<8x4xf32, #tpu.memory_space<vmem>>, vector<8x4xf32>
    %c0_6 = arith.constant 0 : index
    %c0_7 = arith.constant 0 : index
    %c0_8 = arith.constant 0 : index
    %5 = vector.load %arg2[%c0_6, %c0_7, %c0_8] : memref<1x4x400xf32, #tpu.memory_space<vmem>>, vector<1x4x400xf32>
    %6 = vector.shape_cast %5 : vector<1x4x400xf32> to vector<4x400xf32>
    %cst_9 = arith.constant dense<0.000000e+00> : vector<8x400xf32>
    %7 = tpu.matmul %4, %6, %cst_9 {dimension_numbers = #tpu.dot_dimension_numbers<[1], [0], [0], [1], [0, 0, 1, 1], [], []>} : vector<8x4xf32>, vector<4x400xf32>, vector<8x400xf32> -> vector<8x400xf32>
    %8 = arith.addf %3, %7 : vector<8x400xf32>
    %c0_10 = arith.constant 0 : index
    %c0_11 = arith.constant 0 : index
    %9 = vector.load %arg5[%c0_10, %c0_11] : memref<8x1xf32, #tpu.memory_space<vmem>>, vector<8x1xf32>
    %10 = vector.broadcast %9 : vector<8x1xf32> to vector<8x400xf32>
    %11 = arith.addf %8, %10 : vector<8x400xf32>
    %cst_12 = arith.constant 0.000000e+00 : f32
    %12 = vector.broadcast %cst_12 : f32 to vector<8x400xf32>
    %13 = arith.maximumf %11, %12 : vector<8x400xf32>
    %c0_13 = arith.constant 0 : index
    %c0_14 = arith.constant 0 : index
    %14 = vector.load %arg10[%c0_13, %c0_14] : memref<1x400xf32, #tpu.memory_space<vmem>>, vector<1x400xf32>
    %15 = vector.broadcast %14 : vector<1x400xf32> to vector<8x400xf32>
    %16 = arith.mulf %13, %15 : vector<8x400xf32>
    %c0_15 = arith.constant 0 : index
    %c0_16 = arith.constant 0 : index
    %17 = vector.load %arg12[%c0_15, %c0_16] : memref<8x400xf32, #tpu.memory_space<vmem>>, vector<8x400xf32>
    tpu.vector_store %arg12[%c0_15, %c0_16], %16 {strides = array<i32>} : memref<8x400xf32, #tpu.memory_space<vmem>>, vector<8x400xf32>,
    %cst_17 = arith.constant 0.000000e+00 : f32
    %18 = vector.broadcast %cst_17 : f32 to vector<4x320xf32>
    %c0_18 = arith.constant 0 : index
    %c0_19 = arith.constant 0 : index
    %c0_20 = arith.constant 0 : index
    %19 = vector.load %arg6[%c0_18, %c0_19, %c0_20] : memref<9x4x8xf32, #tpu.memory_space<vmem>>, vector<1x4x8xf32>
    %20 = vector.shape_cast %19 : vector<1x4x8xf32> to vector<4x8xf32>
    %c0_21 = arith.constant 0 : index
    %c19 = arith.constant 19 : index
    %21 = vector.load %arg12[%c0_21, %c19] : memref<8x400xf32, #tpu.memory_space<vmem>>, vector<8x320xf32>
    %cst_22 = arith.constant dense<0.000000e+00> : vector<4x320xf32>
    %22 = tpu.matmul %20, %21, %cst_22 {dimension_numbers = #tpu.dot_dimension_numbers<[1], [0], [0], [1], [0, 0, 1, 1], [], []>} : vector<4x8xf32>, vector<8x320xf32>, vector<4x320xf32> -> vector<4x320xf32>
    %23 = arith.addf %18, %22 : vector<4x320xf32>
    %c1 = arith.constant 1 : index
    %c0_23 = arith.constant 0 : index
    %c0_24 = arith.constant 0 : index
    %24 = vector.load %arg6[%c1, %c0_23, %c0_24] : memref<9x4x8xf32, #tpu.memory_space<vmem>>, vector<1x4x8xf32>
    %25 = vector.shape_cast %24 : vector<1x4x8xf32> to vector<4x8xf32>
    %c0_25 = arith.constant 0 : index
    %c20 = arith.constant 20 : index
    %26 = vector.load %arg12[%c0_25, %c20] : memref<8x400xf32, #tpu.memory_space<vmem>>, vector<8x320xf32>
    %cst_26 = arith.constant dense<0.000000e+00> : vector<4x320xf32>
    %27 = tpu.matmul %25, %26, %cst_26 {dimension_numbers = #tpu.dot_dimension_numbers<[1], [0], [0], [1], [0, 0, 1, 1], [], []>} : vector<4x8xf32>, vector<8x320xf32>, vector<4x320xf32> -> vector<4x320xf32>
    %28 = arith.addf %23, %27 : vector<4x320xf32>
    %c2 = arith.constant 2 : index
    %c0_27 = arith.constant 0 : index
    %c0_28 = arith.constant 0 : index
    %29 = vector.load %arg6[%c2, %c0_27, %c0_28] : memref<9x4x8xf32, #tpu.memory_space<vmem>>, vector<1x4x8xf32>
    %30 = vector.shape_cast %29 : vector<1x4x8xf32> to vector<4x8xf32>
    %c0_29 = arith.constant 0 : index
    %c21 = arith.constant 21 : index
    %31 = vector.load %arg12[%c0_29, %c21] : memref<8x400xf32, #tpu.memory_space<vmem>>, vector<8x320xf32>
    %cst_30 = arith.constant dense<0.000000e+00> : vector<4x320xf32>
    %32 = tpu.matmul %30, %31, %cst_30 {dimension_numbers = #tpu.dot_dimension_numbers<[1], [0], [0], [1], [0, 0, 1, 1], [], []>} : vector<4x8xf32>, vector<8x320xf32>, vector<4x320xf32> -> vector<4x320xf32>
    %33 = arith.addf %28, %32 : vector<4x320xf32>
    %c3 = arith.constant 3 : index
    %c0_31 = arith.constant 0 : index
    %c0_32 = arith.constant 0 : index
    %34 = vector.load %arg6[%c3, %c0_31, %c0_32] : memref<9x4x8xf32, #tpu.memory_space<vmem>>, vector<1x4x8xf32>
    %35 = vector.shape_cast %34 : vector<1x4x8xf32> to vector<4x8xf32>
    %c0_33 = arith.constant 0 : index
    %c39 = arith.constant 39 : index
    %36 = vector.load %arg12[%c0_33, %c39] : memref<8x400xf32, #tpu.memory_space<vmem>>, vector<8x320xf32>
    %cst_34 = arith.constant dense<0.000000e+00> : vector<4x320xf32>
    %37 = tpu.matmul %35, %36, %cst_34 {dimension_numbers = #tpu.dot_dimension_numbers<[1], [0], [0], [1], [0, 0, 1, 1], [], []>} : vector<4x8xf32>, vector<8x320xf32>, vector<4x320xf32> -> vector<4x320xf32>
    %38 = arith.addf %33, %37 : vector<4x320xf32>
    %c4 = arith.constant 4 : index
    %c0_35 = arith.constant 0 : index
    %c0_36 = arith.constant 0 : index
    %39 = vector.load %arg6[%c4, %c0_35, %c0_36] : memref<9x4x8xf32, #tpu.memory_space<vmem>>, vector<1x4x8xf32>
    %40 = vector.shape_cast %39 : vector<1x4x8xf32> to vector<4x8xf32>
    %c0_37 = arith.constant 0 : index
    %c40 = arith.constant 40 : index
    %41 = vector.load %arg12[%c0_37, %c40] : memref<8x400xf32, #tpu.memory_space<vmem>>, vector<8x320xf32>
    %cst_38 = arith.constant dense<0.000000e+00> : vector<4x320xf32>
    %42 = tpu.matmul %40, %41, %cst_38 {dimension_numbers = #tpu.dot_dimension_numbers<[1], [0], [0], [1], [0, 0, 1, 1], [], []>} : vector<4x8xf32>, vector<8x320xf32>, vector<4x320xf32> -> vector<4x320xf32>
    %43 = arith.addf %38, %42 : vector<4x320xf32>
    %c5 = arith.constant 5 : index
    %c0_39 = arith.constant 0 : index
    %c0_40 = arith.constant 0 : index
    %44 = vector.load %arg6[%c5, %c0_39, %c0_40] : memref<9x4x8xf32, #tpu.memory_space<vmem>>, vector<1x4x8xf32>
    %45 = vector.shape_cast %44 : vector<1x4x8xf32> to vector<4x8xf32>
    %c0_41 = arith.constant 0 : index
    %c41 = arith.constant 41 : index
    %46 = vector.load %arg12[%c0_41, %c41] : memref<8x400xf32, #tpu.memory_space<vmem>>, vector<8x320xf32>
    %cst_42 = arith.constant dense<0.000000e+00> : vector<4x320xf32>
    %47 = tpu.matmul %45, %46, %cst_42 {dimension_numbers = #tpu.dot_dimension_numbers<[1], [0], [0], [1], [0, 0, 1, 1], [], []>} : vector<4x8xf32>, vector<8x320xf32>, vector<4x320xf32> -> vector<4x320xf32>
    %48 = arith.addf %43, %47 : vector<4x320xf32>
    %c6 = arith.constant 6 : index
    %c0_43 = arith.constant 0 : index
    %c0_44 = arith.constant 0 : index
    %49 = vector.load %arg6[%c6, %c0_43, %c0_44] : memref<9x4x8xf32, #tpu.memory_space<vmem>>, vector<1x4x8xf32>
    %50 = vector.shape_cast %49 : vector<1x4x8xf32> to vector<4x8xf32>
    %c0_45 = arith.constant 0 : index
    %c59 = arith.constant 59 : index
    %51 = vector.load %arg12[%c0_45, %c59] : memref<8x400xf32, #tpu.memory_space<vmem>>, vector<8x320xf32>
    %cst_46 = arith.constant dense<0.000000e+00> : vector<4x320xf32>
    %52 = tpu.matmul %50, %51, %cst_46 {dimension_numbers = #tpu.dot_dimension_numbers<[1], [0], [0], [1], [0, 0, 1, 1], [], []>} : vector<4x8xf32>, vector<8x320xf32>, vector<4x320xf32> -> vector<4x320xf32>
    %53 = arith.addf %48, %52 : vector<4x320xf32>
    %c7 = arith.constant 7 : index
    %c0_47 = arith.constant 0 : index
    %c0_48 = arith.constant 0 : index
    %54 = vector.load %arg6[%c7, %c0_47, %c0_48] : memref<9x4x8xf32, #tpu.memory_space<vmem>>, vector<1x4x8xf32>
    %55 = vector.shape_cast %54 : vector<1x4x8xf32> to vector<4x8xf32>
    %c0_49 = arith.constant 0 : index
    %c60 = arith.constant 60 : index
    %56 = vector.load %arg12[%c0_49, %c60] : memref<8x400xf32, #tpu.memory_space<vmem>>, vector<8x320xf32>
    %cst_50 = arith.constant dense<0.000000e+00> : vector<4x320xf32>
    %57 = tpu.matmul %55, %56, %cst_50 {dimension_numbers = #tpu.dot_dimension_numbers<[1], [0], [0], [1], [0, 0, 1, 1], [], []>} : vector<4x8xf32>, vector<8x320xf32>, vector<4x320xf32> -> vector<4x320xf32>
    %58 = arith.addf %53, %57 : vector<4x320xf32>
    %c8 = arith.constant 8 : index
    %c0_51 = arith.constant 0 : index
    %c0_52 = arith.constant 0 : index
    %59 = vector.load %arg6[%c8, %c0_51, %c0_52] : memref<9x4x8xf32, #tpu.memory_space<vmem>>, vector<1x4x8xf32>
    %60 = vector.shape_cast %59 : vector<1x4x8xf32> to vector<4x8xf32>
    %c0_53 = arith.constant 0 : index
    %c61 = arith.constant 61 : index
    %61 = vector.load %arg12[%c0_53, %c61] : memref<8x400xf32, #tpu.memory_space<vmem>>, vector<8x320xf32>
    %cst_54 = arith.constant dense<0.000000e+00> : vector<4x320xf32>
    %62 = tpu.matmul %60, %61, %cst_54 {dimension_numbers = #tpu.dot_dimension_numbers<[1], [0], [0], [1], [0, 0, 1, 1], [], []>} : vector<4x8xf32>, vector<8x320xf32>, vector<4x320xf32> -> vector<4x320xf32>
    %63 = arith.addf %58, %62 : vector<4x320xf32>
    %c0_55 = arith.constant 0 : index
    %c0_56 = arith.constant 0 : index
    %64 = vector.load %arg7[%c0_55, %c0_56] : memref<4x1xf32, #tpu.memory_space<vmem>>, vector<4x1xf32>
    %65 = vector.broadcast %64 : vector<4x1xf32> to vector<4x320xf32>
    %66 = arith.addf %63, %65 : vector<4x320xf32>
    %cst_57 = arith.constant 0.000000e+00 : f32
    %67 = vector.broadcast %cst_57 : f32 to vector<4x320xf32>
    %68 = arith.maximumf %66, %67 : vector<4x320xf32>
    %c0_58 = arith.constant 0 : index
    %c40_59 = arith.constant 40 : index
    %69 = vector.load %arg10[%c0_58, %c40_59] : memref<1x400xf32, #tpu.memory_space<vmem>>, vector<1x320xf32>
    %70 = vector.broadcast %69 : vector<1x320xf32> to vector<4x320xf32>
    %71 = arith.mulf %68, %70 : vector<4x320xf32>
    %cst_60 = arith.constant 0.000000e+00 : f32
    %72 = vector.broadcast %cst_60 : f32 to vector<4x400xf32>
    %c0_61 = arith.constant 0 : index
    %c0_62 = arith.constant 0 : index
    %73 = vector.load %arg13[%c0_61, %c0_62] : memref<4x400xf32, #tpu.memory_space<vmem>>, vector<4x400xf32>
    tpu.vector_store %arg13[%c0_61, %c0_62], %72 {strides = array<i32>} : memref<4x400xf32, #tpu.memory_space<vmem>>, vector<4x400xf32>,
    %c0_63 = arith.constant 0 : index
    %c40_64 = arith.constant 40 : index
    %74 = vector.load %arg13[%c0_63, %c40_64] : memref<4x400xf32, #tpu.memory_space<vmem>>, vector<4x320xf32>
    tpu.vector_store %arg13[%c0_63, %c40_64], %71 {strides = array<i32>} : memref<4x400xf32, #tpu.memory_space<vmem>>, vector<4x320xf32>,
    %cst_65 = arith.constant 0.000000e+00 : f32
    %75 = vector.broadcast %cst_65 : f32 to vector<4x320xf32>
    %c0_66 = arith.constant 0 : index
    %c0_67 = arith.constant 0 : index
    %c0_68 = arith.constant 0 : index
    %76 = vector.load %arg8[%c0_66, %c0_67, %c0_68] : memref<16x4x4xf32, #tpu.memory_space<vmem>>, vector<1x4x4xf32>
    %77 = vector.shape_cast %76 : vector<1x4x4xf32> to vector<4x4xf32>
    %c0_69 = arith.constant 0 : index
    %c19_70 = arith.constant 19 : index
    %78 = vector.load %arg13[%c0_69, %c19_70] : memref<4x400xf32, #tpu.memory_space<vmem>>, vector<4x320xf32>
    %cst_71 = arith.constant dense<0.000000e+00> : vector<4x320xf32>
    %79 = tpu.matmul %77, %78, %cst_71 {dimension_numbers = #tpu.dot_dimension_numbers<[1], [0], [0], [1], [0, 0, 1, 1], [], []>} : vector<4x4xf32>, vector<4x320xf32>, vector<4x320xf32> -> vector<4x320xf32>
    %80 = arith.addf %75, %79 : vector<4x320xf32>
    %c1_72 = arith.constant 1 : index
    %c0_73 = arith.constant 0 : index
    %c0_74 = arith.constant 0 : index
    %81 = vector.load %arg8[%c1_72, %c0_73, %c0_74] : memref<16x4x4xf32, #tpu.memory_space<vmem>>, vector<1x4x4xf32>
    %82 = vector.shape_cast %81 : vector<1x4x4xf32> to vector<4x4xf32>
    %c0_75 = arith.constant 0 : index
    %c20_76 = arith.constant 20 : index
    %83 = vector.load %arg13[%c0_75, %c20_76] : memref<4x400xf32, #tpu.memory_space<vmem>>, vector<4x320xf32>
    %cst_77 = arith.constant dense<0.000000e+00> : vector<4x320xf32>
    %84 = tpu.matmul %82, %83, %cst_77 {dimension_numbers = #tpu.dot_dimension_numbers<[1], [0], [0], [1], [0, 0, 1, 1], [], []>} : vector<4x4xf32>, vector<4x320xf32>, vector<4x320xf32> -> vector<4x320xf32>
    %85 = arith.addf %80, %84 : vector<4x320xf32>
    %c2_78 = arith.constant 2 : index
    %c0_79 = arith.constant 0 : index
    %c0_80 = arith.constant 0 : index
    %86 = vector.load %arg8[%c2_78, %c0_79, %c0_80] : memref<16x4x4xf32, #tpu.memory_space<vmem>>, vector<1x4x4xf32>
    %87 = vector.shape_cast %86 : vector<1x4x4xf32> to vector<4x4xf32>
    %c0_81 = arith.constant 0 : index
    %c39_82 = arith.constant 39 : index
    %88 = vector.load %arg13[%c0_81, %c39_82] : memref<4x400xf32, #tpu.memory_space<vmem>>, vector<4x320xf32>
    %cst_83 = arith.constant dense<0.000000e+00> : vector<4x320xf32>
    %89 = tpu.matmul %87, %88, %cst_83 {dimension_numbers = #tpu.dot_dimension_numbers<[1], [0], [0], [1], [0, 0, 1, 1], [], []>} : vector<4x4xf32>, vector<4x320xf32>, vector<4x320xf32> -> vector<4x320xf32>
    %90 = arith.addf %85, %89 : vector<4x320xf32>
    %c3_84 = arith.constant 3 : index
    %c0_85 = arith.constant 0 : index
    %c0_86 = arith.constant 0 : index
    %91 = vector.load %arg8[%c3_84, %c0_85, %c0_86] : memref<16x4x4xf32, #tpu.memory_space<vmem>>, vector<1x4x4xf32>
    %92 = vector.shape_cast %91 : vector<1x4x4xf32> to vector<4x4xf32>
    %c0_87 = arith.constant 0 : index
    %c40_88 = arith.constant 40 : index
    %93 = vector.load %arg13[%c0_87, %c40_88] : memref<4x400xf32, #tpu.memory_space<vmem>>, vector<4x320xf32>
    %cst_89 = arith.constant dense<0.000000e+00> : vector<4x320xf32>
    %94 = tpu.matmul %92, %93, %cst_89 {dimension_numbers = #tpu.dot_dimension_numbers<[1], [0], [0], [1], [0, 0, 1, 1], [], []>} : vector<4x4xf32>, vector<4x320xf32>, vector<4x320xf32> -> vector<4x320xf32>
    %95 = arith.addf %90, %94 : vector<4x320xf32>
    %c0_90 = arith.constant 0 : index
    %c0_91 = arith.constant 0 : index
    %96 = vector.load %arg9[%c0_90, %c0_91] : memref<4x1xf32, #tpu.memory_space<vmem>>, vector<4x1xf32>
    %97 = vector.broadcast %96 : vector<4x1xf32> to vector<4x320xf32>
    %98 = arith.addf %95, %97 : vector<4x320xf32>
    %c0_92 = arith.constant 0 : index
    %c0_93 = arith.constant 0 : index
    %c0_94 = arith.constant 0 : index
    %c0_95 = arith.constant 0 : index
    %99 = vector.load %arg11[%c0_92, %c0_93, %c0_94, %c0_95] : memref<1x4x4x320xf32, #tpu.memory_space<vmem>>, vector<1x1x4x320xf32>
    %100 = vector.shape_cast %99 : vector<1x1x4x320xf32> to vector<4x320xf32>
    %101 = vector.shape_cast %98 : vector<4x320xf32> to vector<1x1x4x320xf32>
    tpu.vector_store %arg11[%c0_92, %c0_93, %c0_94, %c0_95], %101 {strides = array<i32>} : memref<1x4x4x320xf32, #tpu.memory_space<vmem>>, vector<1x1x4x320xf32>,
    %cst_96 = arith.constant 0.000000e+00 : f32
    %102 = vector.broadcast %cst_96 : f32 to vector<4x320xf32>
    %c4_97 = arith.constant 4 : index
    %c0_98 = arith.constant 0 : index
    %c0_99 = arith.constant 0 : index
    %103 = vector.load %arg8[%c4_97, %c0_98, %c0_99] : memref<16x4x4xf32, #tpu.memory_space<vmem>>, vector<1x4x4xf32>
    %104 = vector.shape_cast %103 : vector<1x4x4xf32> to vector<4x4xf32>
    %c0_100 = arith.constant 0 : index
    %c20_101 = arith.constant 20 : index
    %105 = vector.load %arg13[%c0_100, %c20_101] : memref<4x400xf32, #tpu.memory_space<vmem>>, vector<4x320xf32>
    %cst_102 = arith.constant dense<0.000000e+00> : vector<4x320xf32>
    %106 = tpu.matmul %104, %105, %cst_102 {dimension_numbers = #tpu.dot_dimension_numbers<[1], [0], [0], [1], [0, 0, 1, 1], [], []>} : vector<4x4xf32>, vector<4x320xf32>, vector<4x320xf32> -> vector<4x320xf32>
    %107 = arith.addf %102, %106 : vector<4x320xf32>
    %c5_103 = arith.constant 5 : index
    %c0_104 = arith.constant 0 : index
    %c0_105 = arith.constant 0 : index
    %108 = vector.load %arg8[%c5_103, %c0_104, %c0_105] : memref<16x4x4xf32, #tpu.memory_space<vmem>>, vector<1x4x4xf32>
    %109 = vector.shape_cast %108 : vector<1x4x4xf32> to vector<4x4xf32>
    %c0_106 = arith.constant 0 : index
    %c21_107 = arith.constant 21 : index
    %110 = vector.load %arg13[%c0_106, %c21_107] : memref<4x400xf32, #tpu.memory_space<vmem>>, vector<4x320xf32>
    %cst_108 = arith.constant dense<0.000000e+00> : vector<4x320xf32>
    %111 = tpu.matmul %109, %110, %cst_108 {dimension_numbers = #tpu.dot_dimension_numbers<[1], [0], [0], [1], [0, 0, 1, 1], [], []>} : vector<4x4xf32>, vector<4x320xf32>, vector<4x320xf32> -> vector<4x320xf32>
    %112 = arith.addf %107, %111 : vector<4x320xf32>
    %c6_109 = arith.constant 6 : index
    %c0_110 = arith.constant 0 : index
    %c0_111 = arith.constant 0 : index
    %113 = vector.load %arg8[%c6_109, %c0_110, %c0_111] : memref<16x4x4xf32, #tpu.memory_space<vmem>>, vector<1x4x4xf32>
    %114 = vector.shape_cast %113 : vector<1x4x4xf32> to vector<4x4xf32>
    %c0_112 = arith.constant 0 : index
    %c40_113 = arith.constant 40 : index
    %115 = vector.load %arg13[%c0_112, %c40_113] : memref<4x400xf32, #tpu.memory_space<vmem>>, vector<4x320xf32>
    %cst_114 = arith.constant dense<0.000000e+00> : vector<4x320xf32>
    %116 = tpu.matmul %114, %115, %cst_114 {dimension_numbers = #tpu.dot_dimension_numbers<[1], [0], [0], [1], [0, 0, 1, 1], [], []>} : vector<4x4xf32>, vector<4x320xf32>, vector<4x320xf32> -> vector<4x320xf32>
    %117 = arith.addf %112, %116 : vector<4x320xf32>
    %c7_115 = arith.constant 7 : index
    %c0_116 = arith.constant 0 : index
    %c0_117 = arith.constant 0 : index
    %118 = vector.load %arg8[%c7_115, %c0_116, %c0_117] : memref<16x4x4xf32, #tpu.memory_space<vmem>>, vector<1x4x4xf32>
    %119 = vector.shape_cast %118 : vector<1x4x4xf32> to vector<4x4xf32>
    %c0_118 = arith.constant 0 : index
    %c41_119 = arith.constant 41 : index
    %120 = vector.load %arg13[%c0_118, %c41_119] : memref<4x400xf32, #tpu.memory_space<vmem>>, vector<4x320xf32>
    %cst_120 = arith.constant dense<0.000000e+00> : vector<4x320xf32>
    %121 = tpu.matmul %119, %120, %cst_120 {dimension_numbers = #tpu.dot_dimension_numbers<[1], [0], [0], [1], [0, 0, 1, 1], [], []>} : vector<4x4xf32>, vector<4x320xf32>, vector<4x320xf32> -> vector<4x320xf32>
    %122 = arith.addf %117, %121 : vector<4x320xf32>
    %c0_121 = arith.constant 0 : index
    %c0_122 = arith.constant 0 : index
    %123 = vector.load %arg9[%c0_121, %c0_122] : memref<4x1xf32, #tpu.memory_space<vmem>>, vector<4x1xf32>
    %124 = vector.broadcast %123 : vector<4x1xf32> to vector<4x320xf32>
    %125 = arith.addf %122, %124 : vector<4x320xf32>
    %c0_123 = arith.constant 0 : index
    %c1_124 = arith.constant 1 : index
    %c0_125 = arith.constant 0 : index
    %c0_126 = arith.constant 0 : index
    %126 = vector.load %arg11[%c0_123, %c1_124, %c0_125, %c0_126] : memref<1x4x4x320xf32, #tpu.memory_space<vmem>>, vector<1x1x4x320xf32>
    %127 = vector.shape_cast %126 : vector<1x1x4x320xf32> to vector<4x320xf32>
    %128 = vector.shape_cast %125 : vector<4x320xf32> to vector<1x1x4x320xf32>
    tpu.vector_store %arg11[%c0_123, %c1_124, %c0_125, %c0_126], %128 {strides = array<i32>} : memref<1x4x4x320xf32, #tpu.memory_space<vmem>>, vector<1x1x4x320xf32>,
    %cst_127 = arith.constant 0.000000e+00 : f32
    %129 = vector.broadcast %cst_127 : f32 to vector<4x320xf32>
    %c8_128 = arith.constant 8 : index
    %c0_129 = arith.constant 0 : index
    %c0_130 = arith.constant 0 : index
    %130 = vector.load %arg8[%c8_128, %c0_129, %c0_130] : memref<16x4x4xf32, #tpu.memory_space<vmem>>, vector<1x4x4xf32>
    %131 = vector.shape_cast %130 : vector<1x4x4xf32> to vector<4x4xf32>
    %c0_131 = arith.constant 0 : index
    %c39_132 = arith.constant 39 : index
    %132 = vector.load %arg13[%c0_131, %c39_132] : memref<4x400xf32, #tpu.memory_space<vmem>>, vector<4x320xf32>
    %cst_133 = arith.constant dense<0.000000e+00> : vector<4x320xf32>
    %133 = tpu.matmul %131, %132, %cst_133 {dimension_numbers = #tpu.dot_dimension_numbers<[1], [0], [0], [1], [0, 0, 1, 1], [], []>} : vector<4x4xf32>, vector<4x320xf32>, vector<4x320xf32> -> vector<4x320xf32>
    %134 = arith.addf %129, %133 : vector<4x320xf32>
    %c9 = arith.constant 9 : index
    %c0_134 = arith.constant 0 : index
    %c0_135 = arith.constant 0 : index
    %135 = vector.load %arg8[%c9, %c0_134, %c0_135] : memref<16x4x4xf32, #tpu.memory_space<vmem>>, vector<1x4x4xf32>
    %136 = vector.shape_cast %135 : vector<1x4x4xf32> to vector<4x4xf32>
    %c0_136 = arith.constant 0 : index
    %c40_137 = arith.constant 40 : index
    %137 = vector.load %arg13[%c0_136, %c40_137] : memref<4x400xf32, #tpu.memory_space<vmem>>, vector<4x320xf32>
    %cst_138 = arith.constant dense<0.000000e+00> : vector<4x320xf32>
    %138 = tpu.matmul %136, %137, %cst_138 {dimension_numbers = #tpu.dot_dimension_numbers<[1], [0], [0], [1], [0, 0, 1, 1], [], []>} : vector<4x4xf32>, vector<4x320xf32>, vector<4x320xf32> -> vector<4x320xf32>
    %139 = arith.addf %134, %138 : vector<4x320xf32>
    %c10 = arith.constant 10 : index
    %c0_139 = arith.constant 0 : index
    %c0_140 = arith.constant 0 : index
    %140 = vector.load %arg8[%c10, %c0_139, %c0_140] : memref<16x4x4xf32, #tpu.memory_space<vmem>>, vector<1x4x4xf32>
    %141 = vector.shape_cast %140 : vector<1x4x4xf32> to vector<4x4xf32>
    %c0_141 = arith.constant 0 : index
    %c59_142 = arith.constant 59 : index
    %142 = vector.load %arg13[%c0_141, %c59_142] : memref<4x400xf32, #tpu.memory_space<vmem>>, vector<4x320xf32>
    %cst_143 = arith.constant dense<0.000000e+00> : vector<4x320xf32>
    %143 = tpu.matmul %141, %142, %cst_143 {dimension_numbers = #tpu.dot_dimension_numbers<[1], [0], [0], [1], [0, 0, 1, 1], [], []>} : vector<4x4xf32>, vector<4x320xf32>, vector<4x320xf32> -> vector<4x320xf32>
    %144 = arith.addf %139, %143 : vector<4x320xf32>
    %c11 = arith.constant 11 : index
    %c0_144 = arith.constant 0 : index
    %c0_145 = arith.constant 0 : index
    %145 = vector.load %arg8[%c11, %c0_144, %c0_145] : memref<16x4x4xf32, #tpu.memory_space<vmem>>, vector<1x4x4xf32>
    %146 = vector.shape_cast %145 : vector<1x4x4xf32> to vector<4x4xf32>
    %c0_146 = arith.constant 0 : index
    %c60_147 = arith.constant 60 : index
    %147 = vector.load %arg13[%c0_146, %c60_147] : memref<4x400xf32, #tpu.memory_space<vmem>>, vector<4x320xf32>
    %cst_148 = arith.constant dense<0.000000e+00> : vector<4x320xf32>
    %148 = tpu.matmul %146, %147, %cst_148 {dimension_numbers = #tpu.dot_dimension_numbers<[1], [0], [0], [1], [0, 0, 1, 1], [], []>} : vector<4x4xf32>, vector<4x320xf32>, vector<4x320xf32> -> vector<4x320xf32>
    %149 = arith.addf %144, %148 : vector<4x320xf32>
    %c0_149 = arith.constant 0 : index
    %c0_150 = arith.constant 0 : index
    %150 = vector.load %arg9[%c0_149, %c0_150] : memref<4x1xf32, #tpu.memory_space<vmem>>, vector<4x1xf32>
    %151 = vector.broadcast %150 : vector<4x1xf32> to vector<4x320xf32>
    %152 = arith.addf %149, %151 : vector<4x320xf32>
    %c0_151 = arith.constant 0 : index
    %c2_152 = arith.constant 2 : index
    %c0_153 = arith.constant 0 : index
    %c0_154 = arith.constant 0 : index
    %153 = vector.load %arg11[%c0_151, %c2_152, %c0_153, %c0_154] : memref<1x4x4x320xf32, #tpu.memory_space<vmem>>, vector<1x1x4x320xf32>
    %154 = vector.shape_cast %153 : vector<1x1x4x320xf32> to vector<4x320xf32>
    %155 = vector.shape_cast %152 : vector<4x320xf32> to vector<1x1x4x320xf32>
    tpu.vector_store %arg11[%c0_151, %c2_152, %c0_153, %c0_154], %155 {strides = array<i32>} : memref<1x4x4x320xf32, #tpu.memory_space<vmem>>, vector<1x1x4x320xf32>,
    %cst_155 = arith.constant 0.000000e+00 : f32
    %156 = vector.broadcast %cst_155 : f32 to vector<4x320xf32>
    %c12 = arith.constant 12 : index
    %c0_156 = arith.constant 0 : index
    %c0_157 = arith.constant 0 : index
    %157 = vector.load %arg8[%c12, %c0_156, %c0_157] : memref<16x4x4xf32, #tpu.memory_space<vmem>>, vector<1x4x4xf32>
    %158 = vector.shape_cast %157 : vector<1x4x4xf32> to vector<4x4xf32>
    %c0_158 = arith.constant 0 : index
    %c40_159 = arith.constant 40 : index
    %159 = vector.load %arg13[%c0_158, %c40_159] : memref<4x400xf32, #tpu.memory_space<vmem>>, vector<4x320xf32>
    %cst_160 = arith.constant dense<0.000000e+00> : vector<4x320xf32>
    %160 = tpu.matmul %158, %159, %cst_160 {dimension_numbers = #tpu.dot_dimension_numbers<[1], [0], [0], [1], [0, 0, 1, 1], [], []>} : vector<4x4xf32>, vector<4x320xf32>, vector<4x320xf32> -> vector<4x320xf32>
    %161 = arith.addf %156, %160 : vector<4x320xf32>
    %c13 = arith.constant 13 : index
    %c0_161 = arith.constant 0 : index
    %c0_162 = arith.constant 0 : index
    %162 = vector.load %arg8[%c13, %c0_161, %c0_162] : memref<16x4x4xf32, #tpu.memory_space<vmem>>, vector<1x4x4xf32>
    %163 = vector.shape_cast %162 : vector<1x4x4xf32> to vector<4x4xf32>
    %c0_163 = arith.constant 0 : index
    %c41_164 = arith.constant 41 : index
    %164 = vector.load %arg13[%c0_163, %c41_164] : memref<4x400xf32, #tpu.memory_space<vmem>>, vector<4x320xf32>
    %cst_165 = arith.constant dense<0.000000e+00> : vector<4x320xf32>
    %165 = tpu.matmul %163, %164, %cst_165 {dimension_numbers = #tpu.dot_dimension_numbers<[1], [0], [0], [1], [0, 0, 1, 1], [], []>} : vector<4x4xf32>, vector<4x320xf32>, vector<4x320xf32> -> vector<4x320xf32>
    %166 = arith.addf %161, %165 : vector<4x320xf32>
    %c14 = arith.constant 14 : index
    %c0_166 = arith.constant 0 : index
    %c0_167 = arith.constant 0 : index
    %167 = vector.load %arg8[%c14, %c0_166, %c0_167] : memref<16x4x4xf32, #tpu.memory_space<vmem>>, vector<1x4x4xf32>
    %168 = vector.shape_cast %167 : vector<1x4x4xf32> to vector<4x4xf32>
    %c0_168 = arith.constant 0 : index
    %c60_169 = arith.constant 60 : index
    %169 = vector.load %arg13[%c0_168, %c60_169] : memref<4x400xf32, #tpu.memory_space<vmem>>, vector<4x320xf32>
    %cst_170 = arith.constant dense<0.000000e+00> : vector<4x320xf32>
    %170 = tpu.matmul %168, %169, %cst_170 {dimension_numbers = #tpu.dot_dimension_numbers<[1], [0], [0], [1], [0, 0, 1, 1], [], []>} : vector<4x4xf32>, vector<4x320xf32>, vector<4x320xf32> -> vector<4x320xf32>
    %171 = arith.addf %166, %170 : vector<4x320xf32>
    %c15 = arith.constant 15 : index
    %c0_171 = arith.constant 0 : index
    %c0_172 = arith.constant 0 : index
    %172 = vector.load %arg8[%c15, %c0_171, %c0_172] : memref<16x4x4xf32, #tpu.memory_space<vmem>>, vector<1x4x4xf32>
    %173 = vector.shape_cast %172 : vector<1x4x4xf32> to vector<4x4xf32>
    %c0_173 = arith.constant 0 : index
    %c61_174 = arith.constant 61 : index
    %174 = vector.load %arg13[%c0_173, %c61_174] : memref<4x400xf32, #tpu.memory_space<vmem>>, vector<4x320xf32>
    %cst_175 = arith.constant dense<0.000000e+00> : vector<4x320xf32>
    %175 = tpu.matmul %173, %174, %cst_175 {dimension_numbers = #tpu.dot_dimension_numbers<[1], [0], [0], [1], [0, 0, 1, 1], [], []>} : vector<4x4xf32>, vector<4x320xf32>, vector<4x320xf32> -> vector<4x320xf32>
    %176 = arith.addf %171, %175 : vector<4x320xf32>
    %c0_176 = arith.constant 0 : index
    %c0_177 = arith.constant 0 : index
    %177 = vector.load %arg9[%c0_176, %c0_177] : memref<4x1xf32, #tpu.memory_space<vmem>>, vector<4x1xf32>
    %178 = vector.broadcast %177 : vector<4x1xf32> to vector<4x320xf32>
    %179 = arith.addf %176, %178 : vector<4x320xf32>
    %c0_178 = arith.constant 0 : index
    %c3_179 = arith.constant 3 : index
    %c0_180 = arith.constant 0 : index
    %c0_181 = arith.constant 0 : index
    %180 = vector.load %arg11[%c0_178, %c3_179, %c0_180, %c0_181] : memref<1x4x4x320xf32, #tpu.memory_space<vmem>>, vector<1x1x4x320xf32>
    %181 = vector.shape_cast %180 : vector<1x1x4x320xf32> to vector<4x320xf32>
    %182 = vector.shape_cast %179 : vector<4x320xf32> to vector<1x1x4x320xf32>
    tpu.vector_store %arg11[%c0_178, %c3_179, %c0_180, %c0_181], %182 {strides = array<i32>} : memref<1x4x4x320xf32, #tpu.memory_space<vmem>>, vector<1x1x4x320xf32>,
    return
  }
  func.func @transform_0(%arg0: i32) -> (i32, i32, i32) {
    %c0_i32 = arith.constant 0 : i32
    %c0_i32_0 = arith.constant 0 : i32
    %c0_i32_1 = arith.constant 0 : i32
    return %arg0, %c0_i32, %c0_i32_0 : i32, i32, i32
  }
  func.func @transform_1(%arg0: i32) -> (i32, i32, i32) {
    %c0_i32 = arith.constant 0 : i32
    %c0_i32_0 = arith.constant 0 : i32
    %c0_i32_1 = arith.constant 0 : i32
    return %arg0, %c0_i32, %c0_i32_0 : i32, i32, i32
  }
  func.func @transform_2(%arg0: i32) -> (i32, i32) {
    %c0_i32 = arith.constant 0 : i32
    %c0_i32_0 = arith.constant 0 : i32
    %c0_i32_1 = arith.constant 0 : i32
    return %c0_i32, %c0_i32_0 : i32, i32
  }
  func.func @transform_3(%arg0: i32) -> (i32, i32) {
    %c0_i32 = arith.constant 0 : i32
    %c0_i32_0 = arith.constant 0 : i32
    %c0_i32_1 = arith.constant 0 : i32
    return %c0_i32, %c0_i32_0 : i32, i32
  }
  func.func @transform_4(%arg0: i32) -> (i32, i32) {
    %c0_i32 = arith.constant 0 : i32
    %c0_i32_0 = arith.constant 0 : i32
    %c0_i32_1 = arith.constant 0 : i32
    return %c0_i32, %c0_i32_0 : i32, i32
  }
  func.func @transform_5(%arg0: i32) -> (i32, i32, i32) {
    %c0_i32 = arith.constant 0 : i32
    %c0_i32_0 = arith.constant 0 : i32
    %c0_i32_1 = arith.constant 0 : i32
    %c0_i32_2 = arith.constant 0 : i32
    return %c0_i32, %c0_i32_0, %c0_i32_1 : i32, i32, i32
  }
  func.func @transform_6(%arg0: i32) -> (i32, i32) {
    %c0_i32 = arith.constant 0 : i32
    %c0_i32_0 = arith.constant 0 : i32
    %c0_i32_1 = arith.constant 0 : i32
    return %c0_i32, %c0_i32_0 : i32, i32
  }
  func.func @transform_7(%arg0: i32) -> (i32, i32, i32) {
    %c0_i32 = arith.constant 0 : i32
    %c0_i32_0 = arith.constant 0 : i32
    %c0_i32_1 = arith.constant 0 : i32
    %c0_i32_2 = arith.constant 0 : i32
    return %c0_i32, %c0_i32_0, %c0_i32_1 : i32, i32, i32
  }
  func.func @transform_8(%arg0: i32) -> (i32, i32) {
    %c0_i32 = arith.constant 0 : i32
    %c0_i32_0 = arith.constant 0 : i32
    %c0_i32_1 = arith.constant 0 : i32
    return %c0_i32, %c0_i32_0 : i32, i32
  }
  func.func @transform_9(%arg0: i32) -> (i32, i32) {
    %c0_i32 = arith.constant 0 : i32
    %c0_i32_0 = arith.constant 0 : i32
    %c0_i32_1 = arith.constant 0 : i32
    return %c0_i32, %c0_i32_0 : i32, i32
  }
  func.func @transform_10(%arg0: i32) -> (i32, i32, i32, i32) {
    %c0_i32 = arith.constant 0 : i32
    %c0_i32_0 = arith.constant 0 : i32
    %c0_i32_1 = arith.constant 0 : i32
    %c0_i32_2 = arith.constant 0 : i32
    return %arg0, %c0_i32, %c0_i32_0, %c0_i32_1 : i32, i32, i32, i32
  }
}

</mosaic_0001>

<llo_original>
// kernel: up_blok_forward.1
$region0: #{up_blok_forward.1}
  #allocation0 [shape = 'u32[]', space=smem, size = 0x4, offset = 0x4, fixed_abs, tag = 'smem constant byte address 0x4 - core index']
  #allocation1 [shape = 'u32[72,128]{1,0:T(1,128)}', space=vmem, size = 0x9000, scoped, tag = 'internal scratch']
  #allocation2 [shape = 'f32[8,400]{1,0:T(8,128)}', space=vmem, size = 0x4000, scoped, tag = 'scratch operand']
  #allocation3 [shape = 'f32[4,400]{1,0:T(4,128)}', space=vmem, size = 0x2000, scoped, tag = 'scratch operand']
  %s0 = inlined_call_operand.vmem [shape: f32[2,4,400], index: 0, kind: input, shape index: {}]
  %s1 = inlined_call_operand.vmem [shape: f32[2,4,400], index: 1, kind: input, shape index: {}]
  %s2 = inlined_call_operand.vmem [shape: f32[8,4], index: 2, kind: input, shape index: {}]
  %s3 = inlined_call_operand.vmem [shape: f32[8,4], index: 3, kind: input, shape index: {}]
  %s4 = inlined_call_operand.vmem [shape: f32[8,1], index: 4, kind: input, shape index: {}]
  %s5 = inlined_call_operand.vmem [shape: f32[9,4,8], index: 5, kind: input, shape index: {}]
  %s6 = inlined_call_operand.vmem [shape: f32[4,1], index: 6, kind: input, shape index: {}]
  %s7 = inlined_call_operand.vmem [shape: f32[16,4,4], index: 7, kind: input, shape index: {}]
  %s8 = inlined_call_operand.vmem [shape: f32[4,1], index: 8, kind: input, shape index: {}]
  %s9 = inlined_call_operand.vmem [shape: f32[1,400], index: 9, kind: input, shape index: {}]
  %s10 = inlined_call_operand.vmem [shape: f32[2,4,4,320], index: 10, kind: output, shape index: {}]
  %s11 = sld [smem:[#allocation0]]
  $region73: #{up_blok_forward.1} parent=0
    _
  %s13 = ssub.s32 1, %s11
  %s14 = scalar_select 0, %s13, %s11
  loop: start=0, step=1, limit=4
  $region2: #{up_blok_forward.1} parent=0 // loop_pre_header
    _
  $region3: #{up_blok_forward.1} parent=0 // loop_header
    %s16 = sphi 0, %s20
    %p17 = scmp.ge.s32.totalorder %s16, 4
    %s26 = sphi 0, %s28
    %s29 = sphi 0, %s26
    %s30 = sphi 0, %s29
    %s46 = sphi 0, %s30
    %s52 = sphi 0, %s54
    %s55 = sphi 0, %s52
    %s56 = sphi 0, %s55
    %s72 = sphi 0, %s56
    %s76 = sphi 0, %s76
    %s78 = sphi 0, %s76
    %s79 = sphi 0, %s78
    %s93 = sphi 0, %s79
    %s97 = sphi 0, %s97
    %s99 = sphi 0, %s97
    %s100 = sphi 0, %s99
    %s114 = sphi 0, %s100
    %s118 = sphi 0, %s118
    %s120 = sphi 0, %s118
    %s121 = sphi 0, %s120
    %s135 = sphi 0, %s121
    %s139 = sphi 0, %s139
    %s141 = sphi 0, %s139
    %s142 = sphi 0, %s141
    %s156 = sphi 0, %s142
    %s160 = sphi 0, %s160
    %s162 = sphi 0, %s160
    %s163 = sphi 0, %s162
    %s177 = sphi 0, %s163
    %s181 = sphi 0, %s181
    %s183 = sphi 0, %s181
    %s184 = sphi 0, %s183
    %s198 = sphi 0, %s184
    %s202 = sphi 0, %s202
    %s204 = sphi 0, %s202
    %s205 = sphi 0, %s204
    %s219 = sphi 0, %s205
    %s223 = sphi 0, %s223
    %s225 = sphi 0, %s223
    %s226 = sphi 0, %s225
    %s240 = sphi 0, %s226
    %s246 = sphi 0, %s248
    %s249 = sphi 0, %s246
    %s250 = sphi 0, %s249
    %s266 = sphi 0, %s250
  $region4: #{up_blok_forward.1} parent=0 // loop_header_branch
    %19 = sbr.rel (%p17) target = $region8
  $region5: #{up_blok_forward.1} parent=0 // loop_body
    %s21 = ssub.s32 %s16, 1
    %s22 = ssub.s32 %s16, 2
    %s23 = sadd.s32 %s16, 1
    %s24 = ssub.s32 %s16, %s23
    %p25 = scmp.eq.s32.totalorder %s24, 0
    %s27 = sadd.s32 %s26, 1
    %s28 = scalar_select %p25, %s26, %s27
    %p31 = pneg %p25
    %p32 = scmp.eq.s32.totalorder %s16, 1
    %p33 = por %p31, %p32
    %p34 = scmp.ne.s32.totalorder %s26, %s29
    %p35 = scmp.eq.s32.totalorder %s16, 0
    %p36 = por %p34, %p35
    %p37 = scmp.ne.s32.totalorder %s26, %s29
    %p38 = scmp.eq.s32.totalorder %s21, 1
    %p39 = por %p37, %p38
    %p40 = scmp.ne.s32.totalorder %s29, %s30
    %p41 = scmp.eq.s32.totalorder %s21, 0
    %p42 = por %p40, %p41
    %p43 = scmp.ne.s32.totalorder %s29, %s30
    %p44 = scmp.eq.s32.totalorder %s22, 1
    %p45 = por %p43, %p44
    %p47 = scmp.ne.s32.totalorder %s30, %s46
    %p48 = scmp.eq.s32.totalorder %s22, 0
    %p49 = por %p47, %p48
    %s50 = ssub.s32 %s16, %s23
    %p51 = scmp.eq.s32.totalorder %s50, 0
    %s53 = sadd.s32 %s52, 1
    %s54 = scalar_select %p51, %s52, %s53
    %p57 = pneg %p51
    %p58 = scmp.eq.s32.totalorder %s16, 1
    %p59 = por %p57, %p58
    %p60 = scmp.ne.s32.totalorder %s52, %s55
    %p61 = scmp.eq.s32.totalorder %s16, 0
    %p62 = por %p60, %p61
    %p63 = scmp.ne.s32.totalorder %s52, %s55
    %p64 = scmp.eq.s32.totalorder %s21, 1
    %p65 = por %p63, %p64
    %p66 = scmp.ne.s32.totalorder %s55, %s56
    %p67 = scmp.eq.s32.totalorder %s21, 0
    %p68 = por %p66, %p67
    %p69 = scmp.ne.s32.totalorder %s55, %s56
    %p70 = scmp.eq.s32.totalorder %s22, 1
    %p71 = por %p69, %p70
    %p73 = scmp.ne.s32.totalorder %s56, %s72
    %p74 = scmp.eq.s32.totalorder %s22, 0
    %p75 = por %p73, %p74
    %s77 = sadd.s32 %s76, 1
    %p80 = scmp.eq.s32.totalorder %s16, 1
    %p81 = scmp.ne.s32.totalorder %s76, %s78
    %p82 = scmp.eq.s32.totalorder %s16, 0
    %p83 = por %p81, %p82
    %p84 = scmp.ne.s32.totalorder %s76, %s78
    %p85 = scmp.eq.s32.totalorder %s21, 1
    %p86 = por %p84, %p85
    %p87 = scmp.ne.s32.totalorder %s78, %s79
    %p88 = scmp.eq.s32.totalorder %s21, 0
    %p89 = por %p87, %p88
    %p90 = scmp.ne.s32.totalorder %s78, %s79
    %p91 = scmp.eq.s32.totalorder %s22, 1
    %p92 = por %p90, %p91
    %p94 = scmp.ne.s32.totalorder %s79, %s93
    %p95 = scmp.eq.s32.totalorder %s22, 0
    %p96 = por %p94, %p95
    %s98 = sadd.s32 %s97, 1
    %p101 = scmp.eq.s32.totalorder %s16, 1
    %p102 = scmp.ne.s32.totalorder %s97, %s99
    %p103 = scmp.eq.s32.totalorder %s16, 0
    %p104 = por %p102, %p103
    %p105 = scmp.ne.s32.totalorder %s97, %s99
    %p106 = scmp.eq.s32.totalorder %s21, 1
    %p107 = por %p105, %p106
    %p108 = scmp.ne.s32.totalorder %s99, %s100
    %p109 = scmp.eq.s32.totalorder %s21, 0
    %p110 = por %p108, %p109
    %p111 = scmp.ne.s32.totalorder %s99, %s100
    %p112 = scmp.eq.s32.totalorder %s22, 1
    %p113 = por %p111, %p112
    %p115 = scmp.ne.s32.totalorder %s100, %s114
    %p116 = scmp.eq.s32.totalorder %s22, 0
    %p117 = por %p115, %p116
    %s119 = sadd.s32 %s118, 1
    %p122 = scmp.eq.s32.totalorder %s16, 1
    %p123 = scmp.ne.s32.totalorder %s118, %s120
    %p124 = scmp.eq.s32.totalorder %s16, 0
    %p125 = por %p123, %p124
    %p126 = scmp.ne.s32.totalorder %s118, %s120
    %p127 = scmp.eq.s32.totalorder %s21, 1
    %p128 = por %p126, %p127
    %p129 = scmp.ne.s32.totalorder %s120, %s121
    %p130 = scmp.eq.s32.totalorder %s21, 0
    %p131 = por %p129, %p130
    %p132 = scmp.ne.s32.totalorder %s120, %s121
    %p133 = scmp.eq.s32.totalorder %s22, 1
    %p134 = por %p132, %p133
    %p136 = scmp.ne.s32.totalorder %s121, %s135
    %p137 = scmp.eq.s32.totalorder %s22, 0
    %p138 = por %p136, %p137
    %s140 = sadd.s32 %s139, 1
    %p143 = scmp.eq.s32.totalorder %s16, 1
    %p144 = scmp.ne.s32.totalorder %s139, %s141
    %p145 = scmp.eq.s32.totalorder %s16, 0
    %p146 = por %p144, %p145
    %p147 = scmp.ne.s32.totalorder %s139, %s141
    %p148 = scmp.eq.s32.totalorder %s21, 1
    %p149 = por %p147, %p148
    %p150 = scmp.ne.s32.totalorder %s141, %s142
    %p151 = scmp.eq.s32.totalorder %s21, 0
    %p152 = por %p150, %p151
    %p153 = scmp.ne.s32.totalorder %s141, %s142
    %p154 = scmp.eq.s32.totalorder %s22, 1
    %p155 = por %p153, %p154
    %p157 = scmp.ne.s32.totalorder %s142, %s156
    %p158 = scmp.eq.s32.totalorder %s22, 0
    %p159 = por %p157, %p158
    %s161 = sadd.s32 %s160, 1
    %p164 = scmp.eq.s32.totalorder %s16, 1
    %p165 = scmp.ne.s32.totalorder %s160, %s162
    %p166 = scmp.eq.s32.totalorder %s16, 0
    %p167 = por %p165, %p166
    %p168 = scmp.ne.s32.totalorder %s160, %s162
    %p169 = scmp.eq.s32.totalorder %s21, 1
    %p170 = por %p168, %p169
    %p171 = scmp.ne.s32.totalorder %s162, %s163
    %p172 = scmp.eq.s32.totalorder %s21, 0
    %p173 = por %p171, %p172
    %p174 = scmp.ne.s32.totalorder %s162, %s163
    %p175 = scmp.eq.s32.totalorder %s22, 1
    %p176 = por %p174, %p175
    %p178 = scmp.ne.s32.totalorder %s163, %s177
    %p179 = scmp.eq.s32.totalorder %s22, 0
    %p180 = por %p178, %p179
    %s182 = sadd.s32 %s181, 1
    %p185 = scmp.eq.s32.totalorder %s16, 1
    %p186 = scmp.ne.s32.totalorder %s181, %s183
    %p187 = scmp.eq.s32.totalorder %s16, 0
    %p188 = por %p186, %p187
    %p189 = scmp.ne.s32.totalorder %s181, %s183
    %p190 = scmp.eq.s32.totalorder %s21, 1
    %p191 = por %p189, %p190
    %p192 = scmp.ne.s32.totalorder %s183, %s184
    %p193 = scmp.eq.s32.totalorder %s21, 0
    %p194 = por %p192, %p193
    %p195 = scmp.ne.s32.totalorder %s183, %s184
    %p196 = scmp.eq.s32.totalorder %s22, 1
    %p197 = por %p195, %p196
    %p199 = scmp.ne.s32.totalorder %s184, %s198
    %p200 = scmp.eq.s32.totalorder %s22, 0
    %p201 = por %p199, %p200
    %s203 = sadd.s32 %s202, 1
    %p206 = scmp.eq.s32.totalorder %s16, 1
    %p207 = scmp.ne.s32.totalorder %s202, %s204
    %p208 = scmp.eq.s32.totalorder %s16, 0
    %p209 = por %p207, %p208
    %p210 = scmp.ne.s32.totalorder %s202, %s204
    %p211 = scmp.eq.s32.totalorder %s21, 1
    %p212 = por %p210, %p211
    %p213 = scmp.ne.s32.totalorder %s204, %s205
    %p214 = scmp.eq.s32.totalorder %s21, 0
    %p215 = por %p213, %p214
    %p216 = scmp.ne.s32.totalorder %s204, %s205
    %p217 = scmp.eq.s32.totalorder %s22, 1
    %p218 = por %p216, %p217
    %p220 = scmp.ne.s32.totalorder %s205, %s219
    %p221 = scmp.eq.s32.totalorder %s22, 0
    %p222 = por %p220, %p221
    %s224 = sadd.s32 %s223, 1
    %p227 = scmp.eq.s32.totalorder %s16, 1
    %p228 = scmp.ne.s32.totalorder %s223, %s225
    %p229 = scmp.eq.s32.totalorder %s16, 0
    %p230 = por %p228, %p229
    %p231 = scmp.ne.s32.totalorder %s223, %s225
    %p232 = scmp.eq.s32.totalorder %s21, 1
    %p233 = por %p231, %p232
    %p234 = scmp.ne.s32.totalorder %s225, %s226
    %p235 = scmp.eq.s32.totalorder %s21, 0
    %p236 = por %p234, %p235
    %p237 = scmp.ne.s32.totalorder %s225, %s226
    %p238 = scmp.eq.s32.totalorder %s22, 1
    %p239 = por %p237, %p238
    %p241 = scmp.ne.s32.totalorder %s226, %s240
    %p242 = scmp.eq.s32.totalorder %s22, 0
    %p243 = por %p241, %p242
    %s244 = ssub.s32 %s16, %s23
    %p245 = scmp.eq.s32.totalorder %s244, 0
    %s247 = sadd.s32 %s246, 1
    %s248 = scalar_select %p245, %s246, %s247
    %p251 = pneg %p245
    %p252 = scmp.eq.s32.totalorder %s16, 1
    %p253 = por %p251, %p252
    %p254 = scmp.ne.s32.totalorder %s246, %s249
    %p255 = scmp.eq.s32.totalorder %s16, 0
    %p256 = por %p254, %p255
    %p257 = scmp.ne.s32.totalorder %s246, %s249
    %p258 = scmp.eq.s32.totalorder %s21, 1
    %p259 = por %p257, %p258
    %p260 = scmp.ne.s32.totalorder %s249, %s250
    %p261 = scmp.eq.s32.totalorder %s21, 0
    %p262 = por %p260, %p261
    %p263 = scmp.ne.s32.totalorder %s249, %s250
    %p264 = scmp.eq.s32.totalorder %s22, 1
    %p265 = por %p263, %p264
    %p267 = scmp.ne.s32.totalorder %s250, %s266
    %p268 = scmp.eq.s32.totalorder %s22, 0
    %p269 = por %p267, %p268
    %p270 = scmp.le.s32.totalorder 1, %s16
    %p271 = scmp.lt.s32.totalorder %s16, 3
    %p272 = pnand %p270, %p271
    %p273 = pneg %p272
    // Predicated region
    $region9: #{up_blok_forward.1} parent=5 // pred_check
      _
    $region10: #{up_blok_forward.1} parent=5 // pred_check_branch
      %275 = sbr.rel (%p272) target = $region12
    $region11: #{up_blok_forward.1} parent=5 // pred_region
      %s276 = ssub.s32 %s16, 1
      // Predicated region
      $region13: #{up_blok_forward.1} parent=11 // pred_check
        %p277 = pneg %p89
      $region14: #{up_blok_forward.1} parent=11 // pred_check_branch
        %279 = sbr.rel (%p277) target = $region16
      $region15: #{up_blok_forward.1} parent=11 // pred_region
        _
      $region16: #{up_blok_forward.1} parent=11 // pred_fallthru
        _
      // Predicated region
      $region17: #{up_blok_forward.1} parent=11 // pred_check
        %p280 = pneg %p110
      $region18: #{up_blok_forward.1} parent=11 // pred_check_branch
        %282 = sbr.rel (%p280) target = $region20
      $region19: #{up_blok_forward.1} parent=11 // pred_region
        _
      $region20: #{up_blok_forward.1} parent=11 // pred_fallthru
        _
      // Predicated region
      $region21: #{up_blok_forward.1} parent=11 // pred_check
        %p283 = pneg %p131
      $region22: #{up_blok_forward.1} parent=11 // pred_check_branch
        %285 = sbr.rel (%p283) target = $region24
      $region23: #{up_blok_forward.1} parent=11 // pred_region
        _
      $region24: #{up_blok_forward.1} parent=11 // pred_fallthru
        _
      // Predicated region
      $region25: #{up_blok_forward.1} parent=11 // pred_check
        %p286 = pneg %p152
      $region26: #{up_blok_forward.1} parent=11 // pred_check_branch
        %288 = sbr.rel (%p286) target = $region28
      $region27: #{up_blok_forward.1} parent=11 // pred_region
        _
      $region28: #{up_blok_forward.1} parent=11 // pred_fallthru
        _
      // Predicated region
      $region29: #{up_blok_forward.1} parent=11 // pred_check
        %p289 = pneg %p173
      $region30: #{up_blok_forward.1} parent=11 // pred_check_branch
        %291 = sbr.rel (%p289) target = $region32
      $region31: #{up_blok_forward.1} parent=11 // pred_region
        _
      $region32: #{up_blok_forward.1} parent=11 // pred_fallthru
        _
      // Predicated region
      $region33: #{up_blok_forward.1} parent=11 // pred_check
        %p292 = pneg %p194
      $region34: #{up_blok_forward.1} parent=11 // pred_check_branch
        %294 = sbr.rel (%p292) target = $region36
      $region35: #{up_blok_forward.1} parent=11 // pred_region
        _
      $region36: #{up_blok_forward.1} parent=11 // pred_fallthru
        _
      // Predicated region
      $region37: #{up_blok_forward.1} parent=11 // pred_check
        %p295 = pneg %p215
      $region38: #{up_blok_forward.1} parent=11 // pred_check_branch
        %297 = sbr.rel (%p295) target = $region40
      $region39: #{up_blok_forward.1} parent=11 // pred_region
        _
      $region40: #{up_blok_forward.1} parent=11 // pred_fallthru
        _
      // Predicated region
      $region41: #{up_blok_forward.1} parent=11 // pred_check
        %p298 = pneg %p236
      $region42: #{up_blok_forward.1} parent=11 // pred_check_branch
        %300 = sbr.rel (%p298) target = $region44
      $region43: #{up_blok_forward.1} parent=11 // pred_region
        _
      $region44: #{up_blok_forward.1} parent=11 // pred_fallthru
        _
    $region12: #{up_blok_forward.1} parent=5 // pred_fallthru
      _
    %p301 = scmp.lt.s32.totalorder %s16, 2
    // Predicated region
    $region45: #{up_blok_forward.1} parent=5 // pred_check
      %p302 = pneg %p301
    $region46: #{up_blok_forward.1} parent=5 // pred_check_branch
      %304 = sbr.rel (%p302) target = $region48
    $region47: #{up_blok_forward.1} parent=5 // pred_region
      // Predicated region
      $region49: #{up_blok_forward.1} parent=47 // pred_check
        %p305 = pneg %p36
      $region50: #{up_blok_forward.1} parent=47 // pred_check_branch
        %307 = sbr.rel (%p305) target = $region52
      $region51: #{up_blok_forward.1} parent=47 // pred_region
        %p308 = scmp.lt.s32.totalorder %s16, 1
        %s309 = scalar_select %p308, %s16, 1
        %s310 = smul.addr %s309, 4
        %s311 = smul.addr %s310, 4
        %s312 = scalar_lea.vmem %s0, %s311
      $region52: #{up_blok_forward.1} parent=47 // pred_fallthru
        _
      // Predicated region
      $region53: #{up_blok_forward.1} parent=47 // pred_check
        %p313 = pneg %p62
      $region54: #{up_blok_forward.1} parent=47 // pred_check_branch
        %315 = sbr.rel (%p313) target = $region56
      $region55: #{up_blok_forward.1} parent=47 // pred_region
        %p316 = scmp.lt.s32.totalorder %s16, 1
        %s317 = scalar_select %p316, %s16, 1
        %s318 = smul.addr %s317, 4
        %s319 = smul.addr %s318, 4
        %s320 = scalar_lea.vmem %s1, %s319
      $region56: #{up_blok_forward.1} parent=47 // pred_fallthru
        _
    $region48: #{up_blok_forward.1} parent=5 // pred_fallthru
      _
    %p321 = scmp.le.s32.totalorder 1, %s16
    %p322 = scmp.lt.s32.totalorder %s16, 3
    %p323 = pnand %p321, %p322
    %p324 = pneg %p323
    // Predicated region
    $region57: #{up_blok_forward.1} parent=5 // pred_check
      _
    $region58: #{up_blok_forward.1} parent=5 // pred_check_branch
      %326 = sbr.rel (%p323) target = $region60
    $region59: #{up_blok_forward.1} parent=5 // pred_region
      %s327 = ssub.s32 %s16, 1
      %p328 = scmp.lt.s32.totalorder %s21, 1
      %s329 = scalar_select %p328, %s21, 1
      %s330 = smul.addr %s329, 4
      %s331 = smul.addr %s330, 4
      %s332 = scalar_lea.vmem %s0, %s331
      %p333 = pneg %p42
      %p334 = pneg %p39
      %p335 = scmp.lt.s32.totalorder %s21, 1
      %s336 = scalar_select %p335, %s21, 1
      %s337 = smul.addr %s336, 4
      %s338 = smul.addr %s337, 4
      %s339 = scalar_lea.vmem %s1, %s338
      %p340 = pneg %p68
      %p341 = pneg %p65
      %p342 = pneg %p89
      %p343 = pneg %p86
      %p344 = pneg %p110
      %p345 = pneg %p107
      %p346 = pneg %p131
      %p347 = pneg %p128
      %p348 = pneg %p152
      %p349 = pneg %p149
      %p350 = pneg %p173
      %p351 = pneg %p170
      %p352 = pneg %p194
      %p353 = pneg %p191
      %p354 = pneg %p215
      %p355 = pneg %p212
      %p356 = pneg %p236
      %p357 = pneg %p233
      %p358 = pneg %p262
      %p359 = pneg %p259
      %p360 = scmp.lt.s32.totalorder %s21, 1
      %s361 = scalar_select %p360, %s21, 1
      %s362 = smul.addr %s361, 12
      %s363 = smul.addr %s362, 4
      %s364 = scalar_lea.vmem %s10, %s363
      %p365 = scmp.lt.s32.totalorder %s21, 1
      %s366 = scalar_select %p365, %s21, 1
      %s367 = smul.addr %s366, 4
      %s368 = smul.addr %s367, 4
      %s369 = scalar_lea.vmem %s0, %s368
      %p370 = scmp.lt.s32.totalorder %s21, 1
      %s371 = scalar_select %p370, %s21, 1
      %s372 = smul.addr %s371, 4
      %s373 = smul.addr %s372, 4
      %s374 = scalar_lea.vmem %s1, %s373
      %p375 = scmp.lt.s32.totalorder %s21, 1
      %s376 = scalar_select %p375, %s21, 1
      %s377 = smul.addr %s376, 12
      %s378 = smul.addr %s377, 4
      %s379 = scalar_lea.vmem %s10, %s378
      %v380 = vld [vmem:[%s2] sm:$0xff]
      %v381 = vld [vmem:[%s369] sm:$0xff]
      %v382 = vld [vmem:[%s369 + $0x8] sm:$0xff]
      %v383 = vld [vmem:[%s3] sm:$0xff]
      %v384 = vld [vmem:[%s374] sm:$0xff]
      %v385 = vld [vmem:[%s374 + $0x8] sm:$0xff]
      %388 = vst [vmem:[#allocation1] ss:$2 sm:$0xff] %v384
      %s389 = scalar_lea.vmem [#allocation1], 16
      %390 = vst [vmem:[%s389] ss:$2 sm:$0xff] %v385
      %v391 = vld.sshfl [vmem:[#allocation1] sm:$0xff pattern:$0x75316420]
      %v392 = vld.sshfl [vmem:[#allocation1 + $0x8] sm:$0xff pattern:$0x75316420]
      %v393 = vld.sshfl [vmem:[#allocation1 + $0x10] sm:$0xff pattern:$0x75316420]
      %v394 = vld.sshfl [vmem:[#allocation1 + $0x18] sm:$0xff pattern:$0x75316420]
      %vm395 = vcmask 31744
      %v397 = vsel %vm395, %v383, 0
      %vm399 = vcmask 1043456
      %v400 = vsel %vm399, %v391, 0
      %v402 = vsel %vm399, %v392, 0
      %v404 = vsel %vm399, %v393, 0
      %v406 = vsel %vm399, %v394, 0
      %408 = vmatpush.msra.mxu0 0.0
      %409 = vmatpush.msra.mxu0 0.0
      %410 = vmatpush.msra.mxu0 0.0
      %411 = vmatpush.msra.mxu0 0.0
      %412 = vmatpush.msra.mxu0 0.0
      %413 = vmatpush.msra.mxu0 0.0
      %414 = vmatpush.msra.mxu0 0.0
      %415 = vmatpush.msra.mxu0 0.0
      %416 = vmatpush.msra.mxu0 0.0
      %417 = vmatpush.msra.mxu0 0.0
      %418 = vmatpush.msra.mxu0 0.0
      %419 = vmatpush.msra.mxu0 0.0
      %420 = vmatpush.msra.mxu0 0.0
      %421 = vmatpush.msra.mxu0 0.0
      %422 = vmatpush.msra.mxu0 0.0
      %423 = vmatpush.msra.mxu0 %v400
      %424 = vmatmul.f32.gmra.mxu0 %v397
      %v425 = vpop.f32.mrf.mxu0
      %v426 = vadd.f32 0.0, %v425
      %427 = vdwg.mxu0
      %428 = vmatpush.msra.mxu0 0.0
      %429 = vmatpush.msra.mxu0 0.0
      %430 = vmatpush.msra.mxu0 0.0
      %431 = vmatpush.msra.mxu0 0.0
      %432 = vmatpush.msra.mxu0 0.0
      %433 = vmatpush.msra.mxu0 0.0
      %434 = vmatpush.msra.mxu0 0.0
      %435 = vmatpush.msra.mxu0 0.0
      %436 = vmatpush.msra.mxu0 0.0
      %437 = vmatpush.msra.mxu0 0.0
      %438 = vmatpush.msra.mxu0 0.0
      %439 = vmatpush.msra.mxu0 0.0
      %440 = vmatpush.msra.mxu0 0.0
      %441 = vmatpush.msra.mxu0 0.0
      %442 = vmatpush.msra.mxu0 0.0
      %443 = vmatpush.msra.mxu0 %v402
      %444 = vmatmul.f32.gmra.mxu0 %v397
      %v445 = vpop.f32.mrf.mxu0
      %v446 = vadd.f32 0.0, %v445
      %447 = vdwg.mxu0
      %448 = vmatpush.msra.mxu0 0.0
      %449 = vmatpush.msra.mxu0 0.0
      %450 = vmatpush.msra.mxu0 0.0
      %451 = vmatpush.msra.mxu0 0.0
      %452 = vmatpush.msra.mxu0 0.0
      %453 = vmatpush.msra.mxu0 0.0
      %454 = vmatpush.msra.mxu0 0.0
      %455 = vmatpush.msra.mxu0 0.0
      %456 = vmatpush.msra.mxu0 0.0
      %457 = vmatpush.msra.mxu0 0.0
      %458 = vmatpush.msra.mxu0 0.0
      %459 = vmatpush.msra.mxu0 0.0
      %460 = vmatpush.msra.mxu0 0.0
      %461 = vmatpush.msra.mxu0 0.0
      %462 = vmatpush.msra.mxu0 0.0
      %463 = vmatpush.msra.mxu0 %v404
      %464 = vmatmul.f32.gmra.mxu0 %v397
      %v465 = vpop.f32.mrf.mxu0
      %v466 = vadd.f32 0.0, %v465
      %467 = vdwg.mxu0
      %468 = vmatpush.msra.mxu0 0.0
      %469 = vmatpush.msra.mxu0 0.0
      %470 = vmatpush.msra.mxu0 0.0
      %471 = vmatpush.msra.mxu0 0.0
      %472 = vmatpush.msra.mxu0 0.0
      %473 = vmatpush.msra.mxu0 0.0
      %474 = vmatpush.msra.mxu0 0.0
      %475 = vmatpush.msra.mxu0 0.0
      %476 = vmatpush.msra.mxu0 0.0
      %477 = vmatpush.msra.mxu0 0.0
      %478 = vmatpush.msra.mxu0 0.0
      %479 = vmatpush.msra.mxu0 0.0
      %480 = vmatpush.msra.mxu0 0.0
      %481 = vmatpush.msra.mxu0 0.0
      %482 = vmatpush.msra.mxu0 0.0
      %483 = vmatpush.msra.mxu0 %v406
      %484 = vmatmul.f32.gmra.mxu0 %v397
      %v485 = vpop.f32.mrf.mxu0
      %v486 = vadd.f32 0.0, %v485
      %487 = vdwg.mxu0
      %490 = vst [vmem:[#allocation1] ss:$2 sm:$0xff] %v381
      %s491 = scalar_lea.vmem [#allocation1], 16
      %492 = vst [vmem:[%s491] ss:$2 sm:$0xff] %v382
      %v493 = vld.sshfl [vmem:[#allocation1] sm:$0xff pattern:$0x75316420]
      %v494 = vld.sshfl [vmem:[#allocation1 + $0x8] sm:$0xff pattern:$0x75316420]
      %v495 = vld.sshfl [vmem:[#allocation1 + $0x10] sm:$0xff pattern:$0x75316420]
      %v496 = vld.sshfl [vmem:[#allocation1 + $0x18] sm:$0xff pattern:$0x75316420]
      %v498 = vsel %vm395, %v380, 0
      %v500 = vsel %vm399, %v493, 0
      %v502 = vsel %vm399, %v494, 0
      %v504 = vsel %vm399, %v495, 0
      %v506 = vsel %vm399, %v496, 0
      %508 = vmatpush.msra.mxu0 0.0
      %509 = vmatpush.msra.mxu0 0.0
      %510 = vmatpush.msra.mxu0 0.0
      %511 = vmatpush.msra.mxu0 0.0
      %512 = vmatpush.msra.mxu0 0.0
      %513 = vmatpush.msra.mxu0 0.0
      %514 = vmatpush.msra.mxu0 0.0
      %515 = vmatpush.msra.mxu0 0.0
      %516 = vmatpush.msra.mxu0 0.0
      %517 = vmatpush.msra.mxu0 0.0
      %518 = vmatpush.msra.mxu0 0.0
      %519 = vmatpush.msra.mxu0 0.0
      %520 = vmatpush.msra.mxu0 0.0
      %521 = vmatpush.msra.mxu0 0.0
      %522 = vmatpush.msra.mxu0 0.0
      %523 = vmatpush.msra.mxu0 %v500
      %524 = vmatmul.f32.gmra.mxu0 %v498
      %v525 = vpop.f32.mrf.mxu0
      %v526 = vadd.f32 %v426, %v525
      %527 = vdwg.mxu0
      %528 = vmatpush.msra.mxu0 0.0
      %529 = vmatpush.msra.mxu0 0.0
      %530 = vmatpush.msra.mxu0 0.0
      %531 = vmatpush.msra.mxu0 0.0
      %532 = vmatpush.msra.mxu0 0.0
      %533 = vmatpush.msra.mxu0 0.0
      %534 = vmatpush.msra.mxu0 0.0
      %535 = vmatpush.msra.mxu0 0.0
      %536 = vmatpush.msra.mxu0 0.0
      %537 = vmatpush.msra.mxu0 0.0
      %538 = vmatpush.msra.mxu0 0.0
      %539 = vmatpush.msra.mxu0 0.0
      %540 = vmatpush.msra.mxu0 0.0
      %541 = vmatpush.msra.mxu0 0.0
      %542 = vmatpush.msra.mxu0 0.0
      %543 = vmatpush.msra.mxu0 %v502
      %544 = vmatmul.f32.gmra.mxu0 %v498
      %v545 = vpop.f32.mrf.mxu0
      %v546 = vadd.f32 %v446, %v545
      %547 = vdwg.mxu0
      %548 = vmatpush.msra.mxu0 0.0
      %549 = vmatpush.msra.mxu0 0.0
      %550 = vmatpush.msra.mxu0 0.0
      %551 = vmatpush.msra.mxu0 0.0
      %552 = vmatpush.msra.mxu0 0.0
      %553 = vmatpush.msra.mxu0 0.0
      %554 = vmatpush.msra.mxu0 0.0
      %555 = vmatpush.msra.mxu0 0.0
      %556 = vmatpush.msra.mxu0 0.0
      %557 = vmatpush.msra.mxu0 0.0
      %558 = vmatpush.msra.mxu0 0.0
      %559 = vmatpush.msra.mxu0 0.0
      %560 = vmatpush.msra.mxu0 0.0
      %561 = vmatpush.msra.mxu0 0.0
      %562 = vmatpush.msra.mxu0 0.0
      %563 = vmatpush.msra.mxu0 %v504
      %564 = vmatmul.f32.gmra.mxu0 %v498
      %v565 = vpop.f32.mrf.mxu0
      %v566 = vadd.f32 %v466, %v565
      %567 = vdwg.mxu0
      %568 = vmatpush.msra.mxu0 0.0
      %569 = vmatpush.msra.mxu0 0.0
      %570 = vmatpush.msra.mxu0 0.0
      %571 = vmatpush.msra.mxu0 0.0
      %572 = vmatpush.msra.mxu0 0.0
      %573 = vmatpush.msra.mxu0 0.0
      %574 = vmatpush.msra.mxu0 0.0
      %575 = vmatpush.msra.mxu0 0.0
      %576 = vmatpush.msra.mxu0 0.0
      %577 = vmatpush.msra.mxu0 0.0
      %578 = vmatpush.msra.mxu0 0.0
      %579 = vmatpush.msra.mxu0 0.0
      %580 = vmatpush.msra.mxu0 0.0
      %581 = vmatpush.msra.mxu0 0.0
      %582 = vmatpush.msra.mxu0 0.0
      %583 = vmatpush.msra.mxu0 %v506
      %584 = vmatmul.f32.gmra.mxu0 %v498
      %v585 = vpop.f32.mrf.mxu0
      %v586 = vadd.f32 %v486, %v585
      %587 = vdwg.mxu0
      %v588 = vld [vmem:[%s4] sm:$0xff]
      %590 = vset.pattern.permute.xlu0 0
      %591 = vperm.xlu0 %590, %v588
      %v592 = vpop.permute.xlu0 %591
      %v594 = vadd.f32 %v526, %v592
      %v595 = vadd.f32 %v546, %v592
      %v596 = vadd.f32 %v566, %v592
      %v597 = vadd.f32 %v586, %v592
      %v598 = vmax.f32 %v594, 0.0
      %v599 = vmax.f32 %v595, 0.0
      %v600 = vmax.f32 %v596, 0.0
      %v601 = vmax.f32 %v597, 0.0
      %v602 = vld [vmem:[%s9] sm:$0xf]
      %v604 = vperm.slane %v602, 0
      %v605 = vperm.slane %v602, 1
      %v606 = vperm.slane %v602, 2
      %v607 = vperm.slane %v602, 3
      %v612 = vmul.f32 %v598, %v604
      %v613 = vmul.f32 %v599, %v605
      %v614 = vmul.f32 %v600, %v606
      %v615 = vmul.f32 %v601, %v607
      %616 = vst [vmem:[#allocation2] sm:$0xff] %v612
      %617 = vst [vmem:[#allocation2 + $0x8] sm:$0xff] %v613
      %618 = vst [vmem:[#allocation2 + $0x10] sm:$0xff] %v614
      %vm619 = vcmask 130048
      %620 = vst.msk [vmem:[#allocation2 + $0x18] sm:$0xff] %vm619, %v615
      %v621 = vld [vmem:[%s5] sm:$0xf]
      %v622 = vld [vmem:[#allocation2] sm:$0xff]
      %v623 = vld [vmem:[#allocation2 + $0x8] sm:$0xff]
      %v624 = vld [vmem:[#allocation2 + $0x10] sm:$0xff]
      %s625 = scalar_lea.vmem %s5, 4
      %v626 = vld [vmem:[%s625] sm:$0xf]
      %630 = vrot.lane.b32.xlu0 %v622, 108
      %v631 = vpop.permute.xlu0 %630
      %632 = vrot.lane.b32.xlu0 %v623, 108
      %v633 = vpop.permute.xlu0 %632
      %634 = vrot.lane.b32.xlu0 %v624, 108
      %v635 = vpop.permute.xlu0 %634
      %vm636 = vcmask 883712
      %v637 = vsel %vm636, %v631, %v633
      %v638 = vsel %vm636, %v633, %v635
      %vm642 = vcmask 64512
      %v644 = vsel %vm642, %v626, 0
      %646 = vmatpush.msra.mxu0 0.0
      %647 = vmatpush.msra.mxu0 0.0
      %648 = vmatpush.msra.mxu0 0.0
      %649 = vmatpush.msra.mxu0 0.0
      %650 = vmatpush.msra.mxu0 0.0
      %651 = vmatpush.msra.mxu0 0.0
      %652 = vmatpush.msra.mxu0 0.0
      %653 = vmatpush.msra.mxu0 0.0
      %654 = vmatpush.msra.mxu0 0.0
      %655 = vmatpush.msra.mxu0 0.0
      %656 = vmatpush.msra.mxu0 0.0
      %657 = vmatpush.msra.mxu0 0.0
      %658 = vmatpush.msra.mxu0 0.0
      %659 = vmatpush.msra.mxu0 0.0
      %660 = vmatpush.msra.mxu0 0.0
      %661 = vmatpush.msra.mxu0 %v637
      %662 = vmatmul.f32.gmra.mxu0 %v644
      %v663 = vpop.f32.mrf.mxu0
      %v664 = vadd.f32 0.0, %v663
      %665 = vdwg.mxu0
      %666 = vmatpush.msra.mxu0 0.0
      %667 = vmatpush.msra.mxu0 0.0
      %668 = vmatpush.msra.mxu0 0.0
      %669 = vmatpush.msra.mxu0 0.0
      %670 = vmatpush.msra.mxu0 0.0
      %671 = vmatpush.msra.mxu0 0.0
      %672 = vmatpush.msra.mxu0 0.0
      %673 = vmatpush.msra.mxu0 0.0
      %674 = vmatpush.msra.mxu0 0.0
      %675 = vmatpush.msra.mxu0 0.0
      %676 = vmatpush.msra.mxu0 0.0
      %677 = vmatpush.msra.mxu0 0.0
      %678 = vmatpush.msra.mxu0 0.0
      %679 = vmatpush.msra.mxu0 0.0
      %680 = vmatpush.msra.mxu0 0.0
      %681 = vmatpush.msra.mxu0 %v638
      %682 = vmatmul.f32.gmra.mxu0 %v644
      %v683 = vpop.f32.mrf.mxu0
      %v684 = vadd.f32 0.0, %v683
      %685 = vdwg.mxu0
      %686 = vmatpush.msra.mxu0 0.0
      %687 = vmatpush.msra.mxu0 0.0
      %688 = vmatpush.msra.mxu0 0.0
      %689 = vmatpush.msra.mxu0 0.0
      %690 = vmatpush.msra.mxu0 0.0
      %691 = vmatpush.msra.mxu0 0.0
      %692 = vmatpush.msra.mxu0 0.0
      %693 = vmatpush.msra.mxu0 0.0
      %694 = vmatpush.msra.mxu0 0.0
      %695 = vmatpush.msra.mxu0 0.0
      %696 = vmatpush.msra.mxu0 0.0
      %697 = vmatpush.msra.mxu0 0.0
      %698 = vmatpush.msra.mxu0 0.0
      %699 = vmatpush.msra.mxu0 0.0
      %700 = vmatpush.msra.mxu0 0.0
      %701 = vmatpush.msra.mxu0 %v635
      %702 = vmatmul.f32.gmra.mxu0 %v644
      %v703 = vpop.f32.mrf.mxu0
      %v704 = vadd.f32 0.0, %v703
      %705 = vdwg.mxu0
      %706 = vrot.lane.b32.xlu0 %v622, 109
      %v707 = vpop.permute.xlu0 %706
      %708 = vrot.lane.b32.xlu0 %v623, 109
      %v709 = vpop.permute.xlu0 %708
      %710 = vrot.lane.b32.xlu0 %v624, 109
      %v711 = vpop.permute.xlu0 %710
      %vm712 = vcmask 891904
      %v713 = vsel %vm712, %v707, %v709
      %v714 = vsel %vm712, %v709, %v711
      %v719 = vsel %vm642, %v621, 0
      %721 = vmatpush.msra.mxu0 0.0
      %722 = vmatpush.msra.mxu0 0.0
      %723 = vmatpush.msra.mxu0 0.0
      %724 = vmatpush.msra.mxu0 0.0
      %725 = vmatpush.msra.mxu0 0.0
      %726 = vmatpush.msra.mxu0 0.0
      %727 = vmatpush.msra.mxu0 0.0
      %728 = vmatpush.msra.mxu0 0.0
      %729 = vmatpush.msra.mxu0 0.0
      %730 = vmatpush.msra.mxu0 0.0
      %731 = vmatpush.msra.mxu0 0.0
      %732 = vmatpush.msra.mxu0 0.0
      %733 = vmatpush.msra.mxu0 0.0
      %734 = vmatpush.msra.mxu0 0.0
      %735 = vmatpush.msra.mxu0 0.0
      %736 = vmatpush.msra.mxu0 %v713
      %737 = vmatmul.f32.gmra.mxu0 %v719
      %v738 = vpop.f32.mrf.mxu0
      %v739 = vadd.f32 %v664, %v738
      %740 = vdwg.mxu0
      %741 = vmatpush.msra.mxu0 0.0
      %742 = vmatpush.msra.mxu0 0.0
      %743 = vmatpush.msra.mxu0 0.0
      %744 = vmatpush.msra.mxu0 0.0
      %745 = vmatpush.msra.mxu0 0.0
      %746 = vmatpush.msra.mxu0 0.0
      %747 = vmatpush.msra.mxu0 0.0
      %748 = vmatpush.msra.mxu0 0.0
      %749 = vmatpush.msra.mxu0 0.0
      %750 = vmatpush.msra.mxu0 0.0
      %751 = vmatpush.msra.mxu0 0.0
      %752 = vmatpush.msra.mxu0 0.0
      %753 = vmatpush.msra.mxu0 0.0
      %754 = vmatpush.msra.mxu0 0.0
      %755 = vmatpush.msra.mxu0 0.0
      %756 = vmatpush.msra.mxu0 %v714
      %757 = vmatmul.f32.gmra.mxu0 %v719
      %v758 = vpop.f32.mrf.mxu0
      %v759 = vadd.f32 %v684, %v758
      %760 = vdwg.mxu0
      %761 = vmatpush.msra.mxu0 0.0
      %762 = vmatpush.msra.mxu0 0.0
      %763 = vmatpush.msra.mxu0 0.0
      %764 = vmatpush.msra.mxu0 0.0
      %765 = vmatpush.msra.mxu0 0.0
      %766 = vmatpush.msra.mxu0 0.0
      %767 = vmatpush.msra.mxu0 0.0
      %768 = vmatpush.msra.mxu0 0.0
      %769 = vmatpush.msra.mxu0 0.0
      %770 = vmatpush.msra.mxu0 0.0
      %771 = vmatpush.msra.mxu0 0.0
      %772 = vmatpush.msra.mxu0 0.0
      %773 = vmatpush.msra.mxu0 0.0
      %774 = vmatpush.msra.mxu0 0.0
      %775 = vmatpush.msra.mxu0 0.0
      %776 = vmatpush.msra.mxu0 %v711
      %777 = vmatmul.f32.gmra.mxu0 %v719
      %v778 = vpop.f32.mrf.mxu0
      %v779 = vadd.f32 %v704, %v778
      %780 = vdwg.mxu0
      %s781 = scalar_lea.vmem %s5, 8
      %v782 = vld [vmem:[%s781] sm:$0xf]
      %783 = vrot.lane.b32.xlu0 %v622, 107
      %v784 = vpop.permute.xlu0 %783
      %785 = vrot.lane.b32.xlu0 %v623, 107
      %v786 = vpop.permute.xlu0 %785
      %787 = vrot.lane.b32.xlu0 %v624, 107
      %v788 = vpop.permute.xlu0 %787
      %vm789 = vcmask 875520
      %v790 = vsel %vm789, %v784, %v786
      %v791 = vsel %vm789, %v786, %v788
      %v796 = vsel %vm642, %v782, 0
      %798 = vmatpush.msra.mxu0 0.0
      %799 = vmatpush.msra.mxu0 0.0
      %800 = vmatpush.msra.mxu0 0.0
      %801 = vmatpush.msra.mxu0 0.0
      %802 = vmatpush.msra.mxu0 0.0
      %803 = vmatpush.msra.mxu0 0.0
      %804 = vmatpush.msra.mxu0 0.0
      %805 = vmatpush.msra.mxu0 0.0
      %806 = vmatpush.msra.mxu0 0.0
      %807 = vmatpush.msra.mxu0 0.0
      %808 = vmatpush.msra.mxu0 0.0
      %809 = vmatpush.msra.mxu0 0.0
      %810 = vmatpush.msra.mxu0 0.0
      %811 = vmatpush.msra.mxu0 0.0
      %812 = vmatpush.msra.mxu0 0.0
      %813 = vmatpush.msra.mxu0 %v790
      %814 = vmatmul.f32.gmra.mxu0 %v796
      %v815 = vpop.f32.mrf.mxu0
      %v816 = vadd.f32 0.0, %v815
      %817 = vdwg.mxu0
      %818 = vmatpush.msra.mxu0 0.0
      %819 = vmatpush.msra.mxu0 0.0
      %820 = vmatpush.msra.mxu0 0.0
      %821 = vmatpush.msra.mxu0 0.0
      %822 = vmatpush.msra.mxu0 0.0
      %823 = vmatpush.msra.mxu0 0.0
      %824 = vmatpush.msra.mxu0 0.0
      %825 = vmatpush.msra.mxu0 0.0
      %826 = vmatpush.msra.mxu0 0.0
      %827 = vmatpush.msra.mxu0 0.0
      %828 = vmatpush.msra.mxu0 0.0
      %829 = vmatpush.msra.mxu0 0.0
      %830 = vmatpush.msra.mxu0 0.0
      %831 = vmatpush.msra.mxu0 0.0
      %832 = vmatpush.msra.mxu0 0.0
      %833 = vmatpush.msra.mxu0 %v791
      %834 = vmatmul.f32.gmra.mxu0 %v796
      %v835 = vpop.f32.mrf.mxu0
      %v836 = vadd.f32 0.0, %v835
      %837 = vdwg.mxu0
      %838 = vmatpush.msra.mxu0 0.0
      %839 = vmatpush.msra.mxu0 0.0
      %840 = vmatpush.msra.mxu0 0.0
      %841 = vmatpush.msra.mxu0 0.0
      %842 = vmatpush.msra.mxu0 0.0
      %843 = vmatpush.msra.mxu0 0.0
      %844 = vmatpush.msra.mxu0 0.0
      %845 = vmatpush.msra.mxu0 0.0
      %846 = vmatpush.msra.mxu0 0.0
      %847 = vmatpush.msra.mxu0 0.0
      %848 = vmatpush.msra.mxu0 0.0
      %849 = vmatpush.msra.mxu0 0.0
      %850 = vmatpush.msra.mxu0 0.0
      %851 = vmatpush.msra.mxu0 0.0
      %852 = vmatpush.msra.mxu0 0.0
      %853 = vmatpush.msra.mxu0 %v788
      %854 = vmatmul.f32.gmra.mxu0 %v796
      %v855 = vpop.f32.mrf.mxu0
      %v856 = vadd.f32 0.0, %v855
      %857 = vdwg.mxu0
      %v858 = vadd.f32 %v739, %v816
      %v859 = vadd.f32 %v759, %v836
      %v860 = vadd.f32 %v779, %v856
      %s861 = scalar_lea.vmem %s5, 12
      %v862 = vld [vmem:[%s861] sm:$0xf]
      %863 = vrot.lane.b32.xlu0 %v622, 89
      %v864 = vpop.permute.xlu0 %863
      %865 = vrot.lane.b32.xlu0 %v623, 89
      %v866 = vpop.permute.xlu0 %865
      %867 = vrot.lane.b32.xlu0 %v624, 89
      %v868 = vpop.permute.xlu0 %867
      %vm869 = vcmask 728064
      %v870 = vsel %vm869, %v864, %v866
      %v871 = vsel %vm869, %v866, %v868
      %v876 = vsel %vm642, %v862, 0
      %878 = vmatpush.msra.mxu0 0.0
      %879 = vmatpush.msra.mxu0 0.0
      %880 = vmatpush.msra.mxu0 0.0
      %881 = vmatpush.msra.mxu0 0.0
      %882 = vmatpush.msra.mxu0 0.0
      %883 = vmatpush.msra.mxu0 0.0
      %884 = vmatpush.msra.mxu0 0.0
      %885 = vmatpush.msra.mxu0 0.0
      %886 = vmatpush.msra.mxu0 0.0
      %887 = vmatpush.msra.mxu0 0.0
      %888 = vmatpush.msra.mxu0 0.0
      %889 = vmatpush.msra.mxu0 0.0
      %890 = vmatpush.msra.mxu0 0.0
      %891 = vmatpush.msra.mxu0 0.0
      %892 = vmatpush.msra.mxu0 0.0
      %893 = vmatpush.msra.mxu0 %v870
      %894 = vmatmul.f32.gmra.mxu0 %v876
      %v895 = vpop.f32.mrf.mxu0
      %v896 = vadd.f32 0.0, %v895
      %897 = vdwg.mxu0
      %898 = vmatpush.msra.mxu0 0.0
      %899 = vmatpush.msra.mxu0 0.0
      %900 = vmatpush.msra.mxu0 0.0
      %901 = vmatpush.msra.mxu0 0.0
      %902 = vmatpush.msra.mxu0 0.0
      %903 = vmatpush.msra.mxu0 0.0
      %904 = vmatpush.msra.mxu0 0.0
      %905 = vmatpush.msra.mxu0 0.0
      %906 = vmatpush.msra.mxu0 0.0
      %907 = vmatpush.msra.mxu0 0.0
      %908 = vmatpush.msra.mxu0 0.0
      %909 = vmatpush.msra.mxu0 0.0
      %910 = vmatpush.msra.mxu0 0.0
      %911 = vmatpush.msra.mxu0 0.0
      %912 = vmatpush.msra.mxu0 0.0
      %913 = vmatpush.msra.mxu0 %v871
      %914 = vmatmul.f32.gmra.mxu0 %v876
      %v915 = vpop.f32.mrf.mxu0
      %v916 = vadd.f32 0.0, %v915
      %917 = vdwg.mxu0
      %918 = vmatpush.msra.mxu0 0.0
      %919 = vmatpush.msra.mxu0 0.0
      %920 = vmatpush.msra.mxu0 0.0
      %921 = vmatpush.msra.mxu0 0.0
      %922 = vmatpush.msra.mxu0 0.0
      %923 = vmatpush.msra.mxu0 0.0
      %924 = vmatpush.msra.mxu0 0.0
      %925 = vmatpush.msra.mxu0 0.0
      %926 = vmatpush.msra.mxu0 0.0
      %927 = vmatpush.msra.mxu0 0.0
      %928 = vmatpush.msra.mxu0 0.0
      %929 = vmatpush.msra.mxu0 0.0
      %930 = vmatpush.msra.mxu0 0.0
      %931 = vmatpush.msra.mxu0 0.0
      %932 = vmatpush.msra.mxu0 0.0
      %933 = vmatpush.msra.mxu0 %v868
      %934 = vmatmul.f32.gmra.mxu0 %v876
      %v935 = vpop.f32.mrf.mxu0
      %v936 = vadd.f32 0.0, %v935
      %937 = vdwg.mxu0
      %v938 = vadd.f32 %v858, %v896
      %v939 = vadd.f32 %v859, %v916
      %v940 = vadd.f32 %v860, %v936
      %s941 = scalar_lea.vmem %s5, 16
      %v942 = vld [vmem:[%s941] sm:$0xf]
      %943 = vrot.lane.b32.xlu0 %v622, 88
      %v944 = vpop.permute.xlu0 %943
      %945 = vrot.lane.b32.xlu0 %v623, 88
      %v946 = vpop.permute.xlu0 %945
      %947 = vrot.lane.b32.xlu0 %v624, 88
      %v948 = vpop.permute.xlu0 %947
      %vm949 = vcmask 719872
      %v950 = vsel %vm949, %v944, %v946
      %v951 = vsel %vm949, %v946, %v948
      %v956 = vsel %vm642, %v942, 0
      %958 = vmatpush.msra.mxu0 0.0
      %959 = vmatpush.msra.mxu0 0.0
      %960 = vmatpush.msra.mxu0 0.0
      %961 = vmatpush.msra.mxu0 0.0
      %962 = vmatpush.msra.mxu0 0.0
      %963 = vmatpush.msra.mxu0 0.0
      %964 = vmatpush.msra.mxu0 0.0
      %965 = vmatpush.msra.mxu0 0.0
      %966 = vmatpush.msra.mxu0 0.0
      %967 = vmatpush.msra.mxu0 0.0
      %968 = vmatpush.msra.mxu0 0.0
      %969 = vmatpush.msra.mxu0 0.0
      %970 = vmatpush.msra.mxu0 0.0
      %971 = vmatpush.msra.mxu0 0.0
      %972 = vmatpush.msra.mxu0 0.0
      %973 = vmatpush.msra.mxu0 %v950
      %974 = vmatmul.f32.gmra.mxu0 %v956
      %v975 = vpop.f32.mrf.mxu0
      %v976 = vadd.f32 0.0, %v975
      %977 = vdwg.mxu0
      %978 = vmatpush.msra.mxu0 0.0
      %979 = vmatpush.msra.mxu0 0.0
      %980 = vmatpush.msra.mxu0 0.0
      %981 = vmatpush.msra.mxu0 0.0
      %982 = vmatpush.msra.mxu0 0.0
      %983 = vmatpush.msra.mxu0 0.0
      %984 = vmatpush.msra.mxu0 0.0
      %985 = vmatpush.msra.mxu0 0.0
      %986 = vmatpush.msra.mxu0 0.0
      %987 = vmatpush.msra.mxu0 0.0
      %988 = vmatpush.msra.mxu0 0.0
      %989 = vmatpush.msra.mxu0 0.0
      %990 = vmatpush.msra.mxu0 0.0
      %991 = vmatpush.msra.mxu0 0.0
      %992 = vmatpush.msra.mxu0 0.0
      %993 = vmatpush.msra.mxu0 %v951
      %994 = vmatmul.f32.gmra.mxu0 %v956
      %v995 = vpop.f32.mrf.mxu0
      %v996 = vadd.f32 0.0, %v995
      %997 = vdwg.mxu0
      %998 = vmatpush.msra.mxu0 0.0
      %999 = vmatpush.msra.mxu0 0.0
      %1000 = vmatpush.msra.mxu0 0.0
      %1001 = vmatpush.msra.mxu0 0.0
      %1002 = vmatpush.msra.mxu0 0.0
      %1003 = vmatpush.msra.mxu0 0.0
      %1004 = vmatpush.msra.mxu0 0.0
      %1005 = vmatpush.msra.mxu0 0.0
      %1006 = vmatpush.msra.mxu0 0.0
      %1007 = vmatpush.msra.mxu0 0.0
      %1008 = vmatpush.msra.mxu0 0.0
      %1009 = vmatpush.msra.mxu0 0.0
      %1010 = vmatpush.msra.mxu0 0.0
      %1011 = vmatpush.msra.mxu0 0.0
      %1012 = vmatpush.msra.mxu0 0.0
      %1013 = vmatpush.msra.mxu0 %v948
      %1014 = vmatmul.f32.gmra.mxu0 %v956
      %v1015 = vpop.f32.mrf.mxu0
      %v1016 = vadd.f32 0.0, %v1015
      %1017 = vdwg.mxu0
      %v1018 = vadd.f32 %v938, %v976
      %v1019 = vadd.f32 %v939, %v996
      %v1020 = vadd.f32 %v940, %v1016
      %s1021 = scalar_lea.vmem %s5, 20
      %v1022 = vld [vmem:[%s1021] sm:$0xf]
      %1023 = vrot.lane.b32.xlu0 %v622, 87
      %v1024 = vpop.permute.xlu0 %1023
      %1025 = vrot.lane.b32.xlu0 %v623, 87
      %v1026 = vpop.permute.xlu0 %1025
      %1027 = vrot.lane.b32.xlu0 %v624, 87
      %v1028 = vpop.permute.xlu0 %1027
      %vm1029 = vcmask 711680
      %v1030 = vsel %vm1029, %v1024, %v1026
      %v1031 = vsel %vm1029, %v1026, %v1028
      %v1036 = vsel %vm642, %v1022, 0
      %1038 = vmatpush.msra.mxu0 0.0
      %1039 = vmatpush.msra.mxu0 0.0
      %1040 = vmatpush.msra.mxu0 0.0
      %1041 = vmatpush.msra.mxu0 0.0
      %1042 = vmatpush.msra.mxu0 0.0
      %1043 = vmatpush.msra.mxu0 0.0
      %1044 = vmatpush.msra.mxu0 0.0
      %1045 = vmatpush.msra.mxu0 0.0
      %1046 = vmatpush.msra.mxu0 0.0
      %1047 = vmatpush.msra.mxu0 0.0
      %1048 = vmatpush.msra.mxu0 0.0
      %1049 = vmatpush.msra.mxu0 0.0
      %1050 = vmatpush.msra.mxu0 0.0
      %1051 = vmatpush.msra.mxu0 0.0
      %1052 = vmatpush.msra.mxu0 0.0
      %1053 = vmatpush.msra.mxu0 %v1030
      %1054 = vmatmul.f32.gmra.mxu0 %v1036
      %v1055 = vpop.f32.mrf.mxu0
      %v1056 = vadd.f32 0.0, %v1055
      %1057 = vdwg.mxu0
      %1058 = vmatpush.msra.mxu0 0.0
      %1059 = vmatpush.msra.mxu0 0.0
      %1060 = vmatpush.msra.mxu0 0.0
      %1061 = vmatpush.msra.mxu0 0.0
      %1062 = vmatpush.msra.mxu0 0.0
      %1063 = vmatpush.msra.mxu0 0.0
      %1064 = vmatpush.msra.mxu0 0.0
      %1065 = vmatpush.msra.mxu0 0.0
      %1066 = vmatpush.msra.mxu0 0.0
      %1067 = vmatpush.msra.mxu0 0.0
      %1068 = vmatpush.msra.mxu0 0.0
      %1069 = vmatpush.msra.mxu0 0.0
      %1070 = vmatpush.msra.mxu0 0.0
      %1071 = vmatpush.msra.mxu0 0.0
      %1072 = vmatpush.msra.mxu0 0.0
      %1073 = vmatpush.msra.mxu0 %v1031
      %1074 = vmatmul.f32.gmra.mxu0 %v1036
      %v1075 = vpop.f32.mrf.mxu0
      %v1076 = vadd.f32 0.0, %v1075
      %1077 = vdwg.mxu0
      %1078 = vmatpush.msra.mxu0 0.0
      %1079 = vmatpush.msra.mxu0 0.0
      %1080 = vmatpush.msra.mxu0 0.0
      %1081 = vmatpush.msra.mxu0 0.0
      %1082 = vmatpush.msra.mxu0 0.0
      %1083 = vmatpush.msra.mxu0 0.0
      %1084 = vmatpush.msra.mxu0 0.0
      %1085 = vmatpush.msra.mxu0 0.0
      %1086 = vmatpush.msra.mxu0 0.0
      %1087 = vmatpush.msra.mxu0 0.0
      %1088 = vmatpush.msra.mxu0 0.0
      %1089 = vmatpush.msra.mxu0 0.0
      %1090 = vmatpush.msra.mxu0 0.0
      %1091 = vmatpush.msra.mxu0 0.0
      %1092 = vmatpush.msra.mxu0 0.0
      %1093 = vmatpush.msra.mxu0 %v1028
      %1094 = vmatmul.f32.gmra.mxu0 %v1036
      %v1095 = vpop.f32.mrf.mxu0
      %v1096 = vadd.f32 0.0, %v1095
      %1097 = vdwg.mxu0
      %v1098 = vadd.f32 %v1018, %v1056
      %v1099 = vadd.f32 %v1019, %v1076
      %v1100 = vadd.f32 %v1020, %v1096
      %s1101 = scalar_lea.vmem %s5, 24
      %v1102 = vld [vmem:[%s1101] sm:$0xf]
      %1103 = vrot.lane.b32.xlu0 %v622, 69
      %v1104 = vpop.permute.xlu0 %1103
      %1105 = vrot.lane.b32.xlu0 %v623, 69
      %v1106 = vpop.permute.xlu0 %1105
      %1107 = vrot.lane.b32.xlu0 %v624, 69
      %v1108 = vpop.permute.xlu0 %1107
      %vm1109 = vcmask 564224
      %v1110 = vsel %vm1109, %v1104, %v1106
      %v1111 = vsel %vm1109, %v1106, %v1108
      %v1116 = vsel %vm642, %v1102, 0
      %1118 = vmatpush.msra.mxu0 0.0
      %1119 = vmatpush.msra.mxu0 0.0
      %1120 = vmatpush.msra.mxu0 0.0
      %1121 = vmatpush.msra.mxu0 0.0
      %1122 = vmatpush.msra.mxu0 0.0
      %1123 = vmatpush.msra.mxu0 0.0
      %1124 = vmatpush.msra.mxu0 0.0
      %1125 = vmatpush.msra.mxu0 0.0
      %1126 = vmatpush.msra.mxu0 0.0
      %1127 = vmatpush.msra.mxu0 0.0
      %1128 = vmatpush.msra.mxu0 0.0
      %1129 = vmatpush.msra.mxu0 0.0
      %1130 = vmatpush.msra.mxu0 0.0
      %1131 = vmatpush.msra.mxu0 0.0
      %1132 = vmatpush.msra.mxu0 0.0
      %1133 = vmatpush.msra.mxu0 %v1110
      %1134 = vmatmul.f32.gmra.mxu0 %v1116
      %v1135 = vpop.f32.mrf.mxu0
      %v1136 = vadd.f32 0.0, %v1135
      %1137 = vdwg.mxu0
      %1138 = vmatpush.msra.mxu0 0.0
      %1139 = vmatpush.msra.mxu0 0.0
      %1140 = vmatpush.msra.mxu0 0.0
      %1141 = vmatpush.msra.mxu0 0.0
      %1142 = vmatpush.msra.mxu0 0.0
      %1143 = vmatpush.msra.mxu0 0.0
      %1144 = vmatpush.msra.mxu0 0.0
      %1145 = vmatpush.msra.mxu0 0.0
      %1146 = vmatpush.msra.mxu0 0.0
      %1147 = vmatpush.msra.mxu0 0.0
      %1148 = vmatpush.msra.mxu0 0.0
      %1149 = vmatpush.msra.mxu0 0.0
      %1150 = vmatpush.msra.mxu0 0.0
      %1151 = vmatpush.msra.mxu0 0.0
      %1152 = vmatpush.msra.mxu0 0.0
      %1153 = vmatpush.msra.mxu0 %v1111
      %1154 = vmatmul.f32.gmra.mxu0 %v1116
      %v1155 = vpop.f32.mrf.mxu0
      %v1156 = vadd.f32 0.0, %v1155
      %1157 = vdwg.mxu0
      %1158 = vmatpush.msra.mxu0 0.0
      %1159 = vmatpush.msra.mxu0 0.0
      %1160 = vmatpush.msra.mxu0 0.0
      %1161 = vmatpush.msra.mxu0 0.0
      %1162 = vmatpush.msra.mxu0 0.0
      %1163 = vmatpush.msra.mxu0 0.0
      %1164 = vmatpush.msra.mxu0 0.0
      %1165 = vmatpush.msra.mxu0 0.0
      %1166 = vmatpush.msra.mxu0 0.0
      %1167 = vmatpush.msra.mxu0 0.0
      %1168 = vmatpush.msra.mxu0 0.0
      %1169 = vmatpush.msra.mxu0 0.0
      %1170 = vmatpush.msra.mxu0 0.0
      %1171 = vmatpush.msra.mxu0 0.0
      %1172 = vmatpush.msra.mxu0 0.0
      %1173 = vmatpush.msra.mxu0 %v1108
      %1174 = vmatmul.f32.gmra.mxu0 %v1116
      %v1175 = vpop.f32.mrf.mxu0
      %v1176 = vadd.f32 0.0, %v1175
      %1177 = vdwg.mxu0
      %v1178 = vadd.f32 %v1098, %v1136
      %v1179 = vadd.f32 %v1099, %v1156
      %v1180 = vadd.f32 %v1100, %v1176
      %s1181 = scalar_lea.vmem %s5, 28
      %v1182 = vld [vmem:[%s1181] sm:$0xf]
      %1183 = vrot.lane.b32.xlu0 %v622, 68
      %v1184 = vpop.permute.xlu0 %1183
      %1185 = vrot.lane.b32.xlu0 %v623, 68
      %v1186 = vpop.permute.xlu0 %1185
      %1187 = vrot.lane.b32.xlu0 %v624, 68
      %v1188 = vpop.permute.xlu0 %1187
      %vm1189 = vcmask 556032
      %v1190 = vsel %vm1189, %v1184, %v1186
      %v1191 = vsel %vm1189, %v1186, %v1188
      %v1196 = vsel %vm642, %v1182, 0
      %1198 = vmatpush.msra.mxu0 0.0
      %1199 = vmatpush.msra.mxu0 0.0
      %1200 = vmatpush.msra.mxu0 0.0
      %1201 = vmatpush.msra.mxu0 0.0
      %1202 = vmatpush.msra.mxu0 0.0
      %1203 = vmatpush.msra.mxu0 0.0
      %1204 = vmatpush.msra.mxu0 0.0
      %1205 = vmatpush.msra.mxu0 0.0
      %1206 = vmatpush.msra.mxu0 0.0
      %1207 = vmatpush.msra.mxu0 0.0
      %1208 = vmatpush.msra.mxu0 0.0
      %1209 = vmatpush.msra.mxu0 0.0
      %1210 = vmatpush.msra.mxu0 0.0
      %1211 = vmatpush.msra.mxu0 0.0
      %1212 = vmatpush.msra.mxu0 0.0
      %1213 = vmatpush.msra.mxu0 %v1190
      %1214 = vmatmul.f32.gmra.mxu0 %v1196
      %v1215 = vpop.f32.mrf.mxu0
      %v1216 = vadd.f32 0.0, %v1215
      %1217 = vdwg.mxu0
      %1218 = vmatpush.msra.mxu0 0.0
      %1219 = vmatpush.msra.mxu0 0.0
      %1220 = vmatpush.msra.mxu0 0.0
      %1221 = vmatpush.msra.mxu0 0.0
      %1222 = vmatpush.msra.mxu0 0.0
      %1223 = vmatpush.msra.mxu0 0.0
      %1224 = vmatpush.msra.mxu0 0.0
      %1225 = vmatpush.msra.mxu0 0.0
      %1226 = vmatpush.msra.mxu0 0.0
      %1227 = vmatpush.msra.mxu0 0.0
      %1228 = vmatpush.msra.mxu0 0.0
      %1229 = vmatpush.msra.mxu0 0.0
      %1230 = vmatpush.msra.mxu0 0.0
      %1231 = vmatpush.msra.mxu0 0.0
      %1232 = vmatpush.msra.mxu0 0.0
      %1233 = vmatpush.msra.mxu0 %v1191
      %1234 = vmatmul.f32.gmra.mxu0 %v1196
      %v1235 = vpop.f32.mrf.mxu0
      %v1236 = vadd.f32 0.0, %v1235
      %1237 = vdwg.mxu0
      %1238 = vmatpush.msra.mxu0 0.0
      %1239 = vmatpush.msra.mxu0 0.0
      %1240 = vmatpush.msra.mxu0 0.0
      %1241 = vmatpush.msra.mxu0 0.0
      %1242 = vmatpush.msra.mxu0 0.0
      %1243 = vmatpush.msra.mxu0 0.0
      %1244 = vmatpush.msra.mxu0 0.0
      %1245 = vmatpush.msra.mxu0 0.0
      %1246 = vmatpush.msra.mxu0 0.0
      %1247 = vmatpush.msra.mxu0 0.0
      %1248 = vmatpush.msra.mxu0 0.0
      %1249 = vmatpush.msra.mxu0 0.0
      %1250 = vmatpush.msra.mxu0 0.0
      %1251 = vmatpush.msra.mxu0 0.0
      %1252 = vmatpush.msra.mxu0 0.0
      %1253 = vmatpush.msra.mxu0 %v1188
      %1254 = vmatmul.f32.gmra.mxu0 %v1196
      %v1255 = vpop.f32.mrf.mxu0
      %v1256 = vadd.f32 0.0, %v1255
      %1257 = vdwg.mxu0
      %v1258 = vadd.f32 %v1178, %v1216
      %v1259 = vadd.f32 %v1179, %v1236
      %v1260 = vadd.f32 %v1180, %v1256
      %s1261 = scalar_lea.vmem %s5, 32
      %v1262 = vld [vmem:[%s1261] sm:$0xf]
      %1263 = vrot.lane.b32.xlu0 %v622, 67
      %v1264 = vpop.permute.xlu0 %1263
      %1265 = vrot.lane.b32.xlu0 %v623, 67
      %v1266 = vpop.permute.xlu0 %1265
      %1267 = vrot.lane.b32.xlu0 %v624, 67
      %v1268 = vpop.permute.xlu0 %1267
      %vm1269 = vcmask 547840
      %v1270 = vsel %vm1269, %v1264, %v1266
      %v1271 = vsel %vm1269, %v1266, %v1268
      %v1276 = vsel %vm642, %v1262, 0
      %1278 = vmatpush.msra.mxu0 0.0
      %1279 = vmatpush.msra.mxu0 0.0
      %1280 = vmatpush.msra.mxu0 0.0
      %1281 = vmatpush.msra.mxu0 0.0
      %1282 = vmatpush.msra.mxu0 0.0
      %1283 = vmatpush.msra.mxu0 0.0
      %1284 = vmatpush.msra.mxu0 0.0
      %1285 = vmatpush.msra.mxu0 0.0
      %1286 = vmatpush.msra.mxu0 0.0
      %1287 = vmatpush.msra.mxu0 0.0
      %1288 = vmatpush.msra.mxu0 0.0
      %1289 = vmatpush.msra.mxu0 0.0
      %1290 = vmatpush.msra.mxu0 0.0
      %1291 = vmatpush.msra.mxu0 0.0
      %1292 = vmatpush.msra.mxu0 0.0
      %1293 = vmatpush.msra.mxu0 %v1270
      %1294 = vmatmul.f32.gmra.mxu0 %v1276
      %v1295 = vpop.f32.mrf.mxu0
      %v1296 = vadd.f32 0.0, %v1295
      %1297 = vdwg.mxu0
      %1298 = vmatpush.msra.mxu0 0.0
      %1299 = vmatpush.msra.mxu0 0.0
      %1300 = vmatpush.msra.mxu0 0.0
      %1301 = vmatpush.msra.mxu0 0.0
      %1302 = vmatpush.msra.mxu0 0.0
      %1303 = vmatpush.msra.mxu0 0.0
      %1304 = vmatpush.msra.mxu0 0.0
      %1305 = vmatpush.msra.mxu0 0.0
      %1306 = vmatpush.msra.mxu0 0.0
      %1307 = vmatpush.msra.mxu0 0.0
      %1308 = vmatpush.msra.mxu0 0.0
      %1309 = vmatpush.msra.mxu0 0.0
      %1310 = vmatpush.msra.mxu0 0.0
      %1311 = vmatpush.msra.mxu0 0.0
      %1312 = vmatpush.msra.mxu0 0.0
      %1313 = vmatpush.msra.mxu0 %v1271
      %1314 = vmatmul.f32.gmra.mxu0 %v1276
      %v1315 = vpop.f32.mrf.mxu0
      %v1316 = vadd.f32 0.0, %v1315
      %1317 = vdwg.mxu0
      %1318 = vmatpush.msra.mxu0 0.0
      %1319 = vmatpush.msra.mxu0 0.0
      %1320 = vmatpush.msra.mxu0 0.0
      %1321 = vmatpush.msra.mxu0 0.0
      %1322 = vmatpush.msra.mxu0 0.0
      %1323 = vmatpush.msra.mxu0 0.0
      %1324 = vmatpush.msra.mxu0 0.0
      %1325 = vmatpush.msra.mxu0 0.0
      %1326 = vmatpush.msra.mxu0 0.0
      %1327 = vmatpush.msra.mxu0 0.0
      %1328 = vmatpush.msra.mxu0 0.0
      %1329 = vmatpush.msra.mxu0 0.0
      %1330 = vmatpush.msra.mxu0 0.0
      %1331 = vmatpush.msra.mxu0 0.0
      %1332 = vmatpush.msra.mxu0 0.0
      %1333 = vmatpush.msra.mxu0 %v1268
      %1334 = vmatmul.f32.gmra.mxu0 %v1276
      %v1335 = vpop.f32.mrf.mxu0
      %v1336 = vadd.f32 0.0, %v1335
      %1337 = vdwg.mxu0
      %v1338 = vadd.f32 %v1258, %v1296
      %v1339 = vadd.f32 %v1259, %v1316
      %v1340 = vadd.f32 %v1260, %v1336
      %v1341 = vld [vmem:[%s6] sm:$0xf]
      %1343 = vset.pattern.permute.xlu0 0
      %1344 = vperm.xlu0 %1343, %v1341
      %v1345 = vpop.permute.xlu0 %1344
      %v1347 = vadd.f32 %v1338, %v1345
      %v1348 = vadd.f32 %v1339, %v1345
      %v1349 = vadd.f32 %v1340, %v1345
      %v1350 = vmax.f32 %v1347, 0.0
      %v1351 = vmax.f32 %v1348, 0.0
      %v1352 = vmax.f32 %v1349, 0.0
      %v1353 = vld [vmem:[%s9] sm:$0x7]
      %v1355 = vperm.slane %v1353, 0
      %v1356 = vperm.slane %v1353, 1
      %v1357 = vperm.slane %v1353, 2
      %1358 = vrot.lane.b32.xlu0 %v1355, 88
      %v1359 = vpop.permute.xlu0 %1358
      %1360 = vrot.lane.b32.xlu0 %v1356, 88
      %v1361 = vpop.permute.xlu0 %1360
      %1362 = vrot.lane.b32.xlu0 %v1357, 88
      %v1363 = vpop.permute.xlu0 %1362
      %v1364 = vsel %vm949, %v1359, %v1361
      %v1365 = vsel %vm949, %v1361, %v1363
      %v1369 = vmul.f32 %v1350, %v1364
      %v1370 = vmul.f32 %v1351, %v1365
      %v1371 = vmul.f32 %v1352, %v1363
      %1372 = vst [vmem:[#allocation3] sm:$0xff] 0.0
      %vm1373 = vcmask 130052
      %vm1374 = vmor %vm1373, %vm399
      %1375 = vst.msk [vmem:[#allocation3 + $0x8] sm:$0xff] %vm1374, 0.0
      %v1379 = vrot.slane %v1370, 4
      %v1380 = vsel %vm399, %v1369, %v1379
      %1381 = vrot.lane.b32.xlu0 %v1380, 40
      %v1382 = vpop.permute.xlu0 %1381
      %1383 = vrot.lane.b32.xlu0 %v1371, 40
      %v1384 = vpop.permute.xlu0 %1383
      %v1385 = vrot.slane %v1382, 4
      %vm1386 = vcmask 326656
      %v1387 = vsel %vm1386, %v1385, %v1382
      %v1388 = vsel %vm1386, %v1385, %v1384
      %vm1391 = vcmask 1043776
      %vm1392 = vcmask 1047556
      %vm1393 = vmor %vm1392, %vm1391
      %1394 = vst.msk [vmem:[#allocation3] sm:$0xff] %vm1393, %v1387
      %vm1395 = vcmask 846848
      %1396 = vst.msk [vmem:[#allocation3 + $0x8] sm:$0xf] %vm1395, %v1388
      %v1397 = vld [vmem:[%s7] sm:$0xf]
      %v1398 = vld [vmem:[#allocation3] sm:$0xff]
      %v1399 = vld [vmem:[#allocation3 + $0x8] sm:$0xf]
      %s1400 = scalar_lea.vmem %s7, 4
      %v1401 = vld [vmem:[%s1400] sm:$0xf]
      %1404 = vst [vmem:[#allocation1] ss:$2 sm:$0xff] %v1398
      %s1405 = scalar_lea.vmem [#allocation1], 16
      %1406 = vst [vmem:[%s1405] ss:$2 sm:$0xff] %v1399
      %v1407 = vld.sshfl [vmem:[#allocation1] sm:$0xff pattern:$0x75316420]
      %v1408 = vld.sshfl [vmem:[#allocation1 + $0x8] sm:$0xff pattern:$0x75316420]
      %v1409 = vld.sshfl [vmem:[#allocation1 + $0x10] sm:$0xff pattern:$0x75316420]
      %1410 = vrot.lane.b32.xlu0 %v1407, 108
      %v1411 = vpop.permute.xlu0 %1410
      %1412 = vrot.lane.b32.xlu0 %v1408, 108
      %v1413 = vpop.permute.xlu0 %1412
      %1414 = vrot.lane.b32.xlu0 %v1409, 108
      %v1415 = vpop.permute.xlu0 %1414
      %v1416 = vsel %vm636, %v1411, %v1413
      %v1417 = vsel %vm636, %v1413, %v1415
      %v1419 = vsel %vm395, %v1401, 0
      %v1421 = vsel %vm399, %v1416, 0
      %v1423 = vsel %vm399, %v1417, 0
      %v1425 = vsel %vm399, %v1415, 0
      %1427 = vmatpush.msra.mxu0 0.0
      %1428 = vmatpush.msra.mxu0 0.0
      %1429 = vmatpush.msra.mxu0 0.0
      %1430 = vmatpush.msra.mxu0 0.0
      %1431 = vmatpush.msra.mxu0 0.0
      %1432 = vmatpush.msra.mxu0 0.0
      %1433 = vmatpush.msra.mxu0 0.0
      %1434 = vmatpush.msra.mxu0 0.0
      %1435 = vmatpush.msra.mxu0 0.0
      %1436 = vmatpush.msra.mxu0 0.0
      %1437 = vmatpush.msra.mxu0 0.0
      %1438 = vmatpush.msra.mxu0 0.0
      %1439 = vmatpush.msra.mxu0 0.0
      %1440 = vmatpush.msra.mxu0 0.0
      %1441 = vmatpush.msra.mxu0 0.0
      %1442 = vmatpush.msra.mxu0 %v1421
      %1443 = vmatmul.f32.gmra.mxu0 %v1419
      %v1444 = vpop.f32.mrf.mxu0
      %v1445 = vadd.f32 0.0, %v1444
      %1446 = vdwg.mxu0
      %1447 = vmatpush.msra.mxu0 0.0
      %1448 = vmatpush.msra.mxu0 0.0
      %1449 = vmatpush.msra.mxu0 0.0
      %1450 = vmatpush.msra.mxu0 0.0
      %1451 = vmatpush.msra.mxu0 0.0
      %1452 = vmatpush.msra.mxu0 0.0
      %1453 = vmatpush.msra.mxu0 0.0
      %1454 = vmatpush.msra.mxu0 0.0
      %1455 = vmatpush.msra.mxu0 0.0
      %1456 = vmatpush.msra.mxu0 0.0
      %1457 = vmatpush.msra.mxu0 0.0
      %1458 = vmatpush.msra.mxu0 0.0
      %1459 = vmatpush.msra.mxu0 0.0
      %1460 = vmatpush.msra.mxu0 0.0
      %1461 = vmatpush.msra.mxu0 0.0
      %1462 = vmatpush.msra.mxu0 %v1423
      %1463 = vmatmul.f32.gmra.mxu0 %v1419
      %v1464 = vpop.f32.mrf.mxu0
      %v1465 = vadd.f32 0.0, %v1464
      %1466 = vdwg.mxu0
      %1467 = vmatpush.msra.mxu0 0.0
      %1468 = vmatpush.msra.mxu0 0.0
      %1469 = vmatpush.msra.mxu0 0.0
      %1470 = vmatpush.msra.mxu0 0.0
      %1471 = vmatpush.msra.mxu0 0.0
      %1472 = vmatpush.msra.mxu0 0.0
      %1473 = vmatpush.msra.mxu0 0.0
      %1474 = vmatpush.msra.mxu0 0.0
      %1475 = vmatpush.msra.mxu0 0.0
      %1476 = vmatpush.msra.mxu0 0.0
      %1477 = vmatpush.msra.mxu0 0.0
      %1478 = vmatpush.msra.mxu0 0.0
      %1479 = vmatpush.msra.mxu0 0.0
      %1480 = vmatpush.msra.mxu0 0.0
      %1481 = vmatpush.msra.mxu0 0.0
      %1482 = vmatpush.msra.mxu0 %v1425
      %1483 = vmatmul.f32.gmra.mxu0 %v1419
      %v1484 = vpop.f32.mrf.mxu0
      %v1485 = vadd.f32 0.0, %v1484
      %1486 = vdwg.mxu0
      %1487 = vst [vmem:[#allocation1] ss:$2 sm:$0xff] %v1398
      %s1488 = scalar_lea.vmem [#allocation1], 16
      %1489 = vst [vmem:[%s1488] ss:$2 sm:$0xff] %v1399
      %v1490 = vld.sshfl [vmem:[#allocation1] sm:$0xff pattern:$0x75316420]
      %v1491 = vld.sshfl [vmem:[#allocation1 + $0x8] sm:$0xff pattern:$0x75316420]
      %v1492 = vld.sshfl [vmem:[#allocation1 + $0x10] sm:$0xff pattern:$0x75316420]
      %1493 = vrot.lane.b32.xlu0 %v1490, 109
      %v1494 = vpop.permute.xlu0 %1493
      %1495 = vrot.lane.b32.xlu0 %v1491, 109
      %v1496 = vpop.permute.xlu0 %1495
      %1497 = vrot.lane.b32.xlu0 %v1492, 109
      %v1498 = vpop.permute.xlu0 %1497
      %v1499 = vsel %vm712, %v1494, %v1496
      %v1500 = vsel %vm712, %v1496, %v1498
      %v1502 = vsel %vm395, %v1397, 0
      %v1504 = vsel %vm399, %v1499, 0
      %v1506 = vsel %vm399, %v1500, 0
      %v1508 = vsel %vm399, %v1498, 0
      %1510 = vmatpush.msra.mxu0 0.0
      %1511 = vmatpush.msra.mxu0 0.0
      %1512 = vmatpush.msra.mxu0 0.0
      %1513 = vmatpush.msra.mxu0 0.0
      %1514 = vmatpush.msra.mxu0 0.0
      %1515 = vmatpush.msra.mxu0 0.0
      %1516 = vmatpush.msra.mxu0 0.0
      %1517 = vmatpush.msra.mxu0 0.0
      %1518 = vmatpush.msra.mxu0 0.0
      %1519 = vmatpush.msra.mxu0 0.0
      %1520 = vmatpush.msra.mxu0 0.0
      %1521 = vmatpush.msra.mxu0 0.0
      %1522 = vmatpush.msra.mxu0 0.0
      %1523 = vmatpush.msra.mxu0 0.0
      %1524 = vmatpush.msra.mxu0 0.0
      %1525 = vmatpush.msra.mxu0 %v1504
      %1526 = vmatmul.f32.gmra.mxu0 %v1502
      %v1527 = vpop.f32.mrf.mxu0
      %v1528 = vadd.f32 %v1445, %v1527
      %1529 = vdwg.mxu0
      %1530 = vmatpush.msra.mxu0 0.0
      %1531 = vmatpush.msra.mxu0 0.0
      %1532 = vmatpush.msra.mxu0 0.0
      %1533 = vmatpush.msra.mxu0 0.0
      %1534 = vmatpush.msra.mxu0 0.0
      %1535 = vmatpush.msra.mxu0 0.0
      %1536 = vmatpush.msra.mxu0 0.0
      %1537 = vmatpush.msra.mxu0 0.0
      %1538 = vmatpush.msra.mxu0 0.0
      %1539 = vmatpush.msra.mxu0 0.0
      %1540 = vmatpush.msra.mxu0 0.0
      %1541 = vmatpush.msra.mxu0 0.0
      %1542 = vmatpush.msra.mxu0 0.0
      %1543 = vmatpush.msra.mxu0 0.0
      %1544 = vmatpush.msra.mxu0 0.0
      %1545 = vmatpush.msra.mxu0 %v1506
      %1546 = vmatmul.f32.gmra.mxu0 %v1502
      %v1547 = vpop.f32.mrf.mxu0
      %v1548 = vadd.f32 %v1465, %v1547
      %1549 = vdwg.mxu0
      %1550 = vmatpush.msra.mxu0 0.0
      %1551 = vmatpush.msra.mxu0 0.0
      %1552 = vmatpush.msra.mxu0 0.0
      %1553 = vmatpush.msra.mxu0 0.0
      %1554 = vmatpush.msra.mxu0 0.0
      %1555 = vmatpush.msra.mxu0 0.0
      %1556 = vmatpush.msra.mxu0 0.0
      %1557 = vmatpush.msra.mxu0 0.0
      %1558 = vmatpush.msra.mxu0 0.0
      %1559 = vmatpush.msra.mxu0 0.0
      %1560 = vmatpush.msra.mxu0 0.0
      %1561 = vmatpush.msra.mxu0 0.0
      %1562 = vmatpush.msra.mxu0 0.0
      %1563 = vmatpush.msra.mxu0 0.0
      %1564 = vmatpush.msra.mxu0 0.0
      %1565 = vmatpush.msra.mxu0 %v1508
      %1566 = vmatmul.f32.gmra.mxu0 %v1502
      %v1567 = vpop.f32.mrf.mxu0
      %v1568 = vadd.f32 %v1485, %v1567
      %1569 = vdwg.mxu0
      %s1570 = scalar_lea.vmem %s7, 8
      %v1571 = vld [vmem:[%s1570] sm:$0xf]
      %v1572 = vld [vmem:[#allocation3] sm:$0xff]
      %v1573 = vld [vmem:[#allocation3 + $0x8] sm:$0xf]
      %1576 = vst [vmem:[#allocation1] ss:$2 sm:$0xff] %v1572
      %s1577 = scalar_lea.vmem [#allocation1], 16
      %1578 = vst [vmem:[%s1577] ss:$2 sm:$0xff] %v1573
      %v1579 = vld.sshfl [vmem:[#allocation1] sm:$0xff pattern:$0x75316420]
      %v1580 = vld.sshfl [vmem:[#allocation1 + $0x8] sm:$0xff pattern:$0x75316420]
      %v1581 = vld.sshfl [vmem:[#allocation1 + $0x10] sm:$0xff pattern:$0x75316420]
      %1582 = vrot.lane.b32.xlu0 %v1579, 89
      %v1583 = vpop.permute.xlu0 %1582
      %1584 = vrot.lane.b32.xlu0 %v1580, 89
      %v1585 = vpop.permute.xlu0 %1584
      %1586 = vrot.lane.b32.xlu0 %v1581, 89
      %v1587 = vpop.permute.xlu0 %1586
      %v1588 = vsel %vm869, %v1583, %v1585
      %v1589 = vsel %vm869, %v1585, %v1587
      %v1591 = vsel %vm395, %v1571, 0
      %v1593 = vsel %vm399, %v1588, 0
      %v1595 = vsel %vm399, %v1589, 0
      %v1597 = vsel %vm399, %v1587, 0
      %1599 = vmatpush.msra.mxu0 0.0
      %1600 = vmatpush.msra.mxu0 0.0
      %1601 = vmatpush.msra.mxu0 0.0
      %1602 = vmatpush.msra.mxu0 0.0
      %1603 = vmatpush.msra.mxu0 0.0
      %1604 = vmatpush.msra.mxu0 0.0
      %1605 = vmatpush.msra.mxu0 0.0
      %1606 = vmatpush.msra.mxu0 0.0
      %1607 = vmatpush.msra.mxu0 0.0
      %1608 = vmatpush.msra.mxu0 0.0
      %1609 = vmatpush.msra.mxu0 0.0
      %1610 = vmatpush.msra.mxu0 0.0
      %1611 = vmatpush.msra.mxu0 0.0
      %1612 = vmatpush.msra.mxu0 0.0
      %1613 = vmatpush.msra.mxu0 0.0
      %1614 = vmatpush.msra.mxu0 %v1593
      %1615 = vmatmul.f32.gmra.mxu0 %v1591
      %v1616 = vpop.f32.mrf.mxu0
      %v1617 = vadd.f32 0.0, %v1616
      %1618 = vdwg.mxu0
      %1619 = vmatpush.msra.mxu0 0.0
      %1620 = vmatpush.msra.mxu0 0.0
      %1621 = vmatpush.msra.mxu0 0.0
      %1622 = vmatpush.msra.mxu0 0.0
      %1623 = vmatpush.msra.mxu0 0.0
      %1624 = vmatpush.msra.mxu0 0.0
      %1625 = vmatpush.msra.mxu0 0.0
      %1626 = vmatpush.msra.mxu0 0.0
      %1627 = vmatpush.msra.mxu0 0.0
      %1628 = vmatpush.msra.mxu0 0.0
      %1629 = vmatpush.msra.mxu0 0.0
      %1630 = vmatpush.msra.mxu0 0.0
      %1631 = vmatpush.msra.mxu0 0.0
      %1632 = vmatpush.msra.mxu0 0.0
      %1633 = vmatpush.msra.mxu0 0.0
      %1634 = vmatpush.msra.mxu0 %v1595
      %1635 = vmatmul.f32.gmra.mxu0 %v1591
      %v1636 = vpop.f32.mrf.mxu0
      %v1637 = vadd.f32 0.0, %v1636
      %1638 = vdwg.mxu0
      %1639 = vmatpush.msra.mxu0 0.0
      %1640 = vmatpush.msra.mxu0 0.0
      %1641 = vmatpush.msra.mxu0 0.0
      %1642 = vmatpush.msra.mxu0 0.0
      %1643 = vmatpush.msra.mxu0 0.0
      %1644 = vmatpush.msra.mxu0 0.0
      %1645 = vmatpush.msra.mxu0 0.0
      %1646 = vmatpush.msra.mxu0 0.0
      %1647 = vmatpush.msra.mxu0 0.0
      %1648 = vmatpush.msra.mxu0 0.0
      %1649 = vmatpush.msra.mxu0 0.0
      %1650 = vmatpush.msra.mxu0 0.0
      %1651 = vmatpush.msra.mxu0 0.0
      %1652 = vmatpush.msra.mxu0 0.0
      %1653 = vmatpush.msra.mxu0 0.0
      %1654 = vmatpush.msra.mxu0 %v1597
      %1655 = vmatmul.f32.gmra.mxu0 %v1591
      %v1656 = vpop.f32.mrf.mxu0
      %v1657 = vadd.f32 0.0, %v1656
      %1658 = vdwg.mxu0
      %v1659 = vadd.f32 %v1528, %v1617
      %v1660 = vadd.f32 %v1548, %v1637
      %v1661 = vadd.f32 %v1568, %v1657
      %s1662 = scalar_lea.vmem %s7, 12
      %v1663 = vld [vmem:[%s1662] sm:$0xf]
      %v1664 = vld [vmem:[#allocation3] sm:$0xff]
      %v1665 = vld [vmem:[#allocation3 + $0x8] sm:$0xf]
      %1668 = vst [vmem:[#allocation1] ss:$2 sm:$0xff] %v1664
      %s1669 = scalar_lea.vmem [#allocation1], 16
      %1670 = vst [vmem:[%s1669] ss:$2 sm:$0xff] %v1665
      %v1671 = vld.sshfl [vmem:[#allocation1] sm:$0xff pattern:$0x75316420]
      %v1672 = vld.sshfl [vmem:[#allocation1 + $0x8] sm:$0xff pattern:$0x75316420]
      %v1673 = vld.sshfl [vmem:[#allocation1 + $0x10] sm:$0xff pattern:$0x75316420]
      %1674 = vrot.lane.b32.xlu0 %v1671, 88
      %v1675 = vpop.permute.xlu0 %1674
      %1676 = vrot.lane.b32.xlu0 %v1672, 88
      %v1677 = vpop.permute.xlu0 %1676
      %1678 = vrot.lane.b32.xlu0 %v1673, 88
      %v1679 = vpop.permute.xlu0 %1678
      %v1680 = vsel %vm949, %v1675, %v1677
      %v1681 = vsel %vm949, %v1677, %v1679
      %v1683 = vsel %vm395, %v1663, 0
      %v1685 = vsel %vm399, %v1680, 0
      %v1687 = vsel %vm399, %v1681, 0
      %v1689 = vsel %vm399, %v1679, 0
      %1691 = vmatpush.msra.mxu0 0.0
      %1692 = vmatpush.msra.mxu0 0.0
      %1693 = vmatpush.msra.mxu0 0.0
      %1694 = vmatpush.msra.mxu0 0.0
      %1695 = vmatpush.msra.mxu0 0.0
      %1696 = vmatpush.msra.mxu0 0.0
      %1697 = vmatpush.msra.mxu0 0.0
      %1698 = vmatpush.msra.mxu0 0.0
      %1699 = vmatpush.msra.mxu0 0.0
      %1700 = vmatpush.msra.mxu0 0.0
      %1701 = vmatpush.msra.mxu0 0.0
      %1702 = vmatpush.msra.mxu0 0.0
      %1703 = vmatpush.msra.mxu0 0.0
      %1704 = vmatpush.msra.mxu0 0.0
      %1705 = vmatpush.msra.mxu0 0.0
      %1706 = vmatpush.msra.mxu0 %v1685
      %1707 = vmatmul.f32.gmra.mxu0 %v1683
      %v1708 = vpop.f32.mrf.mxu0
      %v1709 = vadd.f32 0.0, %v1708
      %1710 = vdwg.mxu0
      %1711 = vmatpush.msra.mxu0 0.0
      %1712 = vmatpush.msra.mxu0 0.0
      %1713 = vmatpush.msra.mxu0 0.0
      %1714 = vmatpush.msra.mxu0 0.0
      %1715 = vmatpush.msra.mxu0 0.0
      %1716 = vmatpush.msra.mxu0 0.0
      %1717 = vmatpush.msra.mxu0 0.0
      %1718 = vmatpush.msra.mxu0 0.0
      %1719 = vmatpush.msra.mxu0 0.0
      %1720 = vmatpush.msra.mxu0 0.0
      %1721 = vmatpush.msra.mxu0 0.0
      %1722 = vmatpush.msra.mxu0 0.0
      %1723 = vmatpush.msra.mxu0 0.0
      %1724 = vmatpush.msra.mxu0 0.0
      %1725 = vmatpush.msra.mxu0 0.0
      %1726 = vmatpush.msra.mxu0 %v1687
      %1727 = vmatmul.f32.gmra.mxu0 %v1683
      %v1728 = vpop.f32.mrf.mxu0
      %v1729 = vadd.f32 0.0, %v1728
      %1730 = vdwg.mxu0
      %1731 = vmatpush.msra.mxu0 0.0
      %1732 = vmatpush.msra.mxu0 0.0
      %1733 = vmatpush.msra.mxu0 0.0
      %1734 = vmatpush.msra.mxu0 0.0
      %1735 = vmatpush.msra.mxu0 0.0
      %1736 = vmatpush.msra.mxu0 0.0
      %1737 = vmatpush.msra.mxu0 0.0
      %1738 = vmatpush.msra.mxu0 0.0
      %1739 = vmatpush.msra.mxu0 0.0
      %1740 = vmatpush.msra.mxu0 0.0
      %1741 = vmatpush.msra.mxu0 0.0
      %1742 = vmatpush.msra.mxu0 0.0
      %1743 = vmatpush.msra.mxu0 0.0
      %1744 = vmatpush.msra.mxu0 0.0
      %1745 = vmatpush.msra.mxu0 0.0
      %1746 = vmatpush.msra.mxu0 %v1689
      %1747 = vmatmul.f32.gmra.mxu0 %v1683
      %v1748 = vpop.f32.mrf.mxu0
      %v1749 = vadd.f32 0.0, %v1748
      %1750 = vdwg.mxu0
      %v1751 = vadd.f32 %v1659, %v1709
      %v1752 = vadd.f32 %v1660, %v1729
      %v1753 = vadd.f32 %v1661, %v1749
      %v1754 = vld [vmem:[%s8] sm:$0xf]
      %1756 = vset.pattern.permute.xlu0 0
      %1757 = vperm.xlu0 %1756, %v1754
      %v1758 = vpop.permute.xlu0 %1757
      %v1760 = vadd.f32 %v1751, %v1758
      %v1761 = vadd.f32 %v1752, %v1758
      %v1762 = vadd.f32 %v1753, %v1758
      %v1765 = vrot.slane %v1761, 4
      %v1766 = vsel %vm399, %v1760, %v1765
      %1768 = vst [vmem:[%s379] sm:$0xff] %v1766
      %vm1769 = vcmask 519168
      %1770 = vst.msk [vmem:[%s379 + $0x8] sm:$0xf] %vm1769, %v1762
      %s1771 = scalar_lea.vmem %s7, 16
      %v1772 = vld [vmem:[%s1771] sm:$0xf]
      %v1773 = vld [vmem:[#allocation3] sm:$0xff]
      %v1774 = vld [vmem:[#allocation3 + $0x8] sm:$0xf]
      %s1775 = scalar_lea.vmem %s7, 20
      %v1776 = vld [vmem:[%s1775] sm:$0xf]
      %1779 = vst [vmem:[#allocation1] ss:$2 sm:$0xff] %v1773
      %s1780 = scalar_lea.vmem [#allocation1], 16
      %1781 = vst [vmem:[%s1780] ss:$2 sm:$0xff] %v1774
      %v1782 = vld.sshfl [vmem:[#allocation1] sm:$0xff pattern:$0x75316420]
      %v1783 = vld.sshfl [vmem:[#allocation1 + $0x8] sm:$0xff pattern:$0x75316420]
      %v1784 = vld.sshfl [vmem:[#allocation1 + $0x10] sm:$0xff pattern:$0x75316420]
      %1785 = vrot.lane.b32.xlu0 %v1782, 107
      %v1786 = vpop.permute.xlu0 %1785
      %1787 = vrot.lane.b32.xlu0 %v1783, 107
      %v1788 = vpop.permute.xlu0 %1787
      %1789 = vrot.lane.b32.xlu0 %v1784, 107
      %v1790 = vpop.permute.xlu0 %1789
      %v1791 = vsel %vm789, %v1786, %v1788
      %v1792 = vsel %vm789, %v1788, %v1790
      %v1794 = vsel %vm395, %v1776, 0
      %v1796 = vsel %vm399, %v1791, 0
      %v1798 = vsel %vm399, %v1792, 0
      %v1800 = vsel %vm399, %v1790, 0
      %1802 = vmatpush.msra.mxu0 0.0
      %1803 = vmatpush.msra.mxu0 0.0
      %1804 = vmatpush.msra.mxu0 0.0
      %1805 = vmatpush.msra.mxu0 0.0
      %1806 = vmatpush.msra.mxu0 0.0
      %1807 = vmatpush.msra.mxu0 0.0
      %1808 = vmatpush.msra.mxu0 0.0
      %1809 = vmatpush.msra.mxu0 0.0
      %1810 = vmatpush.msra.mxu0 0.0
      %1811 = vmatpush.msra.mxu0 0.0
      %1812 = vmatpush.msra.mxu0 0.0
      %1813 = vmatpush.msra.mxu0 0.0
      %1814 = vmatpush.msra.mxu0 0.0
      %1815 = vmatpush.msra.mxu0 0.0
      %1816 = vmatpush.msra.mxu0 0.0
      %1817 = vmatpush.msra.mxu0 %v1796
      %1818 = vmatmul.f32.gmra.mxu0 %v1794
      %v1819 = vpop.f32.mrf.mxu0
      %v1820 = vadd.f32 0.0, %v1819
      %1821 = vdwg.mxu0
      %1822 = vmatpush.msra.mxu0 0.0
      %1823 = vmatpush.msra.mxu0 0.0
      %1824 = vmatpush.msra.mxu0 0.0
      %1825 = vmatpush.msra.mxu0 0.0
      %1826 = vmatpush.msra.mxu0 0.0
      %1827 = vmatpush.msra.mxu0 0.0
      %1828 = vmatpush.msra.mxu0 0.0
      %1829 = vmatpush.msra.mxu0 0.0
      %1830 = vmatpush.msra.mxu0 0.0
      %1831 = vmatpush.msra.mxu0 0.0
      %1832 = vmatpush.msra.mxu0 0.0
      %1833 = vmatpush.msra.mxu0 0.0
      %1834 = vmatpush.msra.mxu0 0.0
      %1835 = vmatpush.msra.mxu0 0.0
      %1836 = vmatpush.msra.mxu0 0.0
      %1837 = vmatpush.msra.mxu0 %v1798
      %1838 = vmatmul.f32.gmra.mxu0 %v1794
      %v1839 = vpop.f32.mrf.mxu0
      %v1840 = vadd.f32 0.0, %v1839
      %1841 = vdwg.mxu0
      %1842 = vmatpush.msra.mxu0 0.0
      %1843 = vmatpush.msra.mxu0 0.0
      %1844 = vmatpush.msra.mxu0 0.0
      %1845 = vmatpush.msra.mxu0 0.0
      %1846 = vmatpush.msra.mxu0 0.0
      %1847 = vmatpush.msra.mxu0 0.0
      %1848 = vmatpush.msra.mxu0 0.0
      %1849 = vmatpush.msra.mxu0 0.0
      %1850 = vmatpush.msra.mxu0 0.0
      %1851 = vmatpush.msra.mxu0 0.0
      %1852 = vmatpush.msra.mxu0 0.0
      %1853 = vmatpush.msra.mxu0 0.0
      %1854 = vmatpush.msra.mxu0 0.0
      %1855 = vmatpush.msra.mxu0 0.0
      %1856 = vmatpush.msra.mxu0 0.0
      %1857 = vmatpush.msra.mxu0 %v1800
      %1858 = vmatmul.f32.gmra.mxu0 %v1794
      %v1859 = vpop.f32.mrf.mxu0
      %v1860 = vadd.f32 0.0, %v1859
      %1861 = vdwg.mxu0
      %1862 = vst [vmem:[#allocation1] ss:$2 sm:$0xff] %v1773
      %s1863 = scalar_lea.vmem [#allocation1], 16
      %1864 = vst [vmem:[%s1863] ss:$2 sm:$0xff] %v1774
      %v1865 = vld.sshfl [vmem:[#allocation1] sm:$0xff pattern:$0x75316420]
      %v1866 = vld.sshfl [vmem:[#allocation1 + $0x8] sm:$0xff pattern:$0x75316420]
      %v1867 = vld.sshfl [vmem:[#allocation1 + $0x10] sm:$0xff pattern:$0x75316420]
      %1868 = vrot.lane.b32.xlu0 %v1865, 108
      %v1869 = vpop.permute.xlu0 %1868
      %1870 = vrot.lane.b32.xlu0 %v1866, 108
      %v1871 = vpop.permute.xlu0 %1870
      %1872 = vrot.lane.b32.xlu0 %v1867, 108
      %v1873 = vpop.permute.xlu0 %1872
      %v1874 = vsel %vm636, %v1869, %v1871
      %v1875 = vsel %vm636, %v1871, %v1873
      %v1877 = vsel %vm395, %v1772, 0
      %v1879 = vsel %vm399, %v1874, 0
      %v1881 = vsel %vm399, %v1875, 0
      %v1883 = vsel %vm399, %v1873, 0
      %1885 = vmatpush.msra.mxu0 0.0
      %1886 = vmatpush.msra.mxu0 0.0
      %1887 = vmatpush.msra.mxu0 0.0
      %1888 = vmatpush.msra.mxu0 0.0
      %1889 = vmatpush.msra.mxu0 0.0
      %1890 = vmatpush.msra.mxu0 0.0
      %1891 = vmatpush.msra.mxu0 0.0
      %1892 = vmatpush.msra.mxu0 0.0
      %1893 = vmatpush.msra.mxu0 0.0
      %1894 = vmatpush.msra.mxu0 0.0
      %1895 = vmatpush.msra.mxu0 0.0
      %1896 = vmatpush.msra.mxu0 0.0
      %1897 = vmatpush.msra.mxu0 0.0
      %1898 = vmatpush.msra.mxu0 0.0
      %1899 = vmatpush.msra.mxu0 0.0
      %1900 = vmatpush.msra.mxu0 %v1879
      %1901 = vmatmul.f32.gmra.mxu0 %v1877
      %v1902 = vpop.f32.mrf.mxu0
      %v1903 = vadd.f32 %v1820, %v1902
      %1904 = vdwg.mxu0
      %1905 = vmatpush.msra.mxu0 0.0
      %1906 = vmatpush.msra.mxu0 0.0
      %1907 = vmatpush.msra.mxu0 0.0
      %1908 = vmatpush.msra.mxu0 0.0
      %1909 = vmatpush.msra.mxu0 0.0
      %1910 = vmatpush.msra.mxu0 0.0
      %1911 = vmatpush.msra.mxu0 0.0
      %1912 = vmatpush.msra.mxu0 0.0
      %1913 = vmatpush.msra.mxu0 0.0
      %1914 = vmatpush.msra.mxu0 0.0
      %1915 = vmatpush.msra.mxu0 0.0
      %1916 = vmatpush.msra.mxu0 0.0
      %1917 = vmatpush.msra.mxu0 0.0
      %1918 = vmatpush.msra.mxu0 0.0
      %1919 = vmatpush.msra.mxu0 0.0
      %1920 = vmatpush.msra.mxu0 %v1881
      %1921 = vmatmul.f32.gmra.mxu0 %v1877
      %v1922 = vpop.f32.mrf.mxu0
      %v1923 = vadd.f32 %v1840, %v1922
      %1924 = vdwg.mxu0
      %1925 = vmatpush.msra.mxu0 0.0
      %1926 = vmatpush.msra.mxu0 0.0
      %1927 = vmatpush.msra.mxu0 0.0
      %1928 = vmatpush.msra.mxu0 0.0
      %1929 = vmatpush.msra.mxu0 0.0
      %1930 = vmatpush.msra.mxu0 0.0
      %1931 = vmatpush.msra.mxu0 0.0
      %1932 = vmatpush.msra.mxu0 0.0
      %1933 = vmatpush.msra.mxu0 0.0
      %1934 = vmatpush.msra.mxu0 0.0
      %1935 = vmatpush.msra.mxu0 0.0
      %1936 = vmatpush.msra.mxu0 0.0
      %1937 = vmatpush.msra.mxu0 0.0
      %1938 = vmatpush.msra.mxu0 0.0
      %1939 = vmatpush.msra.mxu0 0.0
      %1940 = vmatpush.msra.mxu0 %v1883
      %1941 = vmatmul.f32.gmra.mxu0 %v1877
      %v1942 = vpop.f32.mrf.mxu0
      %v1943 = vadd.f32 %v1860, %v1942
      %1944 = vdwg.mxu0
      %s1945 = scalar_lea.vmem %s7, 24
      %v1946 = vld [vmem:[%s1945] sm:$0xf]
      %v1947 = vld [vmem:[#allocation3] sm:$0xff]
      %v1948 = vld [vmem:[#allocation3 + $0x8] sm:$0xf]
      %1951 = vst [vmem:[#allocation1] ss:$2 sm:$0xff] %v1947
      %s1952 = scalar_lea.vmem [#allocation1], 16
      %1953 = vst [vmem:[%s1952] ss:$2 sm:$0xff] %v1948
      %v1954 = vld.sshfl [vmem:[#allocation1] sm:$0xff pattern:$0x75316420]
      %v1955 = vld.sshfl [vmem:[#allocation1 + $0x8] sm:$0xff pattern:$0x75316420]
      %v1956 = vld.sshfl [vmem:[#allocation1 + $0x10] sm:$0xff pattern:$0x75316420]
      %1957 = vrot.lane.b32.xlu0 %v1954, 88
      %v1958 = vpop.permute.xlu0 %1957
      %1959 = vrot.lane.b32.xlu0 %v1955, 88
      %v1960 = vpop.permute.xlu0 %1959
      %1961 = vrot.lane.b32.xlu0 %v1956, 88
      %v1962 = vpop.permute.xlu0 %1961
      %v1963 = vsel %vm949, %v1958, %v1960
      %v1964 = vsel %vm949, %v1960, %v1962
      %v1966 = vsel %vm395, %v1946, 0
      %v1968 = vsel %vm399, %v1963, 0
      %v1970 = vsel %vm399, %v1964, 0
      %v1972 = vsel %vm399, %v1962, 0
      %1974 = vmatpush.msra.mxu0 0.0
      %1975 = vmatpush.msra.mxu0 0.0
      %1976 = vmatpush.msra.mxu0 0.0
      %1977 = vmatpush.msra.mxu0 0.0
      %1978 = vmatpush.msra.mxu0 0.0
      %1979 = vmatpush.msra.mxu0 0.0
      %1980 = vmatpush.msra.mxu0 0.0
      %1981 = vmatpush.msra.mxu0 0.0
      %1982 = vmatpush.msra.mxu0 0.0
      %1983 = vmatpush.msra.mxu0 0.0
      %1984 = vmatpush.msra.mxu0 0.0
      %1985 = vmatpush.msra.mxu0 0.0
      %1986 = vmatpush.msra.mxu0 0.0
      %1987 = vmatpush.msra.mxu0 0.0
      %1988 = vmatpush.msra.mxu0 0.0
      %1989 = vmatpush.msra.mxu0 %v1968
      %1990 = vmatmul.f32.gmra.mxu0 %v1966
      %v1991 = vpop.f32.mrf.mxu0
      %v1992 = vadd.f32 0.0, %v1991
      %1993 = vdwg.mxu0
      %1994 = vmatpush.msra.mxu0 0.0
      %1995 = vmatpush.msra.mxu0 0.0
      %1996 = vmatpush.msra.mxu0 0.0
      %1997 = vmatpush.msra.mxu0 0.0
      %1998 = vmatpush.msra.mxu0 0.0
      %1999 = vmatpush.msra.mxu0 0.0
      %2000 = vmatpush.msra.mxu0 0.0
      %2001 = vmatpush.msra.mxu0 0.0
      %2002 = vmatpush.msra.mxu0 0.0
      %2003 = vmatpush.msra.mxu0 0.0
      %2004 = vmatpush.msra.mxu0 0.0
      %2005 = vmatpush.msra.mxu0 0.0
      %2006 = vmatpush.msra.mxu0 0.0
      %2007 = vmatpush.msra.mxu0 0.0
      %2008 = vmatpush.msra.mxu0 0.0
      %2009 = vmatpush.msra.mxu0 %v1970
      %2010 = vmatmul.f32.gmra.mxu0 %v1966
      %v2011 = vpop.f32.mrf.mxu0
      %v2012 = vadd.f32 0.0, %v2011
      %2013 = vdwg.mxu0
      %2014 = vmatpush.msra.mxu0 0.0
      %2015 = vmatpush.msra.mxu0 0.0
      %2016 = vmatpush.msra.mxu0 0.0
      %2017 = vmatpush.msra.mxu0 0.0
      %2018 = vmatpush.msra.mxu0 0.0
      %2019 = vmatpush.msra.mxu0 0.0
      %2020 = vmatpush.msra.mxu0 0.0
      %2021 = vmatpush.msra.mxu0 0.0
      %2022 = vmatpush.msra.mxu0 0.0
      %2023 = vmatpush.msra.mxu0 0.0
      %2024 = vmatpush.msra.mxu0 0.0
      %2025 = vmatpush.msra.mxu0 0.0
      %2026 = vmatpush.msra.mxu0 0.0
      %2027 = vmatpush.msra.mxu0 0.0
      %2028 = vmatpush.msra.mxu0 0.0
      %2029 = vmatpush.msra.mxu0 %v1972
      %2030 = vmatmul.f32.gmra.mxu0 %v1966
      %v2031 = vpop.f32.mrf.mxu0
      %v2032 = vadd.f32 0.0, %v2031
      %2033 = vdwg.mxu0
      %v2034 = vadd.f32 %v1903, %v1992
      %v2035 = vadd.f32 %v1923, %v2012
      %v2036 = vadd.f32 %v1943, %v2032
      %s2037 = scalar_lea.vmem %s7, 28
      %v2038 = vld [vmem:[%s2037] sm:$0xf]
      %v2039 = vld [vmem:[#allocation3] sm:$0xff]
      %v2040 = vld [vmem:[#allocation3 + $0x8] sm:$0xf]
      %2043 = vst [vmem:[#allocation1] ss:$2 sm:$0xff] %v2039
      %s2044 = scalar_lea.vmem [#allocation1], 16
      %2045 = vst [vmem:[%s2044] ss:$2 sm:$0xff] %v2040
      %v2046 = vld.sshfl [vmem:[#allocation1] sm:$0xff pattern:$0x75316420]
      %v2047 = vld.sshfl [vmem:[#allocation1 + $0x8] sm:$0xff pattern:$0x75316420]
      %v2048 = vld.sshfl [vmem:[#allocation1 + $0x10] sm:$0xff pattern:$0x75316420]
      %2049 = vrot.lane.b32.xlu0 %v2046, 87
      %v2050 = vpop.permute.xlu0 %2049
      %2051 = vrot.lane.b32.xlu0 %v2047, 87
      %v2052 = vpop.permute.xlu0 %2051
      %2053 = vrot.lane.b32.xlu0 %v2048, 87
      %v2054 = vpop.permute.xlu0 %2053
      %v2055 = vsel %vm1029, %v2050, %v2052
      %v2056 = vsel %vm1029, %v2052, %v2054
      %v2058 = vsel %vm395, %v2038, 0
      %v2060 = vsel %vm399, %v2055, 0
      %v2062 = vsel %vm399, %v2056, 0
      %v2064 = vsel %vm399, %v2054, 0
      %2066 = vmatpush.msra.mxu0 0.0
      %2067 = vmatpush.msra.mxu0 0.0
      %2068 = vmatpush.msra.mxu0 0.0
      %2069 = vmatpush.msra.mxu0 0.0
      %2070 = vmatpush.msra.mxu0 0.0
      %2071 = vmatpush.msra.mxu0 0.0
      %2072 = vmatpush.msra.mxu0 0.0
      %2073 = vmatpush.msra.mxu0 0.0
      %2074 = vmatpush.msra.mxu0 0.0
      %2075 = vmatpush.msra.mxu0 0.0
      %2076 = vmatpush.msra.mxu0 0.0
      %2077 = vmatpush.msra.mxu0 0.0
      %2078 = vmatpush.msra.mxu0 0.0
      %2079 = vmatpush.msra.mxu0 0.0
      %2080 = vmatpush.msra.mxu0 0.0
      %2081 = vmatpush.msra.mxu0 %v2060
      %2082 = vmatmul.f32.gmra.mxu0 %v2058
      %v2083 = vpop.f32.mrf.mxu0
      %v2084 = vadd.f32 0.0, %v2083
      %2085 = vdwg.mxu0
      %2086 = vmatpush.msra.mxu0 0.0
      %2087 = vmatpush.msra.mxu0 0.0
      %2088 = vmatpush.msra.mxu0 0.0
      %2089 = vmatpush.msra.mxu0 0.0
      %2090 = vmatpush.msra.mxu0 0.0
      %2091 = vmatpush.msra.mxu0 0.0
      %2092 = vmatpush.msra.mxu0 0.0
      %2093 = vmatpush.msra.mxu0 0.0
      %2094 = vmatpush.msra.mxu0 0.0
      %2095 = vmatpush.msra.mxu0 0.0
      %2096 = vmatpush.msra.mxu0 0.0
      %2097 = vmatpush.msra.mxu0 0.0
      %2098 = vmatpush.msra.mxu0 0.0
      %2099 = vmatpush.msra.mxu0 0.0
      %2100 = vmatpush.msra.mxu0 0.0
      %2101 = vmatpush.msra.mxu0 %v2062
      %2102 = vmatmul.f32.gmra.mxu0 %v2058
      %v2103 = vpop.f32.mrf.mxu0
      %v2104 = vadd.f32 0.0, %v2103
      %2105 = vdwg.mxu0
      %2106 = vmatpush.msra.mxu0 0.0
      %2107 = vmatpush.msra.mxu0 0.0
      %2108 = vmatpush.msra.mxu0 0.0
      %2109 = vmatpush.msra.mxu0 0.0
      %2110 = vmatpush.msra.mxu0 0.0
      %2111 = vmatpush.msra.mxu0 0.0
      %2112 = vmatpush.msra.mxu0 0.0
      %2113 = vmatpush.msra.mxu0 0.0
      %2114 = vmatpush.msra.mxu0 0.0
      %2115 = vmatpush.msra.mxu0 0.0
      %2116 = vmatpush.msra.mxu0 0.0
      %2117 = vmatpush.msra.mxu0 0.0
      %2118 = vmatpush.msra.mxu0 0.0
      %2119 = vmatpush.msra.mxu0 0.0
      %2120 = vmatpush.msra.mxu0 0.0
      %2121 = vmatpush.msra.mxu0 %v2064
      %2122 = vmatmul.f32.gmra.mxu0 %v2058
      %v2123 = vpop.f32.mrf.mxu0
      %v2124 = vadd.f32 0.0, %v2123
      %2125 = vdwg.mxu0
      %v2126 = vadd.f32 %v2034, %v2084
      %v2127 = vadd.f32 %v2035, %v2104
      %v2128 = vadd.f32 %v2036, %v2124
      %v2129 = vld [vmem:[%s8] sm:$0xf]
      %2131 = vset.pattern.permute.xlu0 0
      %2132 = vperm.xlu0 %2131, %v2129
      %v2133 = vpop.permute.xlu0 %2132
      %v2135 = vadd.f32 %v2126, %v2133
      %v2136 = vadd.f32 %v2127, %v2133
      %v2137 = vadd.f32 %v2128, %v2133
      %v2140 = vrot.slane %v2136, 4
      %v2141 = vsel %vm399, %v2135, %v2140
      %s2143 = scalar_lea.vmem %s379, 12
      %2144 = vst [vmem:[%s2143] sm:$0xff] %v2141
      %2145 = vst.msk [vmem:[%s2143 + $0x8] sm:$0xf] %vm1769, %v2137
      %s2146 = scalar_lea.vmem %s7, 32
      %v2147 = vld [vmem:[%s2146] sm:$0xf]
      %v2148 = vld [vmem:[#allocation3] sm:$0xff]
      %v2149 = vld [vmem:[#allocation3 + $0x8] sm:$0xf]
      %s2150 = scalar_lea.vmem %s7, 36
      %v2151 = vld [vmem:[%s2150] sm:$0xf]
      %2154 = vst [vmem:[#allocation1] ss:$2 sm:$0xff] %v2148
      %s2155 = scalar_lea.vmem [#allocation1], 16
      %2156 = vst [vmem:[%s2155] ss:$2 sm:$0xff] %v2149
      %v2157 = vld.sshfl [vmem:[#allocation1] sm:$0xff pattern:$0x75316420]
      %v2158 = vld.sshfl [vmem:[#allocation1 + $0x8] sm:$0xff pattern:$0x75316420]
      %v2159 = vld.sshfl [vmem:[#allocation1 + $0x10] sm:$0xff pattern:$0x75316420]
      %2160 = vrot.lane.b32.xlu0 %v2157, 88
      %v2161 = vpop.permute.xlu0 %2160
      %2162 = vrot.lane.b32.xlu0 %v2158, 88
      %v2163 = vpop.permute.xlu0 %2162
      %2164 = vrot.lane.b32.xlu0 %v2159, 88
      %v2165 = vpop.permute.xlu0 %2164
      %v2166 = vsel %vm949, %v2161, %v2163
      %v2167 = vsel %vm949, %v2163, %v2165
      %v2169 = vsel %vm395, %v2151, 0
      %v2171 = vsel %vm399, %v2166, 0
      %v2173 = vsel %vm399, %v2167, 0
      %v2175 = vsel %vm399, %v2165, 0
      %2177 = vmatpush.msra.mxu0 0.0
      %2178 = vmatpush.msra.mxu0 0.0
      %2179 = vmatpush.msra.mxu0 0.0
      %2180 = vmatpush.msra.mxu0 0.0
      %2181 = vmatpush.msra.mxu0 0.0
      %2182 = vmatpush.msra.mxu0 0.0
      %2183 = vmatpush.msra.mxu0 0.0
      %2184 = vmatpush.msra.mxu0 0.0
      %2185 = vmatpush.msra.mxu0 0.0
      %2186 = vmatpush.msra.mxu0 0.0
      %2187 = vmatpush.msra.mxu0 0.0
      %2188 = vmatpush.msra.mxu0 0.0
      %2189 = vmatpush.msra.mxu0 0.0
      %2190 = vmatpush.msra.mxu0 0.0
      %2191 = vmatpush.msra.mxu0 0.0
      %2192 = vmatpush.msra.mxu0 %v2171
      %2193 = vmatmul.f32.gmra.mxu0 %v2169
      %v2194 = vpop.f32.mrf.mxu0
      %v2195 = vadd.f32 0.0, %v2194
      %2196 = vdwg.mxu0
      %2197 = vmatpush.msra.mxu0 0.0
      %2198 = vmatpush.msra.mxu0 0.0
      %2199 = vmatpush.msra.mxu0 0.0
      %2200 = vmatpush.msra.mxu0 0.0
      %2201 = vmatpush.msra.mxu0 0.0
      %2202 = vmatpush.msra.mxu0 0.0
      %2203 = vmatpush.msra.mxu0 0.0
      %2204 = vmatpush.msra.mxu0 0.0
      %2205 = vmatpush.msra.mxu0 0.0
      %2206 = vmatpush.msra.mxu0 0.0
      %2207 = vmatpush.msra.mxu0 0.0
      %2208 = vmatpush.msra.mxu0 0.0
      %2209 = vmatpush.msra.mxu0 0.0
      %2210 = vmatpush.msra.mxu0 0.0
      %2211 = vmatpush.msra.mxu0 0.0
      %2212 = vmatpush.msra.mxu0 %v2173
      %2213 = vmatmul.f32.gmra.mxu0 %v2169
      %v2214 = vpop.f32.mrf.mxu0
      %v2215 = vadd.f32 0.0, %v2214
      %2216 = vdwg.mxu0
      %2217 = vmatpush.msra.mxu0 0.0
      %2218 = vmatpush.msra.mxu0 0.0
      %2219 = vmatpush.msra.mxu0 0.0
      %2220 = vmatpush.msra.mxu0 0.0
      %2221 = vmatpush.msra.mxu0 0.0
      %2222 = vmatpush.msra.mxu0 0.0
      %2223 = vmatpush.msra.mxu0 0.0
      %2224 = vmatpush.msra.mxu0 0.0
      %2225 = vmatpush.msra.mxu0 0.0
      %2226 = vmatpush.msra.mxu0 0.0
      %2227 = vmatpush.msra.mxu0 0.0
      %2228 = vmatpush.msra.mxu0 0.0
      %2229 = vmatpush.msra.mxu0 0.0
      %2230 = vmatpush.msra.mxu0 0.0
      %2231 = vmatpush.msra.mxu0 0.0
      %2232 = vmatpush.msra.mxu0 %v2175
      %2233 = vmatmul.f32.gmra.mxu0 %v2169
      %v2234 = vpop.f32.mrf.mxu0
      %v2235 = vadd.f32 0.0, %v2234
      %2236 = vdwg.mxu0
      %2237 = vst [vmem:[#allocation1] ss:$2 sm:$0xff] %v2148
      %s2238 = scalar_lea.vmem [#allocation1], 16
      %2239 = vst [vmem:[%s2238] ss:$2 sm:$0xff] %v2149
      %v2240 = vld.sshfl [vmem:[#allocation1] sm:$0xff pattern:$0x75316420]
      %v2241 = vld.sshfl [vmem:[#allocation1 + $0x8] sm:$0xff pattern:$0x75316420]
      %v2242 = vld.sshfl [vmem:[#allocation1 + $0x10] sm:$0xff pattern:$0x75316420]
      %2243 = vrot.lane.b32.xlu0 %v2240, 89
      %v2244 = vpop.permute.xlu0 %2243
      %2245 = vrot.lane.b32.xlu0 %v2241, 89
      %v2246 = vpop.permute.xlu0 %2245
      %2247 = vrot.lane.b32.xlu0 %v2242, 89
      %v2248 = vpop.permute.xlu0 %2247
      %v2249 = vsel %vm869, %v2244, %v2246
      %v2250 = vsel %vm869, %v2246, %v2248
      %v2252 = vsel %vm395, %v2147, 0
      %v2254 = vsel %vm399, %v2249, 0
      %v2256 = vsel %vm399, %v2250, 0
      %v2258 = vsel %vm399, %v2248, 0
      %2260 = vmatpush.msra.mxu0 0.0
      %2261 = vmatpush.msra.mxu0 0.0
      %2262 = vmatpush.msra.mxu0 0.0
      %2263 = vmatpush.msra.mxu0 0.0
      %2264 = vmatpush.msra.mxu0 0.0
      %2265 = vmatpush.msra.mxu0 0.0
      %2266 = vmatpush.msra.mxu0 0.0
      %2267 = vmatpush.msra.mxu0 0.0
      %2268 = vmatpush.msra.mxu0 0.0
      %2269 = vmatpush.msra.mxu0 0.0
      %2270 = vmatpush.msra.mxu0 0.0
      %2271 = vmatpush.msra.mxu0 0.0
      %2272 = vmatpush.msra.mxu0 0.0
      %2273 = vmatpush.msra.mxu0 0.0
      %2274 = vmatpush.msra.mxu0 0.0
      %2275 = vmatpush.msra.mxu0 %v2254
      %2276 = vmatmul.f32.gmra.mxu0 %v2252
      %v2277 = vpop.f32.mrf.mxu0
      %v2278 = vadd.f32 %v2195, %v2277
      %2279 = vdwg.mxu0
      %2280 = vmatpush.msra.mxu0 0.0
      %2281 = vmatpush.msra.mxu0 0.0
      %2282 = vmatpush.msra.mxu0 0.0
      %2283 = vmatpush.msra.mxu0 0.0
      %2284 = vmatpush.msra.mxu0 0.0
      %2285 = vmatpush.msra.mxu0 0.0
      %2286 = vmatpush.msra.mxu0 0.0
      %2287 = vmatpush.msra.mxu0 0.0
      %2288 = vmatpush.msra.mxu0 0.0
      %2289 = vmatpush.msra.mxu0 0.0
      %2290 = vmatpush.msra.mxu0 0.0
      %2291 = vmatpush.msra.mxu0 0.0
      %2292 = vmatpush.msra.mxu0 0.0
      %2293 = vmatpush.msra.mxu0 0.0
      %2294 = vmatpush.msra.mxu0 0.0
      %2295 = vmatpush.msra.mxu0 %v2256
      %2296 = vmatmul.f32.gmra.mxu0 %v2252
      %v2297 = vpop.f32.mrf.mxu0
      %v2298 = vadd.f32 %v2215, %v2297
      %2299 = vdwg.mxu0
      %2300 = vmatpush.msra.mxu0 0.0
      %2301 = vmatpush.msra.mxu0 0.0
      %2302 = vmatpush.msra.mxu0 0.0
      %2303 = vmatpush.msra.mxu0 0.0
      %2304 = vmatpush.msra.mxu0 0.0
      %2305 = vmatpush.msra.mxu0 0.0
      %2306 = vmatpush.msra.mxu0 0.0
      %2307 = vmatpush.msra.mxu0 0.0
      %2308 = vmatpush.msra.mxu0 0.0
      %2309 = vmatpush.msra.mxu0 0.0
      %2310 = vmatpush.msra.mxu0 0.0
      %2311 = vmatpush.msra.mxu0 0.0
      %2312 = vmatpush.msra.mxu0 0.0
      %2313 = vmatpush.msra.mxu0 0.0
      %2314 = vmatpush.msra.mxu0 0.0
      %2315 = vmatpush.msra.mxu0 %v2258
      %2316 = vmatmul.f32.gmra.mxu0 %v2252
      %v2317 = vpop.f32.mrf.mxu0
      %v2318 = vadd.f32 %v2235, %v2317
      %2319 = vdwg.mxu0
      %s2320 = scalar_lea.vmem %s7, 40
      %v2321 = vld [vmem:[%s2320] sm:$0xf]
      %v2322 = vld [vmem:[#allocation3] sm:$0xff]
      %v2323 = vld [vmem:[#allocation3 + $0x8] sm:$0xf]
      %2326 = vst [vmem:[#allocation1] ss:$2 sm:$0xff] %v2322
      %s2327 = scalar_lea.vmem [#allocation1], 16
      %2328 = vst [vmem:[%s2327] ss:$2 sm:$0xff] %v2323
      %v2329 = vld.sshfl [vmem:[#allocation1] sm:$0xff pattern:$0x75316420]
      %v2330 = vld.sshfl [vmem:[#allocation1 + $0x8] sm:$0xff pattern:$0x75316420]
      %v2331 = vld.sshfl [vmem:[#allocation1 + $0x10] sm:$0xff pattern:$0x75316420]
      %2332 = vrot.lane.b32.xlu0 %v2329, 69
      %v2333 = vpop.permute.xlu0 %2332
      %2334 = vrot.lane.b32.xlu0 %v2330, 69
      %v2335 = vpop.permute.xlu0 %2334
      %2336 = vrot.lane.b32.xlu0 %v2331, 69
      %v2337 = vpop.permute.xlu0 %2336
      %v2338 = vsel %vm1109, %v2333, %v2335
      %v2339 = vsel %vm1109, %v2335, %v2337
      %v2341 = vsel %vm395, %v2321, 0
      %v2343 = vsel %vm399, %v2338, 0
      %v2345 = vsel %vm399, %v2339, 0
      %v2347 = vsel %vm399, %v2337, 0
      %2349 = vmatpush.msra.mxu0 0.0
      %2350 = vmatpush.msra.mxu0 0.0
      %2351 = vmatpush.msra.mxu0 0.0
      %2352 = vmatpush.msra.mxu0 0.0
      %2353 = vmatpush.msra.mxu0 0.0
      %2354 = vmatpush.msra.mxu0 0.0
      %2355 = vmatpush.msra.mxu0 0.0
      %2356 = vmatpush.msra.mxu0 0.0
      %2357 = vmatpush.msra.mxu0 0.0
      %2358 = vmatpush.msra.mxu0 0.0
      %2359 = vmatpush.msra.mxu0 0.0
      %2360 = vmatpush.msra.mxu0 0.0
      %2361 = vmatpush.msra.mxu0 0.0
      %2362 = vmatpush.msra.mxu0 0.0
      %2363 = vmatpush.msra.mxu0 0.0
      %2364 = vmatpush.msra.mxu0 %v2343
      %2365 = vmatmul.f32.gmra.mxu0 %v2341
      %v2366 = vpop.f32.mrf.mxu0
      %v2367 = vadd.f32 0.0, %v2366
      %2368 = vdwg.mxu0
      %2369 = vmatpush.msra.mxu0 0.0
      %2370 = vmatpush.msra.mxu0 0.0
      %2371 = vmatpush.msra.mxu0 0.0
      %2372 = vmatpush.msra.mxu0 0.0
      %2373 = vmatpush.msra.mxu0 0.0
      %2374 = vmatpush.msra.mxu0 0.0
      %2375 = vmatpush.msra.mxu0 0.0
      %2376 = vmatpush.msra.mxu0 0.0
      %2377 = vmatpush.msra.mxu0 0.0
      %2378 = vmatpush.msra.mxu0 0.0
      %2379 = vmatpush.msra.mxu0 0.0
      %2380 = vmatpush.msra.mxu0 0.0
      %2381 = vmatpush.msra.mxu0 0.0
      %2382 = vmatpush.msra.mxu0 0.0
      %2383 = vmatpush.msra.mxu0 0.0
      %2384 = vmatpush.msra.mxu0 %v2345
      %2385 = vmatmul.f32.gmra.mxu0 %v2341
      %v2386 = vpop.f32.mrf.mxu0
      %v2387 = vadd.f32 0.0, %v2386
      %2388 = vdwg.mxu0
      %2389 = vmatpush.msra.mxu0 0.0
      %2390 = vmatpush.msra.mxu0 0.0
      %2391 = vmatpush.msra.mxu0 0.0
      %2392 = vmatpush.msra.mxu0 0.0
      %2393 = vmatpush.msra.mxu0 0.0
      %2394 = vmatpush.msra.mxu0 0.0
      %2395 = vmatpush.msra.mxu0 0.0
      %2396 = vmatpush.msra.mxu0 0.0
      %2397 = vmatpush.msra.mxu0 0.0
      %2398 = vmatpush.msra.mxu0 0.0
      %2399 = vmatpush.msra.mxu0 0.0
      %2400 = vmatpush.msra.mxu0 0.0
      %2401 = vmatpush.msra.mxu0 0.0
      %2402 = vmatpush.msra.mxu0 0.0
      %2403 = vmatpush.msra.mxu0 0.0
      %2404 = vmatpush.msra.mxu0 %v2347
      %2405 = vmatmul.f32.gmra.mxu0 %v2341
      %v2406 = vpop.f32.mrf.mxu0
      %v2407 = vadd.f32 0.0, %v2406
      %2408 = vdwg.mxu0
      %v2409 = vadd.f32 %v2278, %v2367
      %v2410 = vadd.f32 %v2298, %v2387
      %v2411 = vadd.f32 %v2318, %v2407
      %s2412 = scalar_lea.vmem %s7, 44
      %v2413 = vld [vmem:[%s2412] sm:$0xf]
      %v2414 = vld [vmem:[#allocation3] sm:$0xff]
      %v2415 = vld [vmem:[#allocation3 + $0x8] sm:$0xf]
      %2418 = vst [vmem:[#allocation1] ss:$2 sm:$0xff] %v2414
      %s2419 = scalar_lea.vmem [#allocation1], 16
      %2420 = vst [vmem:[%s2419] ss:$2 sm:$0xff] %v2415
      %v2421 = vld.sshfl [vmem:[#allocation1] sm:$0xff pattern:$0x75316420]
      %v2422 = vld.sshfl [vmem:[#allocation1 + $0x8] sm:$0xff pattern:$0x75316420]
      %v2423 = vld.sshfl [vmem:[#allocation1 + $0x10] sm:$0xff pattern:$0x75316420]
      %2424 = vrot.lane.b32.xlu0 %v2421, 68
      %v2425 = vpop.permute.xlu0 %2424
      %2426 = vrot.lane.b32.xlu0 %v2422, 68
      %v2427 = vpop.permute.xlu0 %2426
      %2428 = vrot.lane.b32.xlu0 %v2423, 68
      %v2429 = vpop.permute.xlu0 %2428
      %v2430 = vsel %vm1189, %v2425, %v2427
      %v2431 = vsel %vm1189, %v2427, %v2429
      %v2433 = vsel %vm395, %v2413, 0
      %v2435 = vsel %vm399, %v2430, 0
      %v2437 = vsel %vm399, %v2431, 0
      %v2439 = vsel %vm399, %v2429, 0
      %2441 = vmatpush.msra.mxu0 0.0
      %2442 = vmatpush.msra.mxu0 0.0
      %2443 = vmatpush.msra.mxu0 0.0
      %2444 = vmatpush.msra.mxu0 0.0
      %2445 = vmatpush.msra.mxu0 0.0
      %2446 = vmatpush.msra.mxu0 0.0
      %2447 = vmatpush.msra.mxu0 0.0
      %2448 = vmatpush.msra.mxu0 0.0
      %2449 = vmatpush.msra.mxu0 0.0
      %2450 = vmatpush.msra.mxu0 0.0
      %2451 = vmatpush.msra.mxu0 0.0
      %2452 = vmatpush.msra.mxu0 0.0
      %2453 = vmatpush.msra.mxu0 0.0
      %2454 = vmatpush.msra.mxu0 0.0
      %2455 = vmatpush.msra.mxu0 0.0
      %2456 = vmatpush.msra.mxu0 %v2435
      %2457 = vmatmul.f32.gmra.mxu0 %v2433
      %v2458 = vpop.f32.mrf.mxu0
      %v2459 = vadd.f32 0.0, %v2458
      %2460 = vdwg.mxu0
      %2461 = vmatpush.msra.mxu0 0.0
      %2462 = vmatpush.msra.mxu0 0.0
      %2463 = vmatpush.msra.mxu0 0.0
      %2464 = vmatpush.msra.mxu0 0.0
      %2465 = vmatpush.msra.mxu0 0.0
      %2466 = vmatpush.msra.mxu0 0.0
      %2467 = vmatpush.msra.mxu0 0.0
      %2468 = vmatpush.msra.mxu0 0.0
      %2469 = vmatpush.msra.mxu0 0.0
      %2470 = vmatpush.msra.mxu0 0.0
      %2471 = vmatpush.msra.mxu0 0.0
      %2472 = vmatpush.msra.mxu0 0.0
      %2473 = vmatpush.msra.mxu0 0.0
      %2474 = vmatpush.msra.mxu0 0.0
      %2475 = vmatpush.msra.mxu0 0.0
      %2476 = vmatpush.msra.mxu0 %v2437
      %2477 = vmatmul.f32.gmra.mxu0 %v2433
      %v2478 = vpop.f32.mrf.mxu0
      %v2479 = vadd.f32 0.0, %v2478
      %2480 = vdwg.mxu0
      %2481 = vmatpush.msra.mxu0 0.0
      %2482 = vmatpush.msra.mxu0 0.0
      %2483 = vmatpush.msra.mxu0 0.0
      %2484 = vmatpush.msra.mxu0 0.0
      %2485 = vmatpush.msra.mxu0 0.0
      %2486 = vmatpush.msra.mxu0 0.0
      %2487 = vmatpush.msra.mxu0 0.0
      %2488 = vmatpush.msra.mxu0 0.0
      %2489 = vmatpush.msra.mxu0 0.0
      %2490 = vmatpush.msra.mxu0 0.0
      %2491 = vmatpush.msra.mxu0 0.0
      %2492 = vmatpush.msra.mxu0 0.0
      %2493 = vmatpush.msra.mxu0 0.0
      %2494 = vmatpush.msra.mxu0 0.0
      %2495 = vmatpush.msra.mxu0 0.0
      %2496 = vmatpush.msra.mxu0 %v2439
      %2497 = vmatmul.f32.gmra.mxu0 %v2433
      %v2498 = vpop.f32.mrf.mxu0
      %v2499 = vadd.f32 0.0, %v2498
      %2500 = vdwg.mxu0
      %v2501 = vadd.f32 %v2409, %v2459
      %v2502 = vadd.f32 %v2410, %v2479
      %v2503 = vadd.f32 %v2411, %v2499
      %v2504 = vld [vmem:[%s8] sm:$0xf]
      %2506 = vset.pattern.permute.xlu0 0
      %2507 = vperm.xlu0 %2506, %v2504
      %v2508 = vpop.permute.xlu0 %2507
      %v2510 = vadd.f32 %v2501, %v2508
      %v2511 = vadd.f32 %v2502, %v2508
      %v2512 = vadd.f32 %v2503, %v2508
      %v2515 = vrot.slane %v2511, 4
      %v2516 = vsel %vm399, %v2510, %v2515
      %s2518 = scalar_lea.vmem %s379, 24
      %2519 = vst [vmem:[%s2518] sm:$0xff] %v2516
      %2520 = vst.msk [vmem:[%s2518 + $0x8] sm:$0xf] %vm1769, %v2512
      %s2521 = scalar_lea.vmem %s7, 48
      %v2522 = vld [vmem:[%s2521] sm:$0xf]
      %v2523 = vld [vmem:[#allocation3] sm:$0xff]
      %v2524 = vld [vmem:[#allocation3 + $0x8] sm:$0xf]
      %s2525 = scalar_lea.vmem %s7, 52
      %v2526 = vld [vmem:[%s2525] sm:$0xf]
      %2529 = vst [vmem:[#allocation1] ss:$2 sm:$0xff] %v2523
      %s2530 = scalar_lea.vmem [#allocation1], 16
      %2531 = vst [vmem:[%s2530] ss:$2 sm:$0xff] %v2524
      %v2532 = vld.sshfl [vmem:[#allocation1] sm:$0xff pattern:$0x75316420]
      %v2533 = vld.sshfl [vmem:[#allocation1 + $0x8] sm:$0xff pattern:$0x75316420]
      %v2534 = vld.sshfl [vmem:[#allocation1 + $0x10] sm:$0xff pattern:$0x75316420]
      %2535 = vrot.lane.b32.xlu0 %v2532, 87
      %v2536 = vpop.permute.xlu0 %2535
      %2537 = vrot.lane.b32.xlu0 %v2533, 87
      %v2538 = vpop.permute.xlu0 %2537
      %2539 = vrot.lane.b32.xlu0 %v2534, 87
      %v2540 = vpop.permute.xlu0 %2539
      %v2541 = vsel %vm1029, %v2536, %v2538
      %v2542 = vsel %vm1029, %v2538, %v2540
      %v2544 = vsel %vm395, %v2526, 0
      %v2546 = vsel %vm399, %v2541, 0
      %v2548 = vsel %vm399, %v2542, 0
      %v2550 = vsel %vm399, %v2540, 0
      %2552 = vmatpush.msra.mxu0 0.0
      %2553 = vmatpush.msra.mxu0 0.0
      %2554 = vmatpush.msra.mxu0 0.0
      %2555 = vmatpush.msra.mxu0 0.0
      %2556 = vmatpush.msra.mxu0 0.0
      %2557 = vmatpush.msra.mxu0 0.0
      %2558 = vmatpush.msra.mxu0 0.0
      %2559 = vmatpush.msra.mxu0 0.0
      %2560 = vmatpush.msra.mxu0 0.0
      %2561 = vmatpush.msra.mxu0 0.0
      %2562 = vmatpush.msra.mxu0 0.0
      %2563 = vmatpush.msra.mxu0 0.0
      %2564 = vmatpush.msra.mxu0 0.0
      %2565 = vmatpush.msra.mxu0 0.0
      %2566 = vmatpush.msra.mxu0 0.0
      %2567 = vmatpush.msra.mxu0 %v2546
      %2568 = vmatmul.f32.gmra.mxu0 %v2544
      %v2569 = vpop.f32.mrf.mxu0
      %v2570 = vadd.f32 0.0, %v2569
      %2571 = vdwg.mxu0
      %2572 = vmatpush.msra.mxu0 0.0
      %2573 = vmatpush.msra.mxu0 0.0
      %2574 = vmatpush.msra.mxu0 0.0
      %2575 = vmatpush.msra.mxu0 0.0
      %2576 = vmatpush.msra.mxu0 0.0
      %2577 = vmatpush.msra.mxu0 0.0
      %2578 = vmatpush.msra.mxu0 0.0
      %2579 = vmatpush.msra.mxu0 0.0
      %2580 = vmatpush.msra.mxu0 0.0
      %2581 = vmatpush.msra.mxu0 0.0
      %2582 = vmatpush.msra.mxu0 0.0
      %2583 = vmatpush.msra.mxu0 0.0
      %2584 = vmatpush.msra.mxu0 0.0
      %2585 = vmatpush.msra.mxu0 0.0
      %2586 = vmatpush.msra.mxu0 0.0
      %2587 = vmatpush.msra.mxu0 %v2548
      %2588 = vmatmul.f32.gmra.mxu0 %v2544
      %v2589 = vpop.f32.mrf.mxu0
      %v2590 = vadd.f32 0.0, %v2589
      %2591 = vdwg.mxu0
      %2592 = vmatpush.msra.mxu0 0.0
      %2593 = vmatpush.msra.mxu0 0.0
      %2594 = vmatpush.msra.mxu0 0.0
      %2595 = vmatpush.msra.mxu0 0.0
      %2596 = vmatpush.msra.mxu0 0.0
      %2597 = vmatpush.msra.mxu0 0.0
      %2598 = vmatpush.msra.mxu0 0.0
      %2599 = vmatpush.msra.mxu0 0.0
      %2600 = vmatpush.msra.mxu0 0.0
      %2601 = vmatpush.msra.mxu0 0.0
      %2602 = vmatpush.msra.mxu0 0.0
      %2603 = vmatpush.msra.mxu0 0.0
      %2604 = vmatpush.msra.mxu0 0.0
      %2605 = vmatpush.msra.mxu0 0.0
      %2606 = vmatpush.msra.mxu0 0.0
      %2607 = vmatpush.msra.mxu0 %v2550
      %2608 = vmatmul.f32.gmra.mxu0 %v2544
      %v2609 = vpop.f32.mrf.mxu0
      %v2610 = vadd.f32 0.0, %v2609
      %2611 = vdwg.mxu0
      %2612 = vst [vmem:[#allocation1] ss:$2 sm:$0xff] %v2523
      %s2613 = scalar_lea.vmem [#allocation1], 16
      %2614 = vst [vmem:[%s2613] ss:$2 sm:$0xff] %v2524
      %v2615 = vld.sshfl [vmem:[#allocation1] sm:$0xff pattern:$0x75316420]
      %v2616 = vld.sshfl [vmem:[#allocation1 + $0x8] sm:$0xff pattern:$0x75316420]
      %v2617 = vld.sshfl [vmem:[#allocation1 + $0x10] sm:$0xff pattern:$0x75316420]
      %2618 = vrot.lane.b32.xlu0 %v2615, 88
      %v2619 = vpop.permute.xlu0 %2618
      %2620 = vrot.lane.b32.xlu0 %v2616, 88
      %v2621 = vpop.permute.xlu0 %2620
      %2622 = vrot.lane.b32.xlu0 %v2617, 88
      %v2623 = vpop.permute.xlu0 %2622
      %v2624 = vsel %vm949, %v2619, %v2621
      %v2625 = vsel %vm949, %v2621, %v2623
      %v2627 = vsel %vm395, %v2522, 0
      %v2629 = vsel %vm399, %v2624, 0
      %v2631 = vsel %vm399, %v2625, 0
      %v2633 = vsel %vm399, %v2623, 0
      %2635 = vmatpush.msra.mxu0 0.0
      %2636 = vmatpush.msra.mxu0 0.0
      %2637 = vmatpush.msra.mxu0 0.0
      %2638 = vmatpush.msra.mxu0 0.0
      %2639 = vmatpush.msra.mxu0 0.0
      %2640 = vmatpush.msra.mxu0 0.0
      %2641 = vmatpush.msra.mxu0 0.0
      %2642 = vmatpush.msra.mxu0 0.0
      %2643 = vmatpush.msra.mxu0 0.0
      %2644 = vmatpush.msra.mxu0 0.0
      %2645 = vmatpush.msra.mxu0 0.0
      %2646 = vmatpush.msra.mxu0 0.0
      %2647 = vmatpush.msra.mxu0 0.0
      %2648 = vmatpush.msra.mxu0 0.0
      %2649 = vmatpush.msra.mxu0 0.0
      %2650 = vmatpush.msra.mxu0 %v2629
      %2651 = vmatmul.f32.gmra.mxu0 %v2627
      %v2652 = vpop.f32.mrf.mxu0
      %v2653 = vadd.f32 %v2570, %v2652
      %2654 = vdwg.mxu0
      %2655 = vmatpush.msra.mxu0 0.0
      %2656 = vmatpush.msra.mxu0 0.0
      %2657 = vmatpush.msra.mxu0 0.0
      %2658 = vmatpush.msra.mxu0 0.0
      %2659 = vmatpush.msra.mxu0 0.0
      %2660 = vmatpush.msra.mxu0 0.0
      %2661 = vmatpush.msra.mxu0 0.0
      %2662 = vmatpush.msra.mxu0 0.0
      %2663 = vmatpush.msra.mxu0 0.0
      %2664 = vmatpush.msra.mxu0 0.0
      %2665 = vmatpush.msra.mxu0 0.0
      %2666 = vmatpush.msra.mxu0 0.0
      %2667 = vmatpush.msra.mxu0 0.0
      %2668 = vmatpush.msra.mxu0 0.0
      %2669 = vmatpush.msra.mxu0 0.0
      %2670 = vmatpush.msra.mxu0 %v2631
      %2671 = vmatmul.f32.gmra.mxu0 %v2627
      %v2672 = vpop.f32.mrf.mxu0
      %v2673 = vadd.f32 %v2590, %v2672
      %2674 = vdwg.mxu0
      %2675 = vmatpush.msra.mxu0 0.0
      %2676 = vmatpush.msra.mxu0 0.0
      %2677 = vmatpush.msra.mxu0 0.0
      %2678 = vmatpush.msra.mxu0 0.0
      %2679 = vmatpush.msra.mxu0 0.0
      %2680 = vmatpush.msra.mxu0 0.0
      %2681 = vmatpush.msra.mxu0 0.0
      %2682 = vmatpush.msra.mxu0 0.0
      %2683 = vmatpush.msra.mxu0 0.0
      %2684 = vmatpush.msra.mxu0 0.0
      %2685 = vmatpush.msra.mxu0 0.0
      %2686 = vmatpush.msra.mxu0 0.0
      %2687 = vmatpush.msra.mxu0 0.0
      %2688 = vmatpush.msra.mxu0 0.0
      %2689 = vmatpush.msra.mxu0 0.0
      %2690 = vmatpush.msra.mxu0 %v2633
      %2691 = vmatmul.f32.gmra.mxu0 %v2627
      %v2692 = vpop.f32.mrf.mxu0
      %v2693 = vadd.f32 %v2610, %v2692
      %2694 = vdwg.mxu0
      %s2695 = scalar_lea.vmem %s7, 56
      %v2696 = vld [vmem:[%s2695] sm:$0xf]
      %v2697 = vld [vmem:[#allocation3] sm:$0xff]
      %v2698 = vld [vmem:[#allocation3 + $0x8] sm:$0xf]
      %2701 = vst [vmem:[#allocation1] ss:$2 sm:$0xff] %v2697
      %s2702 = scalar_lea.vmem [#allocation1], 16
      %2703 = vst [vmem:[%s2702] ss:$2 sm:$0xff] %v2698
      %v2704 = vld.sshfl [vmem:[#allocation1] sm:$0xff pattern:$0x75316420]
      %v2705 = vld.sshfl [vmem:[#allocation1 + $0x8] sm:$0xff pattern:$0x75316420]
      %v2706 = vld.sshfl [vmem:[#allocation1 + $0x10] sm:$0xff pattern:$0x75316420]
      %2707 = vrot.lane.b32.xlu0 %v2704, 68
      %v2708 = vpop.permute.xlu0 %2707
      %2709 = vrot.lane.b32.xlu0 %v2705, 68
      %v2710 = vpop.permute.xlu0 %2709
      %2711 = vrot.lane.b32.xlu0 %v2706, 68
      %v2712 = vpop.permute.xlu0 %2711
      %v2713 = vsel %vm1189, %v2708, %v2710
      %v2714 = vsel %vm1189, %v2710, %v2712
      %v2716 = vsel %vm395, %v2696, 0
      %v2718 = vsel %vm399, %v2713, 0
      %v2720 = vsel %vm399, %v2714, 0
      %v2722 = vsel %vm399, %v2712, 0
      %2724 = vmatpush.msra.mxu0 0.0
      %2725 = vmatpush.msra.mxu0 0.0
      %2726 = vmatpush.msra.mxu0 0.0
      %2727 = vmatpush.msra.mxu0 0.0
      %2728 = vmatpush.msra.mxu0 0.0
      %2729 = vmatpush.msra.mxu0 0.0
      %2730 = vmatpush.msra.mxu0 0.0
      %2731 = vmatpush.msra.mxu0 0.0
      %2732 = vmatpush.msra.mxu0 0.0
      %2733 = vmatpush.msra.mxu0 0.0
      %2734 = vmatpush.msra.mxu0 0.0
      %2735 = vmatpush.msra.mxu0 0.0
      %2736 = vmatpush.msra.mxu0 0.0
      %2737 = vmatpush.msra.mxu0 0.0
      %2738 = vmatpush.msra.mxu0 0.0
      %2739 = vmatpush.msra.mxu0 %v2718
      %2740 = vmatmul.f32.gmra.mxu0 %v2716
      %v2741 = vpop.f32.mrf.mxu0
      %v2742 = vadd.f32 0.0, %v2741
      %2743 = vdwg.mxu0
      %2744 = vmatpush.msra.mxu0 0.0
      %2745 = vmatpush.msra.mxu0 0.0
      %2746 = vmatpush.msra.mxu0 0.0
      %2747 = vmatpush.msra.mxu0 0.0
      %2748 = vmatpush.msra.mxu0 0.0
      %2749 = vmatpush.msra.mxu0 0.0
      %2750 = vmatpush.msra.mxu0 0.0
      %2751 = vmatpush.msra.mxu0 0.0
      %2752 = vmatpush.msra.mxu0 0.0
      %2753 = vmatpush.msra.mxu0 0.0
      %2754 = vmatpush.msra.mxu0 0.0
      %2755 = vmatpush.msra.mxu0 0.0
      %2756 = vmatpush.msra.mxu0 0.0
      %2757 = vmatpush.msra.mxu0 0.0
      %2758 = vmatpush.msra.mxu0 0.0
      %2759 = vmatpush.msra.mxu0 %v2720
      %2760 = vmatmul.f32.gmra.mxu0 %v2716
      %v2761 = vpop.f32.mrf.mxu0
      %v2762 = vadd.f32 0.0, %v2761
      %2763 = vdwg.mxu0
      %2764 = vmatpush.msra.mxu0 0.0
      %2765 = vmatpush.msra.mxu0 0.0
      %2766 = vmatpush.msra.mxu0 0.0
      %2767 = vmatpush.msra.mxu0 0.0
      %2768 = vmatpush.msra.mxu0 0.0
      %2769 = vmatpush.msra.mxu0 0.0
      %2770 = vmatpush.msra.mxu0 0.0
      %2771 = vmatpush.msra.mxu0 0.0
      %2772 = vmatpush.msra.mxu0 0.0
      %2773 = vmatpush.msra.mxu0 0.0
      %2774 = vmatpush.msra.mxu0 0.0
      %2775 = vmatpush.msra.mxu0 0.0
      %2776 = vmatpush.msra.mxu0 0.0
      %2777 = vmatpush.msra.mxu0 0.0
      %2778 = vmatpush.msra.mxu0 0.0
      %2779 = vmatpush.msra.mxu0 %v2722
      %2780 = vmatmul.f32.gmra.mxu0 %v2716
      %v2781 = vpop.f32.mrf.mxu0
      %v2782 = vadd.f32 0.0, %v2781
      %2783 = vdwg.mxu0
      %v2784 = vadd.f32 %v2653, %v2742
      %v2785 = vadd.f32 %v2673, %v2762
      %v2786 = vadd.f32 %v2693, %v2782
      %s2787 = scalar_lea.vmem %s7, 60
      %v2788 = vld [vmem:[%s2787] sm:$0xf]
      %v2789 = vld [vmem:[#allocation3] sm:$0xff]
      %v2790 = vld [vmem:[#allocation3 + $0x8] sm:$0xf]
      %2793 = vst [vmem:[#allocation1] ss:$2 sm:$0xff] %v2789
      %s2794 = scalar_lea.vmem [#allocation1], 16
      %2795 = vst [vmem:[%s2794] ss:$2 sm:$0xff] %v2790
      %v2796 = vld.sshfl [vmem:[#allocation1] sm:$0xff pattern:$0x75316420]
      %v2797 = vld.sshfl [vmem:[#allocation1 + $0x8] sm:$0xff pattern:$0x75316420]
      %v2798 = vld.sshfl [vmem:[#allocation1 + $0x10] sm:$0xff pattern:$0x75316420]
      %2799 = vrot.lane.b32.xlu0 %v2796, 67
      %v2800 = vpop.permute.xlu0 %2799
      %2801 = vrot.lane.b32.xlu0 %v2797, 67
      %v2802 = vpop.permute.xlu0 %2801
      %2803 = vrot.lane.b32.xlu0 %v2798, 67
      %v2804 = vpop.permute.xlu0 %2803
      %v2805 = vsel %vm1269, %v2800, %v2802
      %v2806 = vsel %vm1269, %v2802, %v2804
      %v2808 = vsel %vm395, %v2788, 0
      %v2810 = vsel %vm399, %v2805, 0
      %v2812 = vsel %vm399, %v2806, 0
      %v2814 = vsel %vm399, %v2804, 0
      %2816 = vmatpush.msra.mxu0 0.0
      %2817 = vmatpush.msra.mxu0 0.0
      %2818 = vmatpush.msra.mxu0 0.0
      %2819 = vmatpush.msra.mxu0 0.0
      %2820 = vmatpush.msra.mxu0 0.0
      %2821 = vmatpush.msra.mxu0 0.0
      %2822 = vmatpush.msra.mxu0 0.0
      %2823 = vmatpush.msra.mxu0 0.0
      %2824 = vmatpush.msra.mxu0 0.0
      %2825 = vmatpush.msra.mxu0 0.0
      %2826 = vmatpush.msra.mxu0 0.0
      %2827 = vmatpush.msra.mxu0 0.0
      %2828 = vmatpush.msra.mxu0 0.0
      %2829 = vmatpush.msra.mxu0 0.0
      %2830 = vmatpush.msra.mxu0 0.0
      %2831 = vmatpush.msra.mxu0 %v2810
      %2832 = vmatmul.f32.gmra.mxu0 %v2808
      %v2833 = vpop.f32.mrf.mxu0
      %v2834 = vadd.f32 0.0, %v2833
      %2835 = vdwg.mxu0
      %2836 = vmatpush.msra.mxu0 0.0
      %2837 = vmatpush.msra.mxu0 0.0
      %2838 = vmatpush.msra.mxu0 0.0
      %2839 = vmatpush.msra.mxu0 0.0
      %2840 = vmatpush.msra.mxu0 0.0
      %2841 = vmatpush.msra.mxu0 0.0
      %2842 = vmatpush.msra.mxu0 0.0
      %2843 = vmatpush.msra.mxu0 0.0
      %2844 = vmatpush.msra.mxu0 0.0
      %2845 = vmatpush.msra.mxu0 0.0
      %2846 = vmatpush.msra.mxu0 0.0
      %2847 = vmatpush.msra.mxu0 0.0
      %2848 = vmatpush.msra.mxu0 0.0
      %2849 = vmatpush.msra.mxu0 0.0
      %2850 = vmatpush.msra.mxu0 0.0
      %2851 = vmatpush.msra.mxu0 %v2812
      %2852 = vmatmul.f32.gmra.mxu0 %v2808
      %v2853 = vpop.f32.mrf.mxu0
      %v2854 = vadd.f32 0.0, %v2853
      %2855 = vdwg.mxu0
      %2856 = vmatpush.msra.mxu0 0.0
      %2857 = vmatpush.msra.mxu0 0.0
      %2858 = vmatpush.msra.mxu0 0.0
      %2859 = vmatpush.msra.mxu0 0.0
      %2860 = vmatpush.msra.mxu0 0.0
      %2861 = vmatpush.msra.mxu0 0.0
      %2862 = vmatpush.msra.mxu0 0.0
      %2863 = vmatpush.msra.mxu0 0.0
      %2864 = vmatpush.msra.mxu0 0.0
      %2865 = vmatpush.msra.mxu0 0.0
      %2866 = vmatpush.msra.mxu0 0.0
      %2867 = vmatpush.msra.mxu0 0.0
      %2868 = vmatpush.msra.mxu0 0.0
      %2869 = vmatpush.msra.mxu0 0.0
      %2870 = vmatpush.msra.mxu0 0.0
      %2871 = vmatpush.msra.mxu0 %v2814
      %2872 = vmatmul.f32.gmra.mxu0 %v2808
      %v2873 = vpop.f32.mrf.mxu0
      %v2874 = vadd.f32 0.0, %v2873
      %2875 = vdwg.mxu0
      %v2876 = vadd.f32 %v2784, %v2834
      %v2877 = vadd.f32 %v2785, %v2854
      %v2878 = vadd.f32 %v2786, %v2874
      %v2879 = vld [vmem:[%s8] sm:$0xf]
      %2881 = vset.pattern.permute.xlu0 0
      %2882 = vperm.xlu0 %2881, %v2879
      %v2883 = vpop.permute.xlu0 %2882
      %v2885 = vadd.f32 %v2876, %v2883
      %v2886 = vadd.f32 %v2877, %v2883
      %v2887 = vadd.f32 %v2878, %v2883
      %v2890 = vrot.slane %v2886, 4
      %v2891 = vsel %vm399, %v2885, %v2890
      %s2893 = scalar_lea.vmem %s379, 36
      %2894 = vst [vmem:[%s2893] sm:$0xff] %v2891
      %2895 = vst.msk [vmem:[%s2893 + $0x8] sm:$0xf] %vm1769, %v2887
      %p2896 = scmp.lt.s32.totalorder %s21, 1
      %s2897 = scalar_select %p2896, %s21, 1
      %s2898 = smul.addr %s2897, 12
      %s2899 = smul.addr %s2898, 4
      %s2900 = scalar_lea.vmem %s10, %s2899
      // Predicated region
      $region61: #{up_blok_forward.1} parent=59 // pred_check
        %p2901 = pneg %p259
      $region62: #{up_blok_forward.1} parent=59 // pred_check_branch
        %2903 = sbr.rel (%p2901) target = $region64
      $region63: #{up_blok_forward.1} parent=59 // pred_region
        _
      $region64: #{up_blok_forward.1} parent=59 // pred_fallthru
        _
    $region60: #{up_blok_forward.1} parent=5 // pred_fallthru
      _
    %p2904 = scmp.le.s32.totalorder 2, %s16
    // Predicated region
    $region65: #{up_blok_forward.1} parent=5 // pred_check
      %p2905 = pneg %p2904
    $region66: #{up_blok_forward.1} parent=5 // pred_check_branch
      %2907 = sbr.rel (%p2905) target = $region68
    $region67: #{up_blok_forward.1} parent=5 // pred_region
      %s2908 = ssub.s32 %s16, 2
      // Predicated region
      $region69: #{up_blok_forward.1} parent=67 // pred_check
        %p2909 = pneg %p265
      $region70: #{up_blok_forward.1} parent=67 // pred_check_branch
        %2911 = sbr.rel (%p2909) target = $region72
      $region71: #{up_blok_forward.1} parent=67 // pred_region
        %p2912 = scmp.lt.s32.totalorder %s22, 1
        %s2913 = scalar_select %p2912, %s22, 1
        %s2914 = smul.addr %s2913, 12
        %s2915 = smul.addr %s2914, 4
        %s2916 = scalar_lea.vmem %s10, %s2915
      $region72: #{up_blok_forward.1} parent=67 // pred_fallthru
        _
    $region68: #{up_blok_forward.1} parent=5 // pred_fallthru
      _
  $region6: #{up_blok_forward.1} parent=0 // loop_footer
    %s20 = sadd.s32 1, %s16
  $region7: #{up_blok_forward.1} parent=0 // loop_footer_branch
    %15 = sbr.rel target = $region3
  $region8: #{up_blok_forward.1} parent=0 // loop_exit
    _

</llo_original>
